<compile_context>
chip_gen: v7x
topology: tpu7x:2x2x1
jax: 0.10.0
libtpu: 0.0.40
codegen_flags: <defaults>
</compile_context>

<pallas_src>
import functools

import jax
import jax.numpy as jnp
from jax.experimental import pallas as pl
from jax.experimental.pallas import tpu as pltpu


def _mxu_rows():
    """Target matmul rows per grid step: 128 on v5e (128-wide MXU), 256 on v6e/v7x."""
    try:
        kind = jax.devices()[0].device_kind.lower()
    except Exception:
        return 256
    if "v5e" in kind or "v5 lite" in kind or "v5lite" in kind:
        return 128
    return 256


def _vmem_limit(nbytes):
    """Explicit scoped-VMEM limit: generous headroom, capped below v7x's 64 MiB."""
    return int(min(64 << 20, max(32 << 20, int(nbytes))))


# ----------------------------------------------------------------------------
# Spatial block: DividedGraphConvolutionBlock (pooling='mean', adaptive='none')
# GCN = input graph-conv + num_stage residual graph-conv blocks, ReLU nonlinearity.
# graph conv: h = A @ (x @ W) + b, applied per (b,t) group (no block-diag kron redundancy).
# ----------------------------------------------------------------------------
def _gcn_kernel(x_ref, adj_ref, w0_ref, b0_ref, ws_ref, bs_ref, out_ref, *, num_stage):
    x = x_ref[0]                                              # (R, Din) bf16
    R = x.shape[0]
    P = adj_ref.shape[0]
    chunk = R // P
    D = w0_ref.shape[1]
    A3 = jnp.broadcast_to(adj_ref[...], (chunk, P, P))        # (chunk, P, P) bf16 (shared A)
    ws = ws_ref[...]
    bs = bs_ref[...]

    def gconv(h_bf, w, b):
        s = jnp.dot(h_bf, w, preferred_element_type=jnp.float32)           # (R, D)
        s3 = s.reshape(chunk, P, D).astype(jnp.bfloat16)
        # per-group adjacency apply: chunk*P^2*D FLOPs (general dense A; for a pure chain
        # adjacency this could also be masked pltpu.roll's on the joint axis).
        a = jnp.einsum('cpq,cqd->cpd', A3, s3,
                       preferred_element_type=jnp.float32)                  # (chunk, P, D)
        return a.reshape(R, D) + b

    # TODO(synk): BatchNorm(eval) folded as identity (untrained running stats assumed);
    # Dropout(eval) == identity.
    h = jnp.maximum(gconv(x, w0_ref[...], b0_ref[...]), 0.0)
    for st in range(num_stage):                               # residual graph-conv blocks
        y = jnp.maximum(gconv(h.astype(jnp.bfloat16), ws[2 * st], bs[2 * st]), 0.0)
        y = jnp.maximum(gconv(y.astype(jnp.bfloat16), ws[2 * st + 1], bs[2 * st + 1]), 0.0)
        h = h + y
    # 'mean' pooling over joints: f32 sublane reduce (no pooling matmul, no bf16 1/P weights).
    out_ref[0] = jnp.mean(h.reshape(chunk, P, D), axis=1).astype(out_ref.dtype)


def spatial_gcn_block(x_btpd, adj, gcn, num_stage):
    assert num_stage >= 1
    B, T, P, Din = x_btpd.shape
    D = gcn["w0"].shape[1]
    BT = B * T
    # chunk (b,t) groups per grid step so each matmul has ~128/256 rows; cdiv + zero padding
    # (no divisor search, so chunk never collapses for awkward BT).
    chunk = max(1, min(BT, _mxu_rows() // P))
    n_chunks = pl.cdiv(BT, chunk)
    BT_pad = n_chunks * chunk
    R = chunk * P

    xf = x_btpd.reshape(BT, P, Din)
    if BT_pad > BT:
        xf = jnp.pad(xf, ((0, BT_pad - BT), (0, 0), (0, 0)))
    x_chunks = xf.reshape(n_chunks, R, Din).astype(jnp.bfloat16)   # bf16: halves input DMA
    adj_bf = adj.astype(jnp.bfloat16)

    ns2 = 2 * num_stage
    const = dict(pipeline_mode=pl.Buffered(1))     # grid-invariant blocks: single buffer
    per_step = (2 * R * Din * 2 + P * P * 2 + Din * D * 2 + D * 4
                + ns2 * D * D * 2 + ns2 * D * 4 + 2 * chunk * D * 4
                + 8 * R * D * 4)                   # + f32 temporaries

    # NOTE: out last dim = D; at realistic D (>=128) stores are lane-dense. For tiny D the
    # store slab is small enough that masked stores are not the bottleneck.
    out = pl.pallas_call(
        functools.partial(_gcn_kernel, num_stage=num_stage),
        out_shape=jax.ShapeDtypeStruct((n_chunks, chunk, D), jnp.float32),
        grid=(n_chunks,),
        in_specs=[
            pl.BlockSpec((1, R, Din), lambda c: (c, 0, 0)),
            pl.BlockSpec((P, P), lambda c: (0, 0), **const),
            pl.BlockSpec((Din, D), lambda c: (0, 0), **const),
            pl.BlockSpec((1, D), lambda c: (0, 0), **const),
            pl.BlockSpec((ns2, D, D), lambda c: (0, 0, 0), **const),
            pl.BlockSpec((ns2, 1, D), lambda c: (0, 0, 0), **const),
        ],
        out_specs=pl.BlockSpec((1, chunk, D), lambda c: (c, 0, 0)),
        compiler_params=pltpu.CompilerParams(
            dimension_semantics=("parallel",),
            vmem_limit_bytes=_vmem_limit(2 * per_step)),
    )(x_chunks, adj_bf, gcn["w0"], gcn["b0"], gcn["ws"], gcn["bs"])
    return out.reshape(BT_pad, D)[:BT].reshape(B, T, D)


# ----------------------------------------------------------------------------
# Temporal encoder: ONE fused pallas_call for both streams, per-layer weight streaming.
# Pre-LN transformer; grid = (batch_block, layer), layer axis "arbitrary" (x resident in
# VMEM scratch), batch-block axis "parallel".
# Packed per-layer vectors (NS, L, 9, D): rows = [ln1_g, ln1_b, ln2_g, ln2_b, bq, bk, bv, bo, b2]
# ----------------------------------------------------------------------------
def _tenc_kernel(sidx_ref, widx_ref, x_ref, mask_ref, pos_ref, vec_ref,
                 wqkv_ref, wo_ref, w1_ref, b1_ref, w2_ref, out_ref, x_sc,
                 *, num_heads):
    del sidx_ref, widx_ref                          # only consumed by the index_maps
    l = pl.program_id(1)
    Bblk, S, D = x_sc.shape
    H = num_heads
    dh = D // H
    rows = Bblk * S
    scale = 1.0 / (dh ** 0.5)

    @pl.when(l == 0)
    def _init():                                    # residual stream resident across layers
        x_sc[...] = x_ref[...] + pos_ref[...][0]

    vec = vec_ref[...][0, 0]                        # (9, D) f32
    key_bias = (1.0 - mask_ref[...].reshape(Bblk, S)) * (-1e9)       # mask padded keys
    kb = jnp.broadcast_to(key_bias[:, None, None, :],
                          (Bblk, H, 1, S)).reshape(Bblk * H, 1, S)

    def layernorm(z, g, b):
        mu = jnp.mean(z, axis=-1, keepdims=True)
        var = jnp.mean(jnp.square(z - mu), axis=-1, keepdims=True)
        return (z - mu) * jax.lax.rsqrt(var + 1e-5) * g + b

    def heads(z):                                   # (rows, D) -> (Bblk*H, S, dh)
        z4 = jnp.transpose(z.reshape(Bblk, S, H, dh), (0, 2, 1, 3))
        return z4.reshape(Bblk * H, S, dh)

    xf = x_sc[...].reshape(rows, D)                 # f32 residual stream, rows = Bblk*S

    # ---- MHA (pre-LN), merged QKV, heads-batched attention ----
    xn = layernorm(xf, vec[0:1], vec[1:2])
    qkv = jnp.dot(xn.astype(jnp.bfloat16), wqkv_ref[...][0, 0],
                  preferred_element_type=jnp.float32)                       # (rows, 3D)
    q = heads((qkv[:, 0:D] + vec[4:5]) * scale).astype(jnp.bfloat16)
    k = heads(qkv[:, D:2 * D] + vec[5:6]).astype(jnp.bfloat16)
    v = heads(qkv[:, 2 * D:3 * D] + vec[6:7]).astype(jnp.bfloat16)
    s = jnp.einsum('bqd,bkd->bqk', q, k,
                   preferred_element_type=jnp.float32) + kb                 # (Bblk*H, S, S)
    s = s - jnp.max(s, axis=-1, keepdims=True)
    p = jnp.exp(s)
    p = p * pl.reciprocal(jnp.sum(p, axis=-1, keepdims=True), approx=True)
    ctx = jnp.einsum('bqk,bkd->bqd', p.astype(jnp.bfloat16), v,
                     preferred_element_type=jnp.float32)                    # (Bblk*H, S, dh)
    ctx = jnp.transpose(ctx.reshape(Bblk, H, S, dh), (0, 2, 1, 3)).reshape(rows, D)
    attn = jnp.dot(ctx.astype(jnp.bfloat16), wo_ref[...][0, 0],
                   preferred_element_type=jnp.float32) + vec[7:8]
    xf = xf + attn                                  # residual (dropout == identity in eval)

    # ---- FFN (pre-LN) ----
    xn2 = layernorm(xf, vec[2:3], vec[3:4])
    hh = jnp.maximum(jnp.dot(xn2.astype(jnp.bfloat16), w1_ref[...][0, 0],
                             preferred_element_type=jnp.float32) + b1_ref[...][0, 0], 0.0)
    xf = xf + jnp.dot(hh.astype(jnp.bfloat16), w2_ref[...][0, 0],
                      preferred_element_type=jnp.float32) + vec[8:9]

    x_sc[...] = xf.reshape(Bblk, S, D)

    @pl.when(l == pl.num_programs(1) - 1)
    def _write():
        out_ref[...] = x_sc[...].astype(out_ref.dtype)


def temporal_encoder(m_in, qfeats, m_mask, q_mask, tenc, num_heads):
    # TODO(synk): exact SGPA (self-guided parallel attention) TEncoder code was not provided;
    # implemented as parallel (optionally shared) pre-LN transformer stacks per stream.
    B, T, D = m_in.shape
    Bq, Lq, Dq = qfeats.shape
    assert Bq == B and Dq == D and D % num_heads == 0
    S = max(T, Lq)
    sp = tenc["streams"]
    NS, L = sp["wqkv"].shape[:2]
    Dh = sp["w1"].shape[3]

    def prep(x, mask, pos):
        s0 = x.shape[1]
        xp = jnp.pad(x.astype(jnp.float32), ((0, 0), (0, S - s0), (0, 0)))
        mp = jnp.pad(mask.astype(jnp.float32), ((0, 0), (0, S - s0)))
        pp = jnp.pad(pos[:s0], ((0, S - s0), (0, 0)))
        return xp, mp, pp

    mx, mm, pm = prep(m_in, m_mask, tenc["pos_m"])
    qx, qm, pq = prep(qfeats, q_mask, tenc["pos_q"])

    bblk = max(1, min(B, _mxu_rows() // S))        # ~128/256 rows per projection matmul
    nb = pl.cdiv(B, bblk)
    B_pad = nb * bblk

    def padb(a):
        return jnp.pad(a, ((0, B_pad - B),) + ((0, 0),) * (a.ndim - 1))

    x_all = jnp.concatenate([padb(mx), padb(qx)], axis=0)                  # (2*B_pad, S, D)
    mask_all = jnp.concatenate([padb(mm), padb(qm)], axis=0)[:, None, :]   # (2*B_pad, 1, S)
    pos_stack = jnp.stack([pm, pq], axis=0)                                # (2, S, D)
    n_bb = 2 * nb
    sidx = jnp.concatenate([jnp.zeros((nb,), jnp.int32), jnp.ones((nb,), jnp.int32)])
    widx = sidx if NS == 2 else jnp.zeros_like(sidx)                       # shared weights -> 0

    xbytes = bblk * S * D * 4
    wbytes = 2 * (9 * D * 4 + D * 3 * D * 2 + D * D * 2 + D * Dh * 2 + Dh * 4 + Dh * D * 2)
    per_step = (3 * xbytes + 2 * (bblk * S * 4 + S * D * 4) + wbytes
                + 6 * bblk * S * max(Dh, 3 * D) * 4)

    out = pl.pallas_call(
        functools.partial(_tenc_kernel, num_heads=num_heads),
        out_shape=jax.ShapeDtypeStruct((2 * B_pad, S, D), jnp.float32),
        grid_spec=pltpu.PrefetchScalarGridSpec(
            num_scalar_prefetch=2,
            grid=(n_bb, L),                        # layer innermost: weights streamed per layer
            in_specs=[
                pl.BlockSpec((bblk, S, D), lambda bb, l, si, wi: (bb, 0, 0)),
                pl.BlockSpec((bblk, 1, S), lambda bb, l, si, wi: (bb, 0, 0)),
                pl.BlockSpec((1, S, D), lambda bb, l, si, wi: (si[bb], 0, 0)),
                pl.BlockSpec((1, 1, 9, D), lambda bb, l, si, wi: (wi[bb], l, 0, 0)),
                pl.BlockSpec((1, 1, D, 3 * D), lambda bb, l, si, wi: (wi[bb], l, 0, 0)),
                pl.BlockSpec((1, 1, D, D), lambda bb, l, si, wi: (wi[bb], l, 0, 0)),
                pl.BlockSpec((1, 1, D, Dh), lambda bb, l, si, wi: (wi[bb], l, 0, 0)),
                pl.BlockSpec((1, 1, 1, Dh), lambda bb, l, si, wi: (wi[bb], l, 0, 0)),
                pl.BlockSpec((1, 1, Dh, D), lambda bb, l, si, wi: (wi[bb], l, 0, 0)),
            ],
            out_specs=pl.BlockSpec((bblk, S, D), lambda bb, l, si, wi: (bb, 0, 0)),
            scratch_shapes=[pltpu.VMEM((bblk, S, D), jnp.float32)],
        ),
        compiler_params=pltpu.CompilerParams(
            dimension_semantics=("parallel", "arbitrary"),
            vmem_limit_bytes=_vmem_limit(2 * per_step)),
    )(sidx, widx, x_all, mask_all, pos_stack,
      sp["vecs"], sp["wqkv"], sp["wo"], sp["w1"], sp["b1"], sp["w2"])

    return out[:B, :T], out[B_pad:B_pad + B, :Lq]


# ----------------------------------------------------------------------------
# FactorisedSTEncoder forward
# ----------------------------------------------------------------------------
def factorised_st_encoder(mfeats, qfeats, m_mask, q_mask, params, *, num_heads, num_stage):
    assert mfeats.ndim == 4
    pooled = spatial_gcn_block(mfeats, params["adj"], params["gcn"], num_stage)   # (B, T, D)
    pooled = pooled[:, :, None, :]                                                # .unsqueeze(2)
    m_in = pooled[:, :, 0, :]
    m_out, q_out = temporal_encoder(m_in, qfeats, m_mask, q_mask, params["tenc"], num_heads)
    return m_out, q_out


# ----------------------------------------------------------------------------
# Deterministic parameter construction
# ----------------------------------------------------------------------------
def _norm(key, shape, scale=0.02):
    return jax.random.normal(key, shape, jnp.float32) * scale


def build_adjacency(P):
    # TODO(synk): Graph(layout='babel', mode='spatial') not provided; deterministic chain
    # skeleton + self-loops stands in for the boolean adjacency (adaptive='none' => fixed A).
    eye = jnp.eye(P, dtype=jnp.float32)
    off = jnp.eye(P, k=1, dtype=jnp.float32) + jnp.eye(P, k=-1, dtype=jnp.float32)
    return ((eye + off) > 0).astype(jnp.float32)


def init_params(key, *, in_dim, dim, P, max_snippet_len, max_q_len, num_layers, num_stage, shared):
    counter = [0]

    def nk():
        counter[0] += 1
        return jax.random.fold_in(key, counter[0])

    gcn = dict(
        w0=_norm(nk(), (in_dim, dim)).astype(jnp.bfloat16),
        b0=jnp.zeros((1, dim), jnp.float32),
        ws=_norm(nk(), (2 * num_stage, dim, dim)).astype(jnp.bfloat16),
        bs=jnp.zeros((2 * num_stage, 1, dim), jnp.float32),
    )
    ns = 1 if shared else 2
    Dh = 4 * dim
    # packed per-layer vectors: [ln1_g, ln1_b, ln2_g, ln2_b, bq, bk, bv, bo, b2]
    vecs = jnp.zeros((ns, num_layers, 9, dim), jnp.float32)
    vecs = vecs.at[:, :, 0, :].set(1.0).at[:, :, 2, :].set(1.0)
    streams = dict(
        vecs=vecs,
        wqkv=_norm(nk(), (ns, num_layers, dim, 3 * dim)).astype(jnp.bfloat16),
        wo=_norm(nk(), (ns, num_layers, dim, dim)).astype(jnp.bfloat16),
        w1=_norm(nk(), (ns, num_layers, dim, Dh)).astype(jnp.bfloat16),
        b1=jnp.zeros((ns, num_layers, 1, Dh), jnp.float32),
        w2=_norm(nk(), (ns, num_layers, Dh, dim)).astype(jnp.bfloat16),
    )
    tenc = dict(
        pos_m=_norm(nk(), (max_snippet_len, dim)),
        pos_q=_norm(nk(), (max_q_len, dim)),
        streams=streams,
    )
    return dict(adj=build_adjacency(P), gcn=gcn, tenc=tenc)


if __name__ == "__main__":
    # Small shapes consistent with the module.
    B, T, P = 2, 8, 8            # batch, snippets, skeleton joints
    in_dim, dim = 16, 32         # d_p, d
    Lq = 8                       # query sequence length
    max_snippet_len = 16
    num_heads, num_layers, gcn_layers = 4, 4, 5
    num_stage = (gcn_layers - 1) // 2

    key = jax.random.PRNGKey(0)
    k_m, k_q, k_p = jax.random.split(key, 3)
    mfeats = jax.random.normal(k_m, (B, T, P, in_dim), jnp.float32)
    qfeats = jax.random.normal(k_q, (B, Lq, dim), jnp.float32)
    m_mask = jnp.stack([jnp.ones((T,), jnp.float32),
                        (jnp.arange(T) < 6).astype(jnp.float32)])
    q_mask = jnp.stack([(jnp.arange(Lq) < 5).astype(jnp.float32),
                        jnp.ones((Lq,), jnp.float32)])

    params = init_params(k_p, in_dim=in_dim, dim=dim, P=P,
                         max_snippet_len=max_snippet_len, max_q_len=Lq,
                         num_layers=num_layers, num_stage=num_stage, shared=False)

    m_out, q_out = factorised_st_encoder(mfeats, qfeats, m_mask, q_mask, params,
                                         num_heads=num_heads, num_stage=num_stage)
    jax.block_until_ready((m_out, q_out))
    assert m_out.shape == (B, T, dim) and q_out.shape == (B, Lq, dim)
    assert bool(jnp.all(jnp.isfinite(m_out))) and bool(jnp.all(jnp.isfinite(q_out)))
    print("KERNEL_OK")
</pallas_src>

<mosaic_0001>
module attributes {stable_mosaic.version = 11 : i64} {
  func.func @_gcn_kernel(%arg0: i32, %arg1: memref<1x128x16xbf16, #tpu.memory_space<vmem>>, %arg2: memref<8x8xbf16, #tpu.memory_space<vmem>>, %arg3: memref<16x32xbf16, #tpu.memory_space<vmem>>, %arg4: memref<1x32xf32, #tpu.memory_space<vmem>>, %arg5: memref<4x32x32xbf16, #tpu.memory_space<vmem>>, %arg6: memref<4x1x32xf32, #tpu.memory_space<vmem>>, %arg7: memref<1x16x32xf32, #tpu.memory_space<vmem>>) attributes {dimension_semantics = [#tpu.dimension_semantics<parallel>], iteration_bounds = array<i64: 1>, scalar_prefetch = 0 : i64, scratch_operands = 0 : i64, tpu.core_type = #tpu.core_type<tc>, window_params = [{transform_indices = @transform_0, window_bounds = array<i64: 1, 128, 16>}, {pipeline_mode = #tpu.pipeline_mode<synchronous>, transform_indices = @transform_1, window_bounds = array<i64: 8, 8>}, {pipeline_mode = #tpu.pipeline_mode<synchronous>, transform_indices = @transform_2, window_bounds = array<i64: 16, 32>}, {pipeline_mode = #tpu.pipeline_mode<synchronous>, transform_indices = @transform_3, window_bounds = array<i64: 1, 32>}, {pipeline_mode = #tpu.pipeline_mode<synchronous>, transform_indices = @transform_4, window_bounds = array<i64: 4, 32, 32>}, {pipeline_mode = #tpu.pipeline_mode<synchronous>, transform_indices = @transform_5, window_bounds = array<i64: 4, 1, 32>}, {transform_indices = @transform_6, window_bounds = array<i64: 1, 16, 32>}]} {
    %c0 = arith.constant 0 : index
    %c0_0 = arith.constant 0 : index
    %c0_1 = arith.constant 0 : index
    %0 = vector.load %arg1[%c0, %c0_0, %c0_1] : memref<1x128x16xbf16, #tpu.memory_space<vmem>>, vector<1x128x16xbf16>
    %1 = vector.shape_cast %0 : vector<1x128x16xbf16> to vector<128x16xbf16>
    %c0_2 = arith.constant 0 : index
    %c0_3 = arith.constant 0 : index
    %2 = vector.load %arg2[%c0_2, %c0_3] : memref<8x8xbf16, #tpu.memory_space<vmem>>, vector<8x8xbf16>
    %3 = vector.shape_cast %2 : vector<8x8xbf16> to vector<1x8x8xbf16>
    %4 = vector.broadcast %3 : vector<1x8x8xbf16> to vector<16x8x8xbf16>
    %c0_4 = arith.constant 0 : index
    %c0_5 = arith.constant 0 : index
    %c0_6 = arith.constant 0 : index
    %5 = vector.load %arg5[%c0_4, %c0_5, %c0_6] : memref<4x32x32xbf16, #tpu.memory_space<vmem>>, vector<4x32x32xbf16>
    %c0_7 = arith.constant 0 : index
    %c0_8 = arith.constant 0 : index
    %c0_9 = arith.constant 0 : index
    %6 = vector.load %arg6[%c0_7, %c0_8, %c0_9] : memref<4x1x32xf32, #tpu.memory_space<vmem>>, vector<4x1x32xf32>
    %c0_10 = arith.constant 0 : index
    %c0_11 = arith.constant 0 : index
    %7 = vector.load %arg3[%c0_10, %c0_11] : memref<16x32xbf16, #tpu.memory_space<vmem>>, vector<16x32xbf16>
    %c0_12 = arith.constant 0 : index
    %c0_13 = arith.constant 0 : index
    %8 = vector.load %arg4[%c0_12, %c0_13] : memref<1x32xf32, #tpu.memory_space<vmem>>, vector<1x32xf32>
    %cst = arith.constant dense<0.000000e+00> : vector<128x32xf32>
    %9 = tpu.matmul %1, %7, %cst {dimension_numbers = #tpu.dot_dimension_numbers<[1], [0], [0], [1], [0, 0, 1, 1], [], []>} : vector<128x16xbf16>, vector<16x32xbf16>, vector<128x32xf32> -> vector<128x32xf32>
    %10 = vector.shape_cast %9 : vector<128x32xf32> to vector<16x8x32xf32>
    %11 = arith.truncf %10 : vector<16x8x32xf32> to vector<16x8x32xbf16>
    "tpu.trace_start"() <{level = 10 : i32, message = "cpq,cqd->cpd"}> : () -> ()
    %cst_14 = arith.constant dense<0.000000e+00> : vector<16x8x32xf32>
    %12 = tpu.matmul %4, %11, %cst_14 {dimension_numbers = #tpu.dot_dimension_numbers<[2], [1], [1], [2], [0, 0, 0, 1, 1, 2], [0], [0]>} : vector<16x8x8xbf16>, vector<16x8x32xbf16>, vector<16x8x32xf32> -> vector<16x8x32xf32>
    "tpu.trace_stop"() : () -> ()
    %13 = vector.shape_cast %12 : vector<16x8x32xf32> to vector<128x32xf32>
    %14 = vector.broadcast %8 : vector<1x32xf32> to vector<128x32xf32>
    %15 = arith.addf %13, %14 : vector<128x32xf32>
    %cst_15 = arith.constant 0.000000e+00 : f32
    %16 = vector.broadcast %cst_15 : f32 to vector<128x32xf32>
    %17 = arith.maximumf %15, %16 : vector<128x32xf32>
    %18 = arith.truncf %17 : vector<128x32xf32> to vector<128x32xbf16>
    %19 = vector.extract_strided_slice %5 {offsets = [0, 0, 0], sizes = [1, 32, 32], strides = [1, 1, 1]} : vector<4x32x32xbf16> to vector<1x32x32xbf16>
    %20 = vector.shape_cast %19 : vector<1x32x32xbf16> to vector<32x32xbf16>
    %21 = vector.extract_strided_slice %6 {offsets = [0, 0, 0], sizes = [1, 1, 32], strides = [1, 1, 1]} : vector<4x1x32xf32> to vector<1x1x32xf32>
    %22 = vector.shape_cast %21 : vector<1x1x32xf32> to vector<1x32xf32>
    %cst_16 = arith.constant dense<0.000000e+00> : vector<128x32xf32>
    %23 = tpu.matmul %18, %20, %cst_16 {dimension_numbers = #tpu.dot_dimension_numbers<[1], [0], [0], [1], [0, 0, 1, 1], [], []>} : vector<128x32xbf16>, vector<32x32xbf16>, vector<128x32xf32> -> vector<128x32xf32>
    %24 = vector.shape_cast %23 : vector<128x32xf32> to vector<16x8x32xf32>
    %25 = arith.truncf %24 : vector<16x8x32xf32> to vector<16x8x32xbf16>
    "tpu.trace_start"() <{level = 10 : i32, message = "cpq,cqd->cpd"}> : () -> ()
    %cst_17 = arith.constant dense<0.000000e+00> : vector<16x8x32xf32>
    %26 = tpu.matmul %4, %25, %cst_17 {dimension_numbers = #tpu.dot_dimension_numbers<[2], [1], [1], [2], [0, 0, 0, 1, 1, 2], [0], [0]>} : vector<16x8x8xbf16>, vector<16x8x32xbf16>, vector<16x8x32xf32> -> vector<16x8x32xf32>
    "tpu.trace_stop"() : () -> ()
    %27 = vector.shape_cast %26 : vector<16x8x32xf32> to vector<128x32xf32>
    %28 = vector.broadcast %22 : vector<1x32xf32> to vector<128x32xf32>
    %29 = arith.addf %27, %28 : vector<128x32xf32>
    %cst_18 = arith.constant 0.000000e+00 : f32
    %30 = vector.broadcast %cst_18 : f32 to vector<128x32xf32>
    %31 = arith.maximumf %29, %30 : vector<128x32xf32>
    %32 = arith.truncf %31 : vector<128x32xf32> to vector<128x32xbf16>
    %33 = vector.extract_strided_slice %5 {offsets = [1, 0, 0], sizes = [1, 32, 32], strides = [1, 1, 1]} : vector<4x32x32xbf16> to vector<1x32x32xbf16>
    %34 = vector.shape_cast %33 : vector<1x32x32xbf16> to vector<32x32xbf16>
    %35 = vector.extract_strided_slice %6 {offsets = [1, 0, 0], sizes = [1, 1, 32], strides = [1, 1, 1]} : vector<4x1x32xf32> to vector<1x1x32xf32>
    %36 = vector.shape_cast %35 : vector<1x1x32xf32> to vector<1x32xf32>
    %cst_19 = arith.constant dense<0.000000e+00> : vector<128x32xf32>
    %37 = tpu.matmul %32, %34, %cst_19 {dimension_numbers = #tpu.dot_dimension_numbers<[1], [0], [0], [1], [0, 0, 1, 1], [], []>} : vector<128x32xbf16>, vector<32x32xbf16>, vector<128x32xf32> -> vector<128x32xf32>
    %38 = vector.shape_cast %37 : vector<128x32xf32> to vector<16x8x32xf32>
    %39 = arith.truncf %38 : vector<16x8x32xf32> to vector<16x8x32xbf16>
    "tpu.trace_start"() <{level = 10 : i32, message = "cpq,cqd->cpd"}> : () -> ()
    %cst_20 = arith.constant dense<0.000000e+00> : vector<16x8x32xf32>
    %40 = tpu.matmul %4, %39, %cst_20 {dimension_numbers = #tpu.dot_dimension_numbers<[2], [1], [1], [2], [0, 0, 0, 1, 1, 2], [0], [0]>} : vector<16x8x8xbf16>, vector<16x8x32xbf16>, vector<16x8x32xf32> -> vector<16x8x32xf32>
    "tpu.trace_stop"() : () -> ()
    %41 = vector.shape_cast %40 : vector<16x8x32xf32> to vector<128x32xf32>
    %42 = vector.broadcast %36 : vector<1x32xf32> to vector<128x32xf32>
    %43 = arith.addf %41, %42 : vector<128x32xf32>
    %cst_21 = arith.constant 0.000000e+00 : f32
    %44 = vector.broadcast %cst_21 : f32 to vector<128x32xf32>
    %45 = arith.maximumf %43, %44 : vector<128x32xf32>
    %46 = arith.addf %17, %45 : vector<128x32xf32>
    %47 = arith.truncf %46 : vector<128x32xf32> to vector<128x32xbf16>
    %48 = vector.extract_strided_slice %5 {offsets = [2, 0, 0], sizes = [1, 32, 32], strides = [1, 1, 1]} : vector<4x32x32xbf16> to vector<1x32x32xbf16>
    %49 = vector.shape_cast %48 : vector<1x32x32xbf16> to vector<32x32xbf16>
    %50 = vector.extract_strided_slice %6 {offsets = [2, 0, 0], sizes = [1, 1, 32], strides = [1, 1, 1]} : vector<4x1x32xf32> to vector<1x1x32xf32>
    %51 = vector.shape_cast %50 : vector<1x1x32xf32> to vector<1x32xf32>
    %cst_22 = arith.constant dense<0.000000e+00> : vector<128x32xf32>
    %52 = tpu.matmul %47, %49, %cst_22 {dimension_numbers = #tpu.dot_dimension_numbers<[1], [0], [0], [1], [0, 0, 1, 1], [], []>} : vector<128x32xbf16>, vector<32x32xbf16>, vector<128x32xf32> -> vector<128x32xf32>
    %53 = vector.shape_cast %52 : vector<128x32xf32> to vector<16x8x32xf32>
    %54 = arith.truncf %53 : vector<16x8x32xf32> to vector<16x8x32xbf16>
    "tpu.trace_start"() <{level = 10 : i32, message = "cpq,cqd->cpd"}> : () -> ()
    %cst_23 = arith.constant dense<0.000000e+00> : vector<16x8x32xf32>
    %55 = tpu.matmul %4, %54, %cst_23 {dimension_numbers = #tpu.dot_dimension_numbers<[2], [1], [1], [2], [0, 0, 0, 1, 1, 2], [0], [0]>} : vector<16x8x8xbf16>, vector<16x8x32xbf16>, vector<16x8x32xf32> -> vector<16x8x32xf32>
    "tpu.trace_stop"() : () -> ()
    %56 = vector.shape_cast %55 : vector<16x8x32xf32> to vector<128x32xf32>
    %57 = vector.broadcast %51 : vector<1x32xf32> to vector<128x32xf32>
    %58 = arith.addf %56, %57 : vector<128x32xf32>
    %cst_24 = arith.constant 0.000000e+00 : f32
    %59 = vector.broadcast %cst_24 : f32 to vector<128x32xf32>
    %60 = arith.maximumf %58, %59 : vector<128x32xf32>
    %61 = arith.truncf %60 : vector<128x32xf32> to vector<128x32xbf16>
    %62 = vector.extract_strided_slice %5 {offsets = [3, 0, 0], sizes = [1, 32, 32], strides = [1, 1, 1]} : vector<4x32x32xbf16> to vector<1x32x32xbf16>
    %63 = vector.shape_cast %62 : vector<1x32x32xbf16> to vector<32x32xbf16>
    %64 = vector.extract_strided_slice %6 {offsets = [3, 0, 0], sizes = [1, 1, 32], strides = [1, 1, 1]} : vector<4x1x32xf32> to vector<1x1x32xf32>
    %65 = vector.shape_cast %64 : vector<1x1x32xf32> to vector<1x32xf32>
    %cst_25 = arith.constant dense<0.000000e+00> : vector<128x32xf32>
    %66 = tpu.matmul %61, %63, %cst_25 {dimension_numbers = #tpu.dot_dimension_numbers<[1], [0], [0], [1], [0, 0, 1, 1], [], []>} : vector<128x32xbf16>, vector<32x32xbf16>, vector<128x32xf32> -> vector<128x32xf32>
    %67 = vector.shape_cast %66 : vector<128x32xf32> to vector<16x8x32xf32>
    %68 = arith.truncf %67 : vector<16x8x32xf32> to vector<16x8x32xbf16>
    "tpu.trace_start"() <{level = 10 : i32, message = "cpq,cqd->cpd"}> : () -> ()
    %cst_26 = arith.constant dense<0.000000e+00> : vector<16x8x32xf32>
    %69 = tpu.matmul %4, %68, %cst_26 {dimension_numbers = #tpu.dot_dimension_numbers<[2], [1], [1], [2], [0, 0, 0, 1, 1, 2], [0], [0]>} : vector<16x8x8xbf16>, vector<16x8x32xbf16>, vector<16x8x32xf32> -> vector<16x8x32xf32>
    "tpu.trace_stop"() : () -> ()
    %70 = vector.shape_cast %69 : vector<16x8x32xf32> to vector<128x32xf32>
    %71 = vector.broadcast %65 : vector<1x32xf32> to vector<128x32xf32>
    %72 = arith.addf %70, %71 : vector<128x32xf32>
    %cst_27 = arith.constant 0.000000e+00 : f32
    %73 = vector.broadcast %cst_27 : f32 to vector<128x32xf32>
    %74 = arith.maximumf %72, %73 : vector<128x32xf32>
    %75 = arith.addf %46, %74 : vector<128x32xf32>
    %76 = vector.shape_cast %75 : vector<128x32xf32> to vector<16x8x32xf32>
    %cst_28 = arith.constant dense<0.000000e+00> : vector<16x32xf32>
    %77 = vector.multi_reduction <add>, %76, %cst_28 [1] : vector<16x8x32xf32> to vector<16x32xf32>
    %cst_29 = arith.constant 8.000000e+00 : f32
    %78 = vector.broadcast %cst_29 : f32 to vector<16x32xf32>
    %79 = arith.divf %77, %78 : vector<16x32xf32>
    %c0_30 = arith.constant 0 : index
    %c0_31 = arith.constant 0 : index
    %c0_32 = arith.constant 0 : index
    %80 = vector.load %arg7[%c0_30, %c0_31, %c0_32] : memref<1x16x32xf32, #tpu.memory_space<vmem>>, vector<1x16x32xf32>
    %81 = vector.shape_cast %80 : vector<1x16x32xf32> to vector<16x32xf32>
    %82 = vector.shape_cast %79 : vector<16x32xf32> to vector<1x16x32xf32>
    tpu.vector_store %arg7[%c0_30, %c0_31, %c0_32], %82 {strides = array<i32>} : memref<1x16x32xf32, #tpu.memory_space<vmem>>, vector<1x16x32xf32>,
    return
  }
  func.func @transform_0(%arg0: i32) -> (i32, i32, i32) {
    %c0_i32 = arith.constant 0 : i32
    %c0_i32_0 = arith.constant 0 : i32
    %c0_i32_1 = arith.constant 0 : i32
    return %arg0, %c0_i32, %c0_i32_0 : i32, i32, i32
  }
  func.func @transform_1(%arg0: i32) -> (i32, i32) {
    %c0_i32 = arith.constant 0 : i32
    %c0_i32_0 = arith.constant 0 : i32
    %c0_i32_1 = arith.constant 0 : i32
    return %c0_i32, %c0_i32_0 : i32, i32
  }
  func.func @transform_2(%arg0: i32) -> (i32, i32) {
    %c0_i32 = arith.constant 0 : i32
    %c0_i32_0 = arith.constant 0 : i32
    %c0_i32_1 = arith.constant 0 : i32
    return %c0_i32, %c0_i32_0 : i32, i32
  }
  func.func @transform_3(%arg0: i32) -> (i32, i32) {
    %c0_i32 = arith.constant 0 : i32
    %c0_i32_0 = arith.constant 0 : i32
    %c0_i32_1 = arith.constant 0 : i32
    return %c0_i32, %c0_i32_0 : i32, i32
  }
  func.func @transform_4(%arg0: i32) -> (i32, i32, i32) {
    %c0_i32 = arith.constant 0 : i32
    %c0_i32_0 = arith.constant 0 : i32
    %c0_i32_1 = arith.constant 0 : i32
    %c0_i32_2 = arith.constant 0 : i32
    return %c0_i32, %c0_i32_0, %c0_i32_1 : i32, i32, i32
  }
  func.func @transform_5(%arg0: i32) -> (i32, i32, i32) {
    %c0_i32 = arith.constant 0 : i32
    %c0_i32_0 = arith.constant 0 : i32
    %c0_i32_1 = arith.constant 0 : i32
    %c0_i32_2 = arith.constant 0 : i32
    return %c0_i32, %c0_i32_0, %c0_i32_1 : i32, i32, i32
  }
  func.func @transform_6(%arg0: i32) -> (i32, i32, i32) {
    %c0_i32 = arith.constant 0 : i32
    %c0_i32_0 = arith.constant 0 : i32
    %c0_i32_1 = arith.constant 0 : i32
    return %arg0, %c0_i32, %c0_i32_0 : i32, i32, i32
  }
}

</mosaic_0001>

<llo_original>
// kernel: tpu_custom_call.1
$region0: #{tpu_custom_call.1}
  #allocation0 [shape = 'u32[]', space=smem, size = 0x4, offset = 0x4, fixed_abs, tag = 'smem constant byte address 0x4 - core index']
  #allocation1 [shape = 'u32[144,128]{1,0:T(1,128)}', space=vmem, size = 0x12000, scoped, tag = 'internal scratch']
  %s0 = inlined_call_operand.vmem [shape: bf16[1,128,16], index: 0, kind: input, shape index: {}]
  %s1 = inlined_call_operand.vmem [shape: bf16[8,8], index: 1, kind: input, shape index: {}]
  %s2 = inlined_call_operand.vmem [shape: bf16[16,32], index: 2, kind: input, shape index: {}]
  %s3 = inlined_call_operand.vmem [shape: f32[1,32], index: 3, kind: input, shape index: {}]
  %s4 = inlined_call_operand.vmem [shape: bf16[4,32,32], index: 4, kind: input, shape index: {}]
  %s5 = inlined_call_operand.vmem [shape: f32[4,1,32], index: 5, kind: input, shape index: {}]
  %s6 = inlined_call_operand.hbm [shape: f32[1,16,32], index: 6, kind: output, shape index: {}]
  %s7 = sld [smem:[#allocation0]]
  $region34: #{tpu_custom_call.1} parent=0
    _
  %s9 = ssub.s32 1, %s7
  %s10 = scalar_select 0, %s9, %s7
  $region1: #{tpu_custom_call.1} parent=0
    #allocation2 [shape = 'u8[8192]{0}', space=vmem, size = 0x2000, scoped, tag = 'output window, operand 0, single buffered']
    #allocation3 [shape = 's32[1]{0}', space=sflag, size = 0x4, scoped, tag = 'scoped memory for tpu_custom_call.1']
    %11 = vsyncpa [#allocation3], 0
    // Predicated region
    $region2: #{tpu_custom_call.1} parent=1 // pred_check
      _
    $region3: #{tpu_custom_call.1} parent=1 // pred_check_branch
      %13 = sbr.rel (0) target = $region5
    $region4: #{tpu_custom_call.1} parent=1 // pred_region
      _
    $region5: #{tpu_custom_call.1} parent=1 // pred_fallthru
      _
    // Predicated region
    $region6: #{tpu_custom_call.1} parent=1 // pred_check
      _
    $region7: #{tpu_custom_call.1} parent=1 // pred_check_branch
      %15 = sbr.rel (0) target = $region9
    $region8: #{tpu_custom_call.1} parent=1 // pred_region
      _
    $region9: #{tpu_custom_call.1} parent=1 // pred_fallthru
      _
    // Predicated region
    $region10: #{tpu_custom_call.1} parent=1 // pred_check
      _
    $region11: #{tpu_custom_call.1} parent=1 // pred_check_branch
      %17 = sbr.rel (0) target = $region13
    $region12: #{tpu_custom_call.1} parent=1 // pred_region
      _
    $region13: #{tpu_custom_call.1} parent=1 // pred_fallthru
      _
    // Predicated region
    $region14: #{tpu_custom_call.1} parent=1 // pred_check
      _
    $region15: #{tpu_custom_call.1} parent=1 // pred_check_branch
      %19 = sbr.rel (0) target = $region17
    $region16: #{tpu_custom_call.1} parent=1 // pred_region
      _
    $region17: #{tpu_custom_call.1} parent=1 // pred_fallthru
      _
    // Predicated region
    $region18: #{tpu_custom_call.1} parent=1 // pred_check
      _
    $region19: #{tpu_custom_call.1} parent=1 // pred_check_branch
      %21 = sbr.rel (0) target = $region21
    $region20: #{tpu_custom_call.1} parent=1 // pred_region
      _
    $region21: #{tpu_custom_call.1} parent=1 // pred_fallthru
      _
    // Predicated region
    $region22: #{tpu_custom_call.1} parent=1 // pred_check
      _
    $region23: #{tpu_custom_call.1} parent=1 // pred_check_branch
      %23 = sbr.rel (0) target = $region25
    $region24: #{tpu_custom_call.1} parent=1 // pred_region
      _
    $region25: #{tpu_custom_call.1} parent=1 // pred_fallthru
      _
    %v25 = vld [vmem:[%s0] sm:$0xf]
    %v26 = vld [vmem:[%s0 + $0x4] sm:$0xf]
    %v27 = vld [vmem:[%s0 + $0x8] sm:$0xf]
    %v28 = vld [vmem:[%s0 + $0xc] sm:$0xf]
    %v29 = vld [vmem:[%s0 + $0x10] sm:$0xf]
    %v30 = vld [vmem:[%s0 + $0x14] sm:$0xf]
    %v31 = vld [vmem:[%s0 + $0x18] sm:$0xf]
    %v32 = vld [vmem:[%s0 + $0x1c] sm:$0xf]
    %v33 = vld [vmem:[%s0 + $0x20] sm:$0xf]
    %v34 = vld [vmem:[%s0 + $0x24] sm:$0xf]
    %v35 = vld [vmem:[%s0 + $0x28] sm:$0xf]
    %v36 = vld [vmem:[%s0 + $0x2c] sm:$0xf]
    %v37 = vld [vmem:[%s0 + $0x30] sm:$0xf]
    %v38 = vld [vmem:[%s0 + $0x34] sm:$0xf]
    %v39 = vld [vmem:[%s0 + $0x38] sm:$0xf]
    %v40 = vld [vmem:[%s0 + $0x3c] sm:$0xf]
    %v41 = vld [vmem:[%s1] sm:$0xf]
    %v42 = vld [vmem:[%s4] sm:$0xf]
    %v43 = vld [vmem:[%s4 + $0x4] sm:$0xf]
    %v44 = vld [vmem:[%s4 + $0x8] sm:$0xf]
    %v45 = vld [vmem:[%s4 + $0xc] sm:$0xf]
    %v46 = vld [vmem:[%s4 + $0x10] sm:$0xf]
    %v47 = vld [vmem:[%s4 + $0x14] sm:$0xf]
    %v48 = vld [vmem:[%s4 + $0x18] sm:$0xf]
    %v49 = vld [vmem:[%s4 + $0x1c] sm:$0xf]
    %v50 = vld [vmem:[%s4 + $0x20] sm:$0xf]
    %v51 = vld [vmem:[%s4 + $0x24] sm:$0xf]
    %v52 = vld [vmem:[%s4 + $0x28] sm:$0xf]
    %v53 = vld [vmem:[%s4 + $0x2c] sm:$0xf]
    %v54 = vld [vmem:[%s4 + $0x30] sm:$0xf]
    %v55 = vld [vmem:[%s4 + $0x34] sm:$0xf]
    %v56 = vld [vmem:[%s4 + $0x38] sm:$0xf]
    %v57 = vld [vmem:[%s4 + $0x3c] sm:$0xf]
    %v58 = vld [vmem:[%s5] sm:$0x1]
    %v59 = vld [vmem:[%s5 + $0x1] sm:$0x1]
    %v60 = vld [vmem:[%s5 + $0x2] sm:$0x1]
    %v61 = vld [vmem:[%s5 + $0x3] sm:$0x1]
    %v62 = vld [vmem:[%s2] sm:$0xf]
    %v63 = vld [vmem:[%s2 + $0x4] sm:$0xf]
    %v64 = vld [vmem:[%s3] sm:$0x1]
    %v81 = vunpack.c.l.b16 %v25
    %v82 = vunpack.c.l.b16 %v26
    %v83 = vunpack.c.l.b16 %v27
    %v84 = vunpack.c.l.b16 %v28
    %v85 = vunpack.c.l.b16 %v29
    %v86 = vunpack.c.l.b16 %v30
    %v87 = vunpack.c.l.b16 %v31
    %v88 = vunpack.c.l.b16 %v32
    %v89 = vunpack.c.l.b16 %v33
    %v90 = vunpack.c.l.b16 %v34
    %v91 = vunpack.c.l.b16 %v35
    %v92 = vunpack.c.l.b16 %v36
    %v93 = vunpack.c.l.b16 %v37
    %v94 = vunpack.c.l.b16 %v38
    %v95 = vunpack.c.l.b16 %v39
    %v96 = vunpack.c.l.b16 %v40
    %v97 = vpack.c.b16 %v82, %v81
    %v98 = vpack.c.b16 %v84, %v83
    %v99 = vpack.c.b16 %v86, %v85
    %v100 = vpack.c.b16 %v88, %v87
    %v101 = vpack.c.b16 %v90, %v89
    %v102 = vpack.c.b16 %v92, %v91
    %v103 = vpack.c.b16 %v94, %v93
    %v104 = vpack.c.b16 %v96, %v95
    %v107 = vunpack.c.l.b16 %v62
    %v108 = vunpack.c.l.b16 %v63
    %v109 = vpack.c.b16 %v108, %v107
    %vm111 = vcmask 130048
    %v113 = vsel %vm111, %v97, 0
    %v116 = vsel %vm111, %v98, 0
    %v119 = vsel %vm111, %v99, 0
    %v122 = vsel %vm111, %v100, 0
    %v125 = vsel %vm111, %v101, 0
    %v128 = vsel %vm111, %v102, 0
    %v131 = vsel %vm111, %v103, 0
    %v134 = vsel %vm111, %v104, 0
    %136 = vmatprep.subr.bf16.mxu0 0
    %137 = vmatpush1.bf16.msra.mxu0 %v109
    %138 = vmatprep.subr.bf16.mxu0 0
    %139 = vmatpush1.bf16.msra.mxu0 0
    %140 = vmatprep.subr.bf16.mxu0 0
    %141 = vmatpush1.bf16.msra.mxu0 0
    %142 = vmatprep.subr.bf16.mxu0 0
    %143 = vmatpush1.bf16.msra.mxu0 0
    %144 = vmatprep.subr.bf16.mxu0 0
    %145 = vmatpush1.bf16.msra.mxu0 0
    %146 = vmatprep.subr.bf16.mxu0 0
    %147 = vmatpush1.bf16.msra.mxu0 0
    %148 = vmatprep.subr.bf16.mxu0 0
    %149 = vmatpush1.bf16.msra.mxu0 0
    %150 = vmatprep.subr.bf16.mxu0 0
    %151 = vmatpush1.bf16.msra.mxu0 0
    %152 = vmatprep.subr.bf16.mxu0 0
    %153 = vmatpush1.bf16.msra.mxu0 0
    %154 = vmatprep.subr.bf16.mxu0 0
    %155 = vmatpush1.bf16.msra.mxu0 0
    %156 = vmatprep.subr.bf16.mxu0 0
    %157 = vmatpush1.bf16.msra.mxu0 0
    %158 = vmatprep.subr.bf16.mxu0 0
    %159 = vmatpush1.bf16.msra.mxu0 0
    %160 = vmatprep.subr.bf16.mxu0 0
    %161 = vmatpush1.bf16.msra.mxu0 0
    %162 = vmatprep.subr.bf16.mxu0 0
    %163 = vmatpush1.bf16.msra.mxu0 0
    %164 = vmatprep.subr.bf16.mxu0 0
    %165 = vmatpush1.bf16.msra.mxu0 0
    %166 = vmatprep.subr.bf16.mxu0 0
    %167 = vmatpush1.bf16.msra.mxu0 0
    %168 = vmatprep.mubr.bf16.mxu0 0
    %169 = vmatmul.mubr.bf16.gmra.mrb[0].mxu0 %v113
    %v170 = vpop.f32.mrb[0].mxu0
    %v171 = vadd.f32 0.0, %v170
    %v172 = vpop.f32.mrb[0].mxu0
    %v173 = vpop.f32.mrb[0].mxu0
    %v174 = vadd.f32 0.0, %v173
    %v175 = vpop.f32.mrb[0].mxu0
    %176 = vmatprep.mubr.bf16.mxu0 0
    %177 = vmatmul.mubr.bf16.gmra.mrb[0].mxu0 %v116
    %v178 = vpop.f32.mrb[0].mxu0
    %v179 = vadd.f32 0.0, %v178
    %v180 = vpop.f32.mrb[0].mxu0
    %v181 = vpop.f32.mrb[0].mxu0
    %v182 = vadd.f32 0.0, %v181
    %v183 = vpop.f32.mrb[0].mxu0
    %184 = vmatprep.mubr.bf16.mxu0 0
    %185 = vmatmul.mubr.bf16.gmra.mrb[0].mxu0 %v119
    %v186 = vpop.f32.mrb[0].mxu0
    %v187 = vadd.f32 0.0, %v186
    %v188 = vpop.f32.mrb[0].mxu0
    %v189 = vpop.f32.mrb[0].mxu0
    %v190 = vadd.f32 0.0, %v189
    %v191 = vpop.f32.mrb[0].mxu0
    %192 = vmatprep.mubr.bf16.mxu0 0
    %193 = vmatmul.mubr.bf16.gmra.mrb[0].mxu0 %v122
    %v194 = vpop.f32.mrb[0].mxu0
    %v195 = vadd.f32 0.0, %v194
    %v196 = vpop.f32.mrb[0].mxu0
    %v197 = vpop.f32.mrb[0].mxu0
    %v198 = vadd.f32 0.0, %v197
    %v199 = vpop.f32.mrb[0].mxu0
    %200 = vmatprep.mubr.bf16.mxu0 0
    %201 = vmatmul.mubr.bf16.gmra.mrb[0].mxu0 %v125
    %v202 = vpop.f32.mrb[0].mxu0
    %v203 = vadd.f32 0.0, %v202
    %v204 = vpop.f32.mrb[0].mxu0
    %v205 = vpop.f32.mrb[0].mxu0
    %v206 = vadd.f32 0.0, %v205
    %v207 = vpop.f32.mrb[0].mxu0
    %208 = vmatprep.mubr.bf16.mxu0 0
    %209 = vmatmul.mubr.bf16.gmra.mrb[0].mxu0 %v128
    %v210 = vpop.f32.mrb[0].mxu0
    %v211 = vadd.f32 0.0, %v210
    %v212 = vpop.f32.mrb[0].mxu0
    %v213 = vpop.f32.mrb[0].mxu0
    %v214 = vadd.f32 0.0, %v213
    %v215 = vpop.f32.mrb[0].mxu0
    %216 = vmatprep.mubr.bf16.mxu0 0
    %217 = vmatmul.mubr.bf16.gmra.mrb[0].mxu0 %v131
    %v218 = vpop.f32.mrb[0].mxu0
    %v219 = vadd.f32 0.0, %v218
    %v220 = vpop.f32.mrb[0].mxu0
    %v221 = vpop.f32.mrb[0].mxu0
    %v222 = vadd.f32 0.0, %v221
    %v223 = vpop.f32.mrb[0].mxu0
    %224 = vmatprep.mubr.bf16.mxu0 0
    %225 = vmatmul.mubr.bf16.gmra.mrb[0].mxu0 %v134
    %v226 = vpop.f32.mrb[0].mxu0
    %v227 = vadd.f32 0.0, %v226
    %v228 = vpop.f32.mrb[0].mxu0
    %v229 = vpop.f32.mrb[0].mxu0
    %v230 = vadd.f32 0.0, %v229
    %v231 = vpop.f32.mrb[0].mxu0
    %232 = vdwg.mxu0
    %v233 = vpack.c.bf16 %v171, %v171
    %v234 = vpack.c.bf16 %v174, %v174
    %v235 = vpack.c.bf16 %v179, %v179
    %v236 = vpack.c.bf16 %v182, %v182
    %v237 = vpack.c.bf16 %v187, %v187
    %v238 = vpack.c.bf16 %v190, %v190
    %v239 = vpack.c.bf16 %v195, %v195
    %v240 = vpack.c.bf16 %v198, %v198
    %v241 = vpack.c.bf16 %v203, %v203
    %v242 = vpack.c.bf16 %v206, %v206
    %v243 = vpack.c.bf16 %v211, %v211
    %v244 = vpack.c.bf16 %v214, %v214
    %v245 = vpack.c.bf16 %v219, %v219
    %v246 = vpack.c.bf16 %v222, %v222
    %v247 = vpack.c.bf16 %v227, %v227
    %v248 = vpack.c.bf16 %v230, %v230
    %vm249 = vcmask 64512
    %v251 = vsel %vm249, %v41, 0
    %vm253 = vcmask 1043456
    %v255 = vsel %vm253, %v233, 0
    %257 = vmatprep.subr.bf16.mxu0 0
    %258 = vmatpush1.bf16.msra.mxu0 %v255
    %259 = vmatprep.subr.bf16.mxu0 0
    %260 = vmatpush1.bf16.msra.mxu0 0
    %261 = vmatprep.subr.bf16.mxu0 0
    %262 = vmatpush1.bf16.msra.mxu0 0
    %263 = vmatprep.subr.bf16.mxu0 0
    %264 = vmatpush1.bf16.msra.mxu0 0
    %265 = vmatprep.subr.bf16.mxu0 0
    %266 = vmatpush1.bf16.msra.mxu0 0
    %267 = vmatprep.subr.bf16.mxu0 0
    %268 = vmatpush1.bf16.msra.mxu0 0
    %269 = vmatprep.subr.bf16.mxu0 0
    %270 = vmatpush1.bf16.msra.mxu0 0
    %271 = vmatprep.subr.bf16.mxu0 0
    %272 = vmatpush1.bf16.msra.mxu0 0
    %273 = vmatprep.subr.bf16.mxu0 0
    %274 = vmatpush1.bf16.msra.mxu0 0
    %275 = vmatprep.subr.bf16.mxu0 0
    %276 = vmatpush1.bf16.msra.mxu0 0
    %277 = vmatprep.subr.bf16.mxu0 0
    %278 = vmatpush1.bf16.msra.mxu0 0
    %279 = vmatprep.subr.bf16.mxu0 0
    %280 = vmatpush1.bf16.msra.mxu0 0
    %281 = vmatprep.subr.bf16.mxu0 0
    %282 = vmatpush1.bf16.msra.mxu0 0
    %283 = vmatprep.subr.bf16.mxu0 0
    %284 = vmatpush1.bf16.msra.mxu0 0
    %285 = vmatprep.subr.bf16.mxu0 0
    %286 = vmatpush1.bf16.msra.mxu0 0
    %287 = vmatprep.subr.bf16.mxu0 0
    %288 = vmatpush1.bf16.msra.mxu0 0
    %289 = vmatprep.mubr.bf16.mxu0 0
    %290 = vmatmul.mubr.bf16.gmra.mrb[0].mxu0 %v251
    %v291 = vpop.f32.mrb[0].mxu0
    %v292 = vadd.f32 0.0, %v291
    %v293 = vpop.f32.mrb[0].mxu0
    %v294 = vpop.f32.mrb[0].mxu0
    %v295 = vpop.f32.mrb[0].mxu0
    %296 = vdwg.mxu0
    %v298 = vsel %vm253, %v234, 0
    %300 = vmatprep.subr.bf16.mxu0 0
    %301 = vmatpush1.bf16.msra.mxu0 %v298
    %302 = vmatprep.subr.bf16.mxu0 0
    %303 = vmatpush1.bf16.msra.mxu0 0
    %304 = vmatprep.subr.bf16.mxu0 0
    %305 = vmatpush1.bf16.msra.mxu0 0
    %306 = vmatprep.subr.bf16.mxu0 0
    %307 = vmatpush1.bf16.msra.mxu0 0
    %308 = vmatprep.subr.bf16.mxu0 0
    %309 = vmatpush1.bf16.msra.mxu0 0
    %310 = vmatprep.subr.bf16.mxu0 0
    %311 = vmatpush1.bf16.msra.mxu0 0
    %312 = vmatprep.subr.bf16.mxu0 0
    %313 = vmatpush1.bf16.msra.mxu0 0
    %314 = vmatprep.subr.bf16.mxu0 0
    %315 = vmatpush1.bf16.msra.mxu0 0
    %316 = vmatprep.subr.bf16.mxu0 0
    %317 = vmatpush1.bf16.msra.mxu0 0
    %318 = vmatprep.subr.bf16.mxu0 0
    %319 = vmatpush1.bf16.msra.mxu0 0
    %320 = vmatprep.subr.bf16.mxu0 0
    %321 = vmatpush1.bf16.msra.mxu0 0
    %322 = vmatprep.subr.bf16.mxu0 0
    %323 = vmatpush1.bf16.msra.mxu0 0
    %324 = vmatprep.subr.bf16.mxu0 0
    %325 = vmatpush1.bf16.msra.mxu0 0
    %326 = vmatprep.subr.bf16.mxu0 0
    %327 = vmatpush1.bf16.msra.mxu0 0
    %328 = vmatprep.subr.bf16.mxu0 0
    %329 = vmatpush1.bf16.msra.mxu0 0
    %330 = vmatprep.subr.bf16.mxu0 0
    %331 = vmatpush1.bf16.msra.mxu0 0
    %332 = vmatprep.mubr.bf16.mxu0 0
    %333 = vmatmul.mubr.bf16.gmra.mrb[0].mxu0 %v251
    %v334 = vpop.f32.mrb[0].mxu0
    %v335 = vadd.f32 0.0, %v334
    %v336 = vpop.f32.mrb[0].mxu0
    %v337 = vpop.f32.mrb[0].mxu0
    %v338 = vpop.f32.mrb[0].mxu0
    %339 = vdwg.mxu0
    %v341 = vsel %vm253, %v235, 0
    %343 = vmatprep.subr.bf16.mxu0 0
    %344 = vmatpush1.bf16.msra.mxu0 %v341
    %345 = vmatprep.subr.bf16.mxu0 0
    %346 = vmatpush1.bf16.msra.mxu0 0
    %347 = vmatprep.subr.bf16.mxu0 0
    %348 = vmatpush1.bf16.msra.mxu0 0
    %349 = vmatprep.subr.bf16.mxu0 0
    %350 = vmatpush1.bf16.msra.mxu0 0
    %351 = vmatprep.subr.bf16.mxu0 0
    %352 = vmatpush1.bf16.msra.mxu0 0
    %353 = vmatprep.subr.bf16.mxu0 0
    %354 = vmatpush1.bf16.msra.mxu0 0
    %355 = vmatprep.subr.bf16.mxu0 0
    %356 = vmatpush1.bf16.msra.mxu0 0
    %357 = vmatprep.subr.bf16.mxu0 0
    %358 = vmatpush1.bf16.msra.mxu0 0
    %359 = vmatprep.subr.bf16.mxu0 0
    %360 = vmatpush1.bf16.msra.mxu0 0
    %361 = vmatprep.subr.bf16.mxu0 0
    %362 = vmatpush1.bf16.msra.mxu0 0
    %363 = vmatprep.subr.bf16.mxu0 0
    %364 = vmatpush1.bf16.msra.mxu0 0
    %365 = vmatprep.subr.bf16.mxu0 0
    %366 = vmatpush1.bf16.msra.mxu0 0
    %367 = vmatprep.subr.bf16.mxu0 0
    %368 = vmatpush1.bf16.msra.mxu0 0
    %369 = vmatprep.subr.bf16.mxu0 0
    %370 = vmatpush1.bf16.msra.mxu0 0
    %371 = vmatprep.subr.bf16.mxu0 0
    %372 = vmatpush1.bf16.msra.mxu0 0
    %373 = vmatprep.subr.bf16.mxu0 0
    %374 = vmatpush1.bf16.msra.mxu0 0
    %375 = vmatprep.mubr.bf16.mxu0 0
    %376 = vmatmul.mubr.bf16.gmra.mrb[0].mxu0 %v251
    %v377 = vpop.f32.mrb[0].mxu0
    %v378 = vadd.f32 0.0, %v377
    %v379 = vpop.f32.mrb[0].mxu0
    %v380 = vpop.f32.mrb[0].mxu0
    %v381 = vpop.f32.mrb[0].mxu0
    %382 = vdwg.mxu0
    %v384 = vsel %vm253, %v236, 0
    %386 = vmatprep.subr.bf16.mxu0 0
    %387 = vmatpush1.bf16.msra.mxu0 %v384
    %388 = vmatprep.subr.bf16.mxu0 0
    %389 = vmatpush1.bf16.msra.mxu0 0
    %390 = vmatprep.subr.bf16.mxu0 0
    %391 = vmatpush1.bf16.msra.mxu0 0
    %392 = vmatprep.subr.bf16.mxu0 0
    %393 = vmatpush1.bf16.msra.mxu0 0
    %394 = vmatprep.subr.bf16.mxu0 0
    %395 = vmatpush1.bf16.msra.mxu0 0
    %396 = vmatprep.subr.bf16.mxu0 0
    %397 = vmatpush1.bf16.msra.mxu0 0
    %398 = vmatprep.subr.bf16.mxu0 0
    %399 = vmatpush1.bf16.msra.mxu0 0
    %400 = vmatprep.subr.bf16.mxu0 0
    %401 = vmatpush1.bf16.msra.mxu0 0
    %402 = vmatprep.subr.bf16.mxu0 0
    %403 = vmatpush1.bf16.msra.mxu0 0
    %404 = vmatprep.subr.bf16.mxu0 0
    %405 = vmatpush1.bf16.msra.mxu0 0
    %406 = vmatprep.subr.bf16.mxu0 0
    %407 = vmatpush1.bf16.msra.mxu0 0
    %408 = vmatprep.subr.bf16.mxu0 0
    %409 = vmatpush1.bf16.msra.mxu0 0
    %410 = vmatprep.subr.bf16.mxu0 0
    %411 = vmatpush1.bf16.msra.mxu0 0
    %412 = vmatprep.subr.bf16.mxu0 0
    %413 = vmatpush1.bf16.msra.mxu0 0
    %414 = vmatprep.subr.bf16.mxu0 0
    %415 = vmatpush1.bf16.msra.mxu0 0
    %416 = vmatprep.subr.bf16.mxu0 0
    %417 = vmatpush1.bf16.msra.mxu0 0
    %418 = vmatprep.mubr.bf16.mxu0 0
    %419 = vmatmul.mubr.bf16.gmra.mrb[0].mxu0 %v251
    %v420 = vpop.f32.mrb[0].mxu0
    %v421 = vadd.f32 0.0, %v420
    %v422 = vpop.f32.mrb[0].mxu0
    %v423 = vpop.f32.mrb[0].mxu0
    %v424 = vpop.f32.mrb[0].mxu0
    %425 = vdwg.mxu0
    %v427 = vsel %vm253, %v237, 0
    %429 = vmatprep.subr.bf16.mxu0 0
    %430 = vmatpush1.bf16.msra.mxu0 %v427
    %431 = vmatprep.subr.bf16.mxu0 0
    %432 = vmatpush1.bf16.msra.mxu0 0
    %433 = vmatprep.subr.bf16.mxu0 0
    %434 = vmatpush1.bf16.msra.mxu0 0
    %435 = vmatprep.subr.bf16.mxu0 0
    %436 = vmatpush1.bf16.msra.mxu0 0
    %437 = vmatprep.subr.bf16.mxu0 0
    %438 = vmatpush1.bf16.msra.mxu0 0
    %439 = vmatprep.subr.bf16.mxu0 0
    %440 = vmatpush1.bf16.msra.mxu0 0
    %441 = vmatprep.subr.bf16.mxu0 0
    %442 = vmatpush1.bf16.msra.mxu0 0
    %443 = vmatprep.subr.bf16.mxu0 0
    %444 = vmatpush1.bf16.msra.mxu0 0
    %445 = vmatprep.subr.bf16.mxu0 0
    %446 = vmatpush1.bf16.msra.mxu0 0
    %447 = vmatprep.subr.bf16.mxu0 0
    %448 = vmatpush1.bf16.msra.mxu0 0
    %449 = vmatprep.subr.bf16.mxu0 0
    %450 = vmatpush1.bf16.msra.mxu0 0
    %451 = vmatprep.subr.bf16.mxu0 0
    %452 = vmatpush1.bf16.msra.mxu0 0
    %453 = vmatprep.subr.bf16.mxu0 0
    %454 = vmatpush1.bf16.msra.mxu0 0
    %455 = vmatprep.subr.bf16.mxu0 0
    %456 = vmatpush1.bf16.msra.mxu0 0
    %457 = vmatprep.subr.bf16.mxu0 0
    %458 = vmatpush1.bf16.msra.mxu0 0
    %459 = vmatprep.subr.bf16.mxu0 0
    %460 = vmatpush1.bf16.msra.mxu0 0
    %461 = vmatprep.mubr.bf16.mxu0 0
    %462 = vmatmul.mubr.bf16.gmra.mrb[0].mxu0 %v251
    %v463 = vpop.f32.mrb[0].mxu0
    %v464 = vadd.f32 0.0, %v463
    %v465 = vpop.f32.mrb[0].mxu0
    %v466 = vpop.f32.mrb[0].mxu0
    %v467 = vpop.f32.mrb[0].mxu0
    %468 = vdwg.mxu0
    %v470 = vsel %vm253, %v238, 0
    %472 = vmatprep.subr.bf16.mxu0 0
    %473 = vmatpush1.bf16.msra.mxu0 %v470
    %474 = vmatprep.subr.bf16.mxu0 0
    %475 = vmatpush1.bf16.msra.mxu0 0
    %476 = vmatprep.subr.bf16.mxu0 0
    %477 = vmatpush1.bf16.msra.mxu0 0
    %478 = vmatprep.subr.bf16.mxu0 0
    %479 = vmatpush1.bf16.msra.mxu0 0
    %480 = vmatprep.subr.bf16.mxu0 0
    %481 = vmatpush1.bf16.msra.mxu0 0
    %482 = vmatprep.subr.bf16.mxu0 0
    %483 = vmatpush1.bf16.msra.mxu0 0
    %484 = vmatprep.subr.bf16.mxu0 0
    %485 = vmatpush1.bf16.msra.mxu0 0
    %486 = vmatprep.subr.bf16.mxu0 0
    %487 = vmatpush1.bf16.msra.mxu0 0
    %488 = vmatprep.subr.bf16.mxu0 0
    %489 = vmatpush1.bf16.msra.mxu0 0
    %490 = vmatprep.subr.bf16.mxu0 0
    %491 = vmatpush1.bf16.msra.mxu0 0
    %492 = vmatprep.subr.bf16.mxu0 0
    %493 = vmatpush1.bf16.msra.mxu0 0
    %494 = vmatprep.subr.bf16.mxu0 0
    %495 = vmatpush1.bf16.msra.mxu0 0
    %496 = vmatprep.subr.bf16.mxu0 0
    %497 = vmatpush1.bf16.msra.mxu0 0
    %498 = vmatprep.subr.bf16.mxu0 0
    %499 = vmatpush1.bf16.msra.mxu0 0
    %500 = vmatprep.subr.bf16.mxu0 0
    %501 = vmatpush1.bf16.msra.mxu0 0
    %502 = vmatprep.subr.bf16.mxu0 0
    %503 = vmatpush1.bf16.msra.mxu0 0
    %504 = vmatprep.mubr.bf16.mxu0 0
    %505 = vmatmul.mubr.bf16.gmra.mrb[0].mxu0 %v251
    %v506 = vpop.f32.mrb[0].mxu0
    %v507 = vadd.f32 0.0, %v506
    %v508 = vpop.f32.mrb[0].mxu0
    %v509 = vpop.f32.mrb[0].mxu0
    %v510 = vpop.f32.mrb[0].mxu0
    %511 = vdwg.mxu0
    %v513 = vsel %vm253, %v239, 0
    %515 = vmatprep.subr.bf16.mxu0 0
    %516 = vmatpush1.bf16.msra.mxu0 %v513
    %517 = vmatprep.subr.bf16.mxu0 0
    %518 = vmatpush1.bf16.msra.mxu0 0
    %519 = vmatprep.subr.bf16.mxu0 0
    %520 = vmatpush1.bf16.msra.mxu0 0
    %521 = vmatprep.subr.bf16.mxu0 0
    %522 = vmatpush1.bf16.msra.mxu0 0
    %523 = vmatprep.subr.bf16.mxu0 0
    %524 = vmatpush1.bf16.msra.mxu0 0
    %525 = vmatprep.subr.bf16.mxu0 0
    %526 = vmatpush1.bf16.msra.mxu0 0
    %527 = vmatprep.subr.bf16.mxu0 0
    %528 = vmatpush1.bf16.msra.mxu0 0
    %529 = vmatprep.subr.bf16.mxu0 0
    %530 = vmatpush1.bf16.msra.mxu0 0
    %531 = vmatprep.subr.bf16.mxu0 0
    %532 = vmatpush1.bf16.msra.mxu0 0
    %533 = vmatprep.subr.bf16.mxu0 0
    %534 = vmatpush1.bf16.msra.mxu0 0
    %535 = vmatprep.subr.bf16.mxu0 0
    %536 = vmatpush1.bf16.msra.mxu0 0
    %537 = vmatprep.subr.bf16.mxu0 0
    %538 = vmatpush1.bf16.msra.mxu0 0
    %539 = vmatprep.subr.bf16.mxu0 0
    %540 = vmatpush1.bf16.msra.mxu0 0
    %541 = vmatprep.subr.bf16.mxu0 0
    %542 = vmatpush1.bf16.msra.mxu0 0
    %543 = vmatprep.subr.bf16.mxu0 0
    %544 = vmatpush1.bf16.msra.mxu0 0
    %545 = vmatprep.subr.bf16.mxu0 0
    %546 = vmatpush1.bf16.msra.mxu0 0
    %547 = vmatprep.mubr.bf16.mxu0 0
    %548 = vmatmul.mubr.bf16.gmra.mrb[0].mxu0 %v251
    %v549 = vpop.f32.mrb[0].mxu0
    %v550 = vadd.f32 0.0, %v549
    %v551 = vpop.f32.mrb[0].mxu0
    %v552 = vpop.f32.mrb[0].mxu0
    %v553 = vpop.f32.mrb[0].mxu0
    %554 = vdwg.mxu0
    %v556 = vsel %vm253, %v240, 0
    %558 = vmatprep.subr.bf16.mxu0 0
    %559 = vmatpush1.bf16.msra.mxu0 %v556
    %560 = vmatprep.subr.bf16.mxu0 0
    %561 = vmatpush1.bf16.msra.mxu0 0
    %562 = vmatprep.subr.bf16.mxu0 0
    %563 = vmatpush1.bf16.msra.mxu0 0
    %564 = vmatprep.subr.bf16.mxu0 0
    %565 = vmatpush1.bf16.msra.mxu0 0
    %566 = vmatprep.subr.bf16.mxu0 0
    %567 = vmatpush1.bf16.msra.mxu0 0
    %568 = vmatprep.subr.bf16.mxu0 0
    %569 = vmatpush1.bf16.msra.mxu0 0
    %570 = vmatprep.subr.bf16.mxu0 0
    %571 = vmatpush1.bf16.msra.mxu0 0
    %572 = vmatprep.subr.bf16.mxu0 0
    %573 = vmatpush1.bf16.msra.mxu0 0
    %574 = vmatprep.subr.bf16.mxu0 0
    %575 = vmatpush1.bf16.msra.mxu0 0
    %576 = vmatprep.subr.bf16.mxu0 0
    %577 = vmatpush1.bf16.msra.mxu0 0
    %578 = vmatprep.subr.bf16.mxu0 0
    %579 = vmatpush1.bf16.msra.mxu0 0
    %580 = vmatprep.subr.bf16.mxu0 0
    %581 = vmatpush1.bf16.msra.mxu0 0
    %582 = vmatprep.subr.bf16.mxu0 0
    %583 = vmatpush1.bf16.msra.mxu0 0
    %584 = vmatprep.subr.bf16.mxu0 0
    %585 = vmatpush1.bf16.msra.mxu0 0
    %586 = vmatprep.subr.bf16.mxu0 0
    %587 = vmatpush1.bf16.msra.mxu0 0
    %588 = vmatprep.subr.bf16.mxu0 0
    %589 = vmatpush1.bf16.msra.mxu0 0
    %590 = vmatprep.mubr.bf16.mxu0 0
    %591 = vmatmul.mubr.bf16.gmra.mrb[0].mxu0 %v251
    %v592 = vpop.f32.mrb[0].mxu0
    %v593 = vadd.f32 0.0, %v592
    %v594 = vpop.f32.mrb[0].mxu0
    %v595 = vpop.f32.mrb[0].mxu0
    %v596 = vpop.f32.mrb[0].mxu0
    %597 = vdwg.mxu0
    %v599 = vsel %vm253, %v241, 0
    %601 = vmatprep.subr.bf16.mxu0 0
    %602 = vmatpush1.bf16.msra.mxu0 %v599
    %603 = vmatprep.subr.bf16.mxu0 0
    %604 = vmatpush1.bf16.msra.mxu0 0
    %605 = vmatprep.subr.bf16.mxu0 0
    %606 = vmatpush1.bf16.msra.mxu0 0
    %607 = vmatprep.subr.bf16.mxu0 0
    %608 = vmatpush1.bf16.msra.mxu0 0
    %609 = vmatprep.subr.bf16.mxu0 0
    %610 = vmatpush1.bf16.msra.mxu0 0
    %611 = vmatprep.subr.bf16.mxu0 0
    %612 = vmatpush1.bf16.msra.mxu0 0
    %613 = vmatprep.subr.bf16.mxu0 0
    %614 = vmatpush1.bf16.msra.mxu0 0
    %615 = vmatprep.subr.bf16.mxu0 0
    %616 = vmatpush1.bf16.msra.mxu0 0
    %617 = vmatprep.subr.bf16.mxu0 0
    %618 = vmatpush1.bf16.msra.mxu0 0
    %619 = vmatprep.subr.bf16.mxu0 0
    %620 = vmatpush1.bf16.msra.mxu0 0
    %621 = vmatprep.subr.bf16.mxu0 0
    %622 = vmatpush1.bf16.msra.mxu0 0
    %623 = vmatprep.subr.bf16.mxu0 0
    %624 = vmatpush1.bf16.msra.mxu0 0
    %625 = vmatprep.subr.bf16.mxu0 0
    %626 = vmatpush1.bf16.msra.mxu0 0
    %627 = vmatprep.subr.bf16.mxu0 0
    %628 = vmatpush1.bf16.msra.mxu0 0
    %629 = vmatprep.subr.bf16.mxu0 0
    %630 = vmatpush1.bf16.msra.mxu0 0
    %631 = vmatprep.subr.bf16.mxu0 0
    %632 = vmatpush1.bf16.msra.mxu0 0
    %633 = vmatprep.mubr.bf16.mxu0 0
    %634 = vmatmul.mubr.bf16.gmra.mrb[0].mxu0 %v251
    %v635 = vpop.f32.mrb[0].mxu0
    %v636 = vadd.f32 0.0, %v635
    %v637 = vpop.f32.mrb[0].mxu0
    %v638 = vpop.f32.mrb[0].mxu0
    %v639 = vpop.f32.mrb[0].mxu0
    %640 = vdwg.mxu0
    %v642 = vsel %vm253, %v242, 0
    %644 = vmatprep.subr.bf16.mxu0 0
    %645 = vmatpush1.bf16.msra.mxu0 %v642
    %646 = vmatprep.subr.bf16.mxu0 0
    %647 = vmatpush1.bf16.msra.mxu0 0
    %648 = vmatprep.subr.bf16.mxu0 0
    %649 = vmatpush1.bf16.msra.mxu0 0
    %650 = vmatprep.subr.bf16.mxu0 0
    %651 = vmatpush1.bf16.msra.mxu0 0
    %652 = vmatprep.subr.bf16.mxu0 0
    %653 = vmatpush1.bf16.msra.mxu0 0
    %654 = vmatprep.subr.bf16.mxu0 0
    %655 = vmatpush1.bf16.msra.mxu0 0
    %656 = vmatprep.subr.bf16.mxu0 0
    %657 = vmatpush1.bf16.msra.mxu0 0
    %658 = vmatprep.subr.bf16.mxu0 0
    %659 = vmatpush1.bf16.msra.mxu0 0
    %660 = vmatprep.subr.bf16.mxu0 0
    %661 = vmatpush1.bf16.msra.mxu0 0
    %662 = vmatprep.subr.bf16.mxu0 0
    %663 = vmatpush1.bf16.msra.mxu0 0
    %664 = vmatprep.subr.bf16.mxu0 0
    %665 = vmatpush1.bf16.msra.mxu0 0
    %666 = vmatprep.subr.bf16.mxu0 0
    %667 = vmatpush1.bf16.msra.mxu0 0
    %668 = vmatprep.subr.bf16.mxu0 0
    %669 = vmatpush1.bf16.msra.mxu0 0
    %670 = vmatprep.subr.bf16.mxu0 0
    %671 = vmatpush1.bf16.msra.mxu0 0
    %672 = vmatprep.subr.bf16.mxu0 0
    %673 = vmatpush1.bf16.msra.mxu0 0
    %674 = vmatprep.subr.bf16.mxu0 0
    %675 = vmatpush1.bf16.msra.mxu0 0
    %676 = vmatprep.mubr.bf16.mxu0 0
    %677 = vmatmul.mubr.bf16.gmra.mrb[0].mxu0 %v251
    %v678 = vpop.f32.mrb[0].mxu0
    %v679 = vadd.f32 0.0, %v678
    %v680 = vpop.f32.mrb[0].mxu0
    %v681 = vpop.f32.mrb[0].mxu0
    %v682 = vpop.f32.mrb[0].mxu0
    %683 = vdwg.mxu0
    %v685 = vsel %vm253, %v243, 0
    %687 = vmatprep.subr.bf16.mxu0 0
    %688 = vmatpush1.bf16.msra.mxu0 %v685
    %689 = vmatprep.subr.bf16.mxu0 0
    %690 = vmatpush1.bf16.msra.mxu0 0
    %691 = vmatprep.subr.bf16.mxu0 0
    %692 = vmatpush1.bf16.msra.mxu0 0
    %693 = vmatprep.subr.bf16.mxu0 0
    %694 = vmatpush1.bf16.msra.mxu0 0
    %695 = vmatprep.subr.bf16.mxu0 0
    %696 = vmatpush1.bf16.msra.mxu0 0
    %697 = vmatprep.subr.bf16.mxu0 0
    %698 = vmatpush1.bf16.msra.mxu0 0
    %699 = vmatprep.subr.bf16.mxu0 0
    %700 = vmatpush1.bf16.msra.mxu0 0
    %701 = vmatprep.subr.bf16.mxu0 0
    %702 = vmatpush1.bf16.msra.mxu0 0
    %703 = vmatprep.subr.bf16.mxu0 0
    %704 = vmatpush1.bf16.msra.mxu0 0
    %705 = vmatprep.subr.bf16.mxu0 0
    %706 = vmatpush1.bf16.msra.mxu0 0
    %707 = vmatprep.subr.bf16.mxu0 0
    %708 = vmatpush1.bf16.msra.mxu0 0
    %709 = vmatprep.subr.bf16.mxu0 0
    %710 = vmatpush1.bf16.msra.mxu0 0
    %711 = vmatprep.subr.bf16.mxu0 0
    %712 = vmatpush1.bf16.msra.mxu0 0
    %713 = vmatprep.subr.bf16.mxu0 0
    %714 = vmatpush1.bf16.msra.mxu0 0
    %715 = vmatprep.subr.bf16.mxu0 0
    %716 = vmatpush1.bf16.msra.mxu0 0
    %717 = vmatprep.subr.bf16.mxu0 0
    %718 = vmatpush1.bf16.msra.mxu0 0
    %719 = vmatprep.mubr.bf16.mxu0 0
    %720 = vmatmul.mubr.bf16.gmra.mrb[0].mxu0 %v251
    %v721 = vpop.f32.mrb[0].mxu0
    %v722 = vadd.f32 0.0, %v721
    %v723 = vpop.f32.mrb[0].mxu0
    %v724 = vpop.f32.mrb[0].mxu0
    %v725 = vpop.f32.mrb[0].mxu0
    %726 = vdwg.mxu0
    %v728 = vsel %vm253, %v244, 0
    %730 = vmatprep.subr.bf16.mxu0 0
    %731 = vmatpush1.bf16.msra.mxu0 %v728
    %732 = vmatprep.subr.bf16.mxu0 0
    %733 = vmatpush1.bf16.msra.mxu0 0
    %734 = vmatprep.subr.bf16.mxu0 0
    %735 = vmatpush1.bf16.msra.mxu0 0
    %736 = vmatprep.subr.bf16.mxu0 0
    %737 = vmatpush1.bf16.msra.mxu0 0
    %738 = vmatprep.subr.bf16.mxu0 0
    %739 = vmatpush1.bf16.msra.mxu0 0
    %740 = vmatprep.subr.bf16.mxu0 0
    %741 = vmatpush1.bf16.msra.mxu0 0
    %742 = vmatprep.subr.bf16.mxu0 0
    %743 = vmatpush1.bf16.msra.mxu0 0
    %744 = vmatprep.subr.bf16.mxu0 0
    %745 = vmatpush1.bf16.msra.mxu0 0
    %746 = vmatprep.subr.bf16.mxu0 0
    %747 = vmatpush1.bf16.msra.mxu0 0
    %748 = vmatprep.subr.bf16.mxu0 0
    %749 = vmatpush1.bf16.msra.mxu0 0
    %750 = vmatprep.subr.bf16.mxu0 0
    %751 = vmatpush1.bf16.msra.mxu0 0
    %752 = vmatprep.subr.bf16.mxu0 0
    %753 = vmatpush1.bf16.msra.mxu0 0
    %754 = vmatprep.subr.bf16.mxu0 0
    %755 = vmatpush1.bf16.msra.mxu0 0
    %756 = vmatprep.subr.bf16.mxu0 0
    %757 = vmatpush1.bf16.msra.mxu0 0
    %758 = vmatprep.subr.bf16.mxu0 0
    %759 = vmatpush1.bf16.msra.mxu0 0
    %760 = vmatprep.subr.bf16.mxu0 0
    %761 = vmatpush1.bf16.msra.mxu0 0
    %762 = vmatprep.mubr.bf16.mxu0 0
    %763 = vmatmul.mubr.bf16.gmra.mrb[0].mxu0 %v251
    %v764 = vpop.f32.mrb[0].mxu0
    %v765 = vadd.f32 0.0, %v764
    %v766 = vpop.f32.mrb[0].mxu0
    %v767 = vpop.f32.mrb[0].mxu0
    %v768 = vpop.f32.mrb[0].mxu0
    %769 = vdwg.mxu0
    %v771 = vsel %vm253, %v245, 0
    %773 = vmatprep.subr.bf16.mxu0 0
    %774 = vmatpush1.bf16.msra.mxu0 %v771
    %775 = vmatprep.subr.bf16.mxu0 0
    %776 = vmatpush1.bf16.msra.mxu0 0
    %777 = vmatprep.subr.bf16.mxu0 0
    %778 = vmatpush1.bf16.msra.mxu0 0
    %779 = vmatprep.subr.bf16.mxu0 0
    %780 = vmatpush1.bf16.msra.mxu0 0
    %781 = vmatprep.subr.bf16.mxu0 0
    %782 = vmatpush1.bf16.msra.mxu0 0
    %783 = vmatprep.subr.bf16.mxu0 0
    %784 = vmatpush1.bf16.msra.mxu0 0
    %785 = vmatprep.subr.bf16.mxu0 0
    %786 = vmatpush1.bf16.msra.mxu0 0
    %787 = vmatprep.subr.bf16.mxu0 0
    %788 = vmatpush1.bf16.msra.mxu0 0
    %789 = vmatprep.subr.bf16.mxu0 0
    %790 = vmatpush1.bf16.msra.mxu0 0
    %791 = vmatprep.subr.bf16.mxu0 0
    %792 = vmatpush1.bf16.msra.mxu0 0
    %793 = vmatprep.subr.bf16.mxu0 0
    %794 = vmatpush1.bf16.msra.mxu0 0
    %795 = vmatprep.subr.bf16.mxu0 0
    %796 = vmatpush1.bf16.msra.mxu0 0
    %797 = vmatprep.subr.bf16.mxu0 0
    %798 = vmatpush1.bf16.msra.mxu0 0
    %799 = vmatprep.subr.bf16.mxu0 0
    %800 = vmatpush1.bf16.msra.mxu0 0
    %801 = vmatprep.subr.bf16.mxu0 0
    %802 = vmatpush1.bf16.msra.mxu0 0
    %803 = vmatprep.subr.bf16.mxu0 0
    %804 = vmatpush1.bf16.msra.mxu0 0
    %805 = vmatprep.mubr.bf16.mxu0 0
    %806 = vmatmul.mubr.bf16.gmra.mrb[0].mxu0 %v251
    %v807 = vpop.f32.mrb[0].mxu0
    %v808 = vadd.f32 0.0, %v807
    %v809 = vpop.f32.mrb[0].mxu0
    %v810 = vpop.f32.mrb[0].mxu0
    %v811 = vpop.f32.mrb[0].mxu0
    %812 = vdwg.mxu0
    %v814 = vsel %vm253, %v246, 0
    %816 = vmatprep.subr.bf16.mxu0 0
    %817 = vmatpush1.bf16.msra.mxu0 %v814
    %818 = vmatprep.subr.bf16.mxu0 0
    %819 = vmatpush1.bf16.msra.mxu0 0
    %820 = vmatprep.subr.bf16.mxu0 0
    %821 = vmatpush1.bf16.msra.mxu0 0
    %822 = vmatprep.subr.bf16.mxu0 0
    %823 = vmatpush1.bf16.msra.mxu0 0
    %824 = vmatprep.subr.bf16.mxu0 0
    %825 = vmatpush1.bf16.msra.mxu0 0
    %826 = vmatprep.subr.bf16.mxu0 0
    %827 = vmatpush1.bf16.msra.mxu0 0
    %828 = vmatprep.subr.bf16.mxu0 0
    %829 = vmatpush1.bf16.msra.mxu0 0
    %830 = vmatprep.subr.bf16.mxu0 0
    %831 = vmatpush1.bf16.msra.mxu0 0
    %832 = vmatprep.subr.bf16.mxu0 0
    %833 = vmatpush1.bf16.msra.mxu0 0
    %834 = vmatprep.subr.bf16.mxu0 0
    %835 = vmatpush1.bf16.msra.mxu0 0
    %836 = vmatprep.subr.bf16.mxu0 0
    %837 = vmatpush1.bf16.msra.mxu0 0
    %838 = vmatprep.subr.bf16.mxu0 0
    %839 = vmatpush1.bf16.msra.mxu0 0
    %840 = vmatprep.subr.bf16.mxu0 0
    %841 = vmatpush1.bf16.msra.mxu0 0
    %842 = vmatprep.subr.bf16.mxu0 0
    %843 = vmatpush1.bf16.msra.mxu0 0
    %844 = vmatprep.subr.bf16.mxu0 0
    %845 = vmatpush1.bf16.msra.mxu0 0
    %846 = vmatprep.subr.bf16.mxu0 0
    %847 = vmatpush1.bf16.msra.mxu0 0
    %848 = vmatprep.mubr.bf16.mxu0 0
    %849 = vmatmul.mubr.bf16.gmra.mrb[0].mxu0 %v251
    %v850 = vpop.f32.mrb[0].mxu0
    %v851 = vadd.f32 0.0, %v850
    %v852 = vpop.f32.mrb[0].mxu0
    %v853 = vpop.f32.mrb[0].mxu0
    %v854 = vpop.f32.mrb[0].mxu0
    %855 = vdwg.mxu0
    %v857 = vsel %vm253, %v247, 0
    %859 = vmatprep.subr.bf16.mxu0 0
    %860 = vmatpush1.bf16.msra.mxu0 %v857
    %861 = vmatprep.subr.bf16.mxu0 0
    %862 = vmatpush1.bf16.msra.mxu0 0
    %863 = vmatprep.subr.bf16.mxu0 0
    %864 = vmatpush1.bf16.msra.mxu0 0
    %865 = vmatprep.subr.bf16.mxu0 0
    %866 = vmatpush1.bf16.msra.mxu0 0
    %867 = vmatprep.subr.bf16.mxu0 0
    %868 = vmatpush1.bf16.msra.mxu0 0
    %869 = vmatprep.subr.bf16.mxu0 0
    %870 = vmatpush1.bf16.msra.mxu0 0
    %871 = vmatprep.subr.bf16.mxu0 0
    %872 = vmatpush1.bf16.msra.mxu0 0
    %873 = vmatprep.subr.bf16.mxu0 0
    %874 = vmatpush1.bf16.msra.mxu0 0
    %875 = vmatprep.subr.bf16.mxu0 0
    %876 = vmatpush1.bf16.msra.mxu0 0
    %877 = vmatprep.subr.bf16.mxu0 0
    %878 = vmatpush1.bf16.msra.mxu0 0
    %879 = vmatprep.subr.bf16.mxu0 0
    %880 = vmatpush1.bf16.msra.mxu0 0
    %881 = vmatprep.subr.bf16.mxu0 0
    %882 = vmatpush1.bf16.msra.mxu0 0
    %883 = vmatprep.subr.bf16.mxu0 0
    %884 = vmatpush1.bf16.msra.mxu0 0
    %885 = vmatprep.subr.bf16.mxu0 0
    %886 = vmatpush1.bf16.msra.mxu0 0
    %887 = vmatprep.subr.bf16.mxu0 0
    %888 = vmatpush1.bf16.msra.mxu0 0
    %889 = vmatprep.subr.bf16.mxu0 0
    %890 = vmatpush1.bf16.msra.mxu0 0
    %891 = vmatprep.mubr.bf16.mxu0 0
    %892 = vmatmul.mubr.bf16.gmra.mrb[0].mxu0 %v251
    %v893 = vpop.f32.mrb[0].mxu0
    %v894 = vadd.f32 0.0, %v893
    %v895 = vpop.f32.mrb[0].mxu0
    %v896 = vpop.f32.mrb[0].mxu0
    %v897 = vpop.f32.mrb[0].mxu0
    %898 = vdwg.mxu0
    %v900 = vsel %vm253, %v248, 0
    %902 = vmatprep.subr.bf16.mxu0 0
    %903 = vmatpush1.bf16.msra.mxu0 %v900
    %904 = vmatprep.subr.bf16.mxu0 0
    %905 = vmatpush1.bf16.msra.mxu0 0
    %906 = vmatprep.subr.bf16.mxu0 0
    %907 = vmatpush1.bf16.msra.mxu0 0
    %908 = vmatprep.subr.bf16.mxu0 0
    %909 = vmatpush1.bf16.msra.mxu0 0
    %910 = vmatprep.subr.bf16.mxu0 0
    %911 = vmatpush1.bf16.msra.mxu0 0
    %912 = vmatprep.subr.bf16.mxu0 0
    %913 = vmatpush1.bf16.msra.mxu0 0
    %914 = vmatprep.subr.bf16.mxu0 0
    %915 = vmatpush1.bf16.msra.mxu0 0
    %916 = vmatprep.subr.bf16.mxu0 0
    %917 = vmatpush1.bf16.msra.mxu0 0
    %918 = vmatprep.subr.bf16.mxu0 0
    %919 = vmatpush1.bf16.msra.mxu0 0
    %920 = vmatprep.subr.bf16.mxu0 0
    %921 = vmatpush1.bf16.msra.mxu0 0
    %922 = vmatprep.subr.bf16.mxu0 0
    %923 = vmatpush1.bf16.msra.mxu0 0
    %924 = vmatprep.subr.bf16.mxu0 0
    %925 = vmatpush1.bf16.msra.mxu0 0
    %926 = vmatprep.subr.bf16.mxu0 0
    %927 = vmatpush1.bf16.msra.mxu0 0
    %928 = vmatprep.subr.bf16.mxu0 0
    %929 = vmatpush1.bf16.msra.mxu0 0
    %930 = vmatprep.subr.bf16.mxu0 0
    %931 = vmatpush1.bf16.msra.mxu0 0
    %932 = vmatprep.subr.bf16.mxu0 0
    %933 = vmatpush1.bf16.msra.mxu0 0
    %934 = vmatprep.mubr.bf16.mxu0 0
    %935 = vmatmul.mubr.bf16.gmra.mrb[0].mxu0 %v251
    %v936 = vpop.f32.mrb[0].mxu0
    %v937 = vadd.f32 0.0, %v936
    %v938 = vpop.f32.mrb[0].mxu0
    %v939 = vpop.f32.mrb[0].mxu0
    %v940 = vpop.f32.mrb[0].mxu0
    %941 = vdwg.mxu0
    %v943 = vlaneseq
    %v944 = vshrl.u32 %v943, 7
    %v945 = vsub.s32 0, %v944
    %v946 = vrot.slane %v64, %v945
    %v948 = vadd.f32 %v292, %v946
    %v949 = vadd.f32 %v335, %v946
    %v950 = vadd.f32 %v378, %v946
    %v951 = vadd.f32 %v421, %v946
    %v952 = vadd.f32 %v464, %v946
    %v953 = vadd.f32 %v507, %v946
    %v954 = vadd.f32 %v550, %v946
    %v955 = vadd.f32 %v593, %v946
    %v956 = vadd.f32 %v636, %v946
    %v957 = vadd.f32 %v679, %v946
    %v958 = vadd.f32 %v722, %v946
    %v959 = vadd.f32 %v765, %v946
    %v960 = vadd.f32 %v808, %v946
    %v961 = vadd.f32 %v851, %v946
    %v962 = vadd.f32 %v894, %v946
    %v963 = vadd.f32 %v937, %v946
    %v964 = vmax.f32 %v948, 0.0
    %v965 = vmax.f32 %v949, 0.0
    %v966 = vmax.f32 %v950, 0.0
    %v967 = vmax.f32 %v951, 0.0
    %v968 = vmax.f32 %v952, 0.0
    %v969 = vmax.f32 %v953, 0.0
    %v970 = vmax.f32 %v954, 0.0
    %v971 = vmax.f32 %v955, 0.0
    %v972 = vmax.f32 %v956, 0.0
    %v973 = vmax.f32 %v957, 0.0
    %v974 = vmax.f32 %v958, 0.0
    %v975 = vmax.f32 %v959, 0.0
    %v976 = vmax.f32 %v960, 0.0
    %v977 = vmax.f32 %v961, 0.0
    %v978 = vmax.f32 %v962, 0.0
    %v979 = vmax.f32 %v963, 0.0
    %v980 = vpack.c.bf16 %v965, %v964
    %v981 = vpack.c.bf16 %v967, %v966
    %v982 = vpack.c.bf16 %v969, %v968
    %v983 = vpack.c.bf16 %v971, %v970
    %v984 = vpack.c.bf16 %v973, %v972
    %v985 = vpack.c.bf16 %v975, %v974
    %v986 = vpack.c.bf16 %v977, %v976
    %v987 = vpack.c.bf16 %v979, %v978
    %v992 = vunpack.c.l.b16 %v42
    %v993 = vunpack.c.l.b16 %v43
    %v994 = vunpack.c.l.b16 %v44
    %v995 = vunpack.c.l.b16 %v45
    %v996 = vpack.c.b16 %v993, %v992
    %v997 = vpack.c.b16 %v995, %v994
    %vm1000 = vcmask 261120
    %v1002 = vsel %vm1000, %v980, 0
    %v1005 = vsel %vm1000, %v981, 0
    %v1008 = vsel %vm1000, %v982, 0
    %v1011 = vsel %vm1000, %v983, 0
    %v1014 = vsel %vm1000, %v984, 0
    %v1017 = vsel %vm1000, %v985, 0
    %v1020 = vsel %vm1000, %v986, 0
    %v1023 = vsel %vm1000, %v987, 0
    %1025 = vmatprep.subr.bf16.mxu0 0
    %1026 = vmatpush1.bf16.msra.mxu0 %v996
    %1027 = vmatprep.subr.bf16.mxu0 0
    %1028 = vmatpush1.bf16.msra.mxu0 %v997
    %1029 = vmatprep.subr.bf16.mxu0 0
    %1030 = vmatpush1.bf16.msra.mxu0 0
    %1031 = vmatprep.subr.bf16.mxu0 0
    %1032 = vmatpush1.bf16.msra.mxu0 0
    %1033 = vmatprep.subr.bf16.mxu0 0
    %1034 = vmatpush1.bf16.msra.mxu0 0
    %1035 = vmatprep.subr.bf16.mxu0 0
    %1036 = vmatpush1.bf16.msra.mxu0 0
    %1037 = vmatprep.subr.bf16.mxu0 0
    %1038 = vmatpush1.bf16.msra.mxu0 0
    %1039 = vmatprep.subr.bf16.mxu0 0
    %1040 = vmatpush1.bf16.msra.mxu0 0
    %1041 = vmatprep.subr.bf16.mxu0 0
    %1042 = vmatpush1.bf16.msra.mxu0 0
    %1043 = vmatprep.subr.bf16.mxu0 0
    %1044 = vmatpush1.bf16.msra.mxu0 0
    %1045 = vmatprep.subr.bf16.mxu0 0
    %1046 = vmatpush1.bf16.msra.mxu0 0
    %1047 = vmatprep.subr.bf16.mxu0 0
    %1048 = vmatpush1.bf16.msra.mxu0 0
    %1049 = vmatprep.subr.bf16.mxu0 0
    %1050 = vmatpush1.bf16.msra.mxu0 0
    %1051 = vmatprep.subr.bf16.mxu0 0
    %1052 = vmatpush1.bf16.msra.mxu0 0
    %1053 = vmatprep.subr.bf16.mxu0 0
    %1054 = vmatpush1.bf16.msra.mxu0 0
    %1055 = vmatprep.subr.bf16.mxu0 0
    %1056 = vmatpush1.bf16.msra.mxu0 0
    %1057 = vmatprep.mubr.bf16.mxu0 0
    %1058 = vmatmul.mubr.bf16.gmra.mrb[0].mxu0 %v1002
    %v1059 = vpop.f32.mrb[0].mxu0
    %v1060 = vadd.f32 0.0, %v1059
    %v1061 = vpop.f32.mrb[0].mxu0
    %v1062 = vpop.f32.mrb[0].mxu0
    %v1063 = vadd.f32 0.0, %v1062
    %v1064 = vpop.f32.mrb[0].mxu0
    %1065 = vmatprep.mubr.bf16.mxu0 0
    %1066 = vmatmul.mubr.bf16.gmra.mrb[0].mxu0 %v1005
    %v1067 = vpop.f32.mrb[0].mxu0
    %v1068 = vadd.f32 0.0, %v1067
    %v1069 = vpop.f32.mrb[0].mxu0
    %v1070 = vpop.f32.mrb[0].mxu0
    %v1071 = vadd.f32 0.0, %v1070
    %v1072 = vpop.f32.mrb[0].mxu0
    %1073 = vmatprep.mubr.bf16.mxu0 0
    %1074 = vmatmul.mubr.bf16.gmra.mrb[0].mxu0 %v1008
    %v1075 = vpop.f32.mrb[0].mxu0
    %v1076 = vadd.f32 0.0, %v1075
    %v1077 = vpop.f32.mrb[0].mxu0
    %v1078 = vpop.f32.mrb[0].mxu0
    %v1079 = vadd.f32 0.0, %v1078
    %v1080 = vpop.f32.mrb[0].mxu0
    %1081 = vmatprep.mubr.bf16.mxu0 0
    %1082 = vmatmul.mubr.bf16.gmra.mrb[0].mxu0 %v1011
    %v1083 = vpop.f32.mrb[0].mxu0
    %v1084 = vadd.f32 0.0, %v1083
    %v1085 = vpop.f32.mrb[0].mxu0
    %v1086 = vpop.f32.mrb[0].mxu0
    %v1087 = vadd.f32 0.0, %v1086
    %v1088 = vpop.f32.mrb[0].mxu0
    %1089 = vmatprep.mubr.bf16.mxu0 0
    %1090 = vmatmul.mubr.bf16.gmra.mrb[0].mxu0 %v1014
    %v1091 = vpop.f32.mrb[0].mxu0
    %v1092 = vadd.f32 0.0, %v1091
    %v1093 = vpop.f32.mrb[0].mxu0
    %v1094 = vpop.f32.mrb[0].mxu0
    %v1095 = vadd.f32 0.0, %v1094
    %v1096 = vpop.f32.mrb[0].mxu0
    %1097 = vmatprep.mubr.bf16.mxu0 0
    %1098 = vmatmul.mubr.bf16.gmra.mrb[0].mxu0 %v1017
    %v1099 = vpop.f32.mrb[0].mxu0
    %v1100 = vadd.f32 0.0, %v1099
    %v1101 = vpop.f32.mrb[0].mxu0
    %v1102 = vpop.f32.mrb[0].mxu0
    %v1103 = vadd.f32 0.0, %v1102
    %v1104 = vpop.f32.mrb[0].mxu0
    %1105 = vmatprep.mubr.bf16.mxu0 0
    %1106 = vmatmul.mubr.bf16.gmra.mrb[0].mxu0 %v1020
    %v1107 = vpop.f32.mrb[0].mxu0
    %v1108 = vadd.f32 0.0, %v1107
    %v1109 = vpop.f32.mrb[0].mxu0
    %v1110 = vpop.f32.mrb[0].mxu0
    %v1111 = vadd.f32 0.0, %v1110
    %v1112 = vpop.f32.mrb[0].mxu0
    %1113 = vmatprep.mubr.bf16.mxu0 0
    %1114 = vmatmul.mubr.bf16.gmra.mrb[0].mxu0 %v1023
    %v1115 = vpop.f32.mrb[0].mxu0
    %v1116 = vadd.f32 0.0, %v1115
    %v1117 = vpop.f32.mrb[0].mxu0
    %v1118 = vpop.f32.mrb[0].mxu0
    %v1119 = vadd.f32 0.0, %v1118
    %v1120 = vpop.f32.mrb[0].mxu0
    %1121 = vdwg.mxu0
    %v1122 = vpack.c.bf16 %v1060, %v1060
    %v1123 = vpack.c.bf16 %v1063, %v1063
    %v1124 = vpack.c.bf16 %v1068, %v1068
    %v1125 = vpack.c.bf16 %v1071, %v1071
    %v1126 = vpack.c.bf16 %v1076, %v1076
    %v1127 = vpack.c.bf16 %v1079, %v1079
    %v1128 = vpack.c.bf16 %v1084, %v1084
    %v1129 = vpack.c.bf16 %v1087, %v1087
    %v1130 = vpack.c.bf16 %v1092, %v1092
    %v1131 = vpack.c.bf16 %v1095, %v1095
    %v1132 = vpack.c.bf16 %v1100, %v1100
    %v1133 = vpack.c.bf16 %v1103, %v1103
    %v1134 = vpack.c.bf16 %v1108, %v1108
    %v1135 = vpack.c.bf16 %v1111, %v1111
    %v1136 = vpack.c.bf16 %v1116, %v1116
    %v1137 = vpack.c.bf16 %v1119, %v1119
    %v1139 = vsel %vm253, %v1122, 0
    %1141 = vmatprep.subr.bf16.mxu0 0
    %1142 = vmatpush1.bf16.msra.mxu0 %v1139
    %1143 = vmatprep.subr.bf16.mxu0 0
    %1144 = vmatpush1.bf16.msra.mxu0 0
    %1145 = vmatprep.subr.bf16.mxu0 0
    %1146 = vmatpush1.bf16.msra.mxu0 0
    %1147 = vmatprep.subr.bf16.mxu0 0
    %1148 = vmatpush1.bf16.msra.mxu0 0
    %1149 = vmatprep.subr.bf16.mxu0 0
    %1150 = vmatpush1.bf16.msra.mxu0 0
    %1151 = vmatprep.subr.bf16.mxu0 0
    %1152 = vmatpush1.bf16.msra.mxu0 0
    %1153 = vmatprep.subr.bf16.mxu0 0
    %1154 = vmatpush1.bf16.msra.mxu0 0
    %1155 = vmatprep.subr.bf16.mxu0 0
    %1156 = vmatpush1.bf16.msra.mxu0 0
    %1157 = vmatprep.subr.bf16.mxu0 0
    %1158 = vmatpush1.bf16.msra.mxu0 0
    %1159 = vmatprep.subr.bf16.mxu0 0
    %1160 = vmatpush1.bf16.msra.mxu0 0
    %1161 = vmatprep.subr.bf16.mxu0 0
    %1162 = vmatpush1.bf16.msra.mxu0 0
    %1163 = vmatprep.subr.bf16.mxu0 0
    %1164 = vmatpush1.bf16.msra.mxu0 0
    %1165 = vmatprep.subr.bf16.mxu0 0
    %1166 = vmatpush1.bf16.msra.mxu0 0
    %1167 = vmatprep.subr.bf16.mxu0 0
    %1168 = vmatpush1.bf16.msra.mxu0 0
    %1169 = vmatprep.subr.bf16.mxu0 0
    %1170 = vmatpush1.bf16.msra.mxu0 0
    %1171 = vmatprep.subr.bf16.mxu0 0
    %1172 = vmatpush1.bf16.msra.mxu0 0
    %1173 = vmatprep.mubr.bf16.mxu0 0
    %1174 = vmatmul.mubr.bf16.gmra.mrb[0].mxu0 %v251
    %v1175 = vpop.f32.mrb[0].mxu0
    %v1176 = vadd.f32 0.0, %v1175
    %v1177 = vpop.f32.mrb[0].mxu0
    %v1178 = vpop.f32.mrb[0].mxu0
    %v1179 = vpop.f32.mrb[0].mxu0
    %1180 = vdwg.mxu0
    %v1182 = vsel %vm253, %v1123, 0
    %1184 = vmatprep.subr.bf16.mxu0 0
    %1185 = vmatpush1.bf16.msra.mxu0 %v1182
    %1186 = vmatprep.subr.bf16.mxu0 0
    %1187 = vmatpush1.bf16.msra.mxu0 0
    %1188 = vmatprep.subr.bf16.mxu0 0
    %1189 = vmatpush1.bf16.msra.mxu0 0
    %1190 = vmatprep.subr.bf16.mxu0 0
    %1191 = vmatpush1.bf16.msra.mxu0 0
    %1192 = vmatprep.subr.bf16.mxu0 0
    %1193 = vmatpush1.bf16.msra.mxu0 0
    %1194 = vmatprep.subr.bf16.mxu0 0
    %1195 = vmatpush1.bf16.msra.mxu0 0
    %1196 = vmatprep.subr.bf16.mxu0 0
    %1197 = vmatpush1.bf16.msra.mxu0 0
    %1198 = vmatprep.subr.bf16.mxu0 0
    %1199 = vmatpush1.bf16.msra.mxu0 0
    %1200 = vmatprep.subr.bf16.mxu0 0
    %1201 = vmatpush1.bf16.msra.mxu0 0
    %1202 = vmatprep.subr.bf16.mxu0 0
    %1203 = vmatpush1.bf16.msra.mxu0 0
    %1204 = vmatprep.subr.bf16.mxu0 0
    %1205 = vmatpush1.bf16.msra.mxu0 0
    %1206 = vmatprep.subr.bf16.mxu0 0
    %1207 = vmatpush1.bf16.msra.mxu0 0
    %1208 = vmatprep.subr.bf16.mxu0 0
    %1209 = vmatpush1.bf16.msra.mxu0 0
    %1210 = vmatprep.subr.bf16.mxu0 0
    %1211 = vmatpush1.bf16.msra.mxu0 0
    %1212 = vmatprep.subr.bf16.mxu0 0
    %1213 = vmatpush1.bf16.msra.mxu0 0
    %1214 = vmatprep.subr.bf16.mxu0 0
    %1215 = vmatpush1.bf16.msra.mxu0 0
    %1216 = vmatprep.mubr.bf16.mxu0 0
    %1217 = vmatmul.mubr.bf16.gmra.mrb[0].mxu0 %v251
    %v1218 = vpop.f32.mrb[0].mxu0
    %v1219 = vadd.f32 0.0, %v1218
    %v1220 = vpop.f32.mrb[0].mxu0
    %v1221 = vpop.f32.mrb[0].mxu0
    %v1222 = vpop.f32.mrb[0].mxu0
    %1223 = vdwg.mxu0
    %v1225 = vsel %vm253, %v1124, 0
    %1227 = vmatprep.subr.bf16.mxu0 0
    %1228 = vmatpush1.bf16.msra.mxu0 %v1225
    %1229 = vmatprep.subr.bf16.mxu0 0
    %1230 = vmatpush1.bf16.msra.mxu0 0
    %1231 = vmatprep.subr.bf16.mxu0 0
    %1232 = vmatpush1.bf16.msra.mxu0 0
    %1233 = vmatprep.subr.bf16.mxu0 0
    %1234 = vmatpush1.bf16.msra.mxu0 0
    %1235 = vmatprep.subr.bf16.mxu0 0
    %1236 = vmatpush1.bf16.msra.mxu0 0
    %1237 = vmatprep.subr.bf16.mxu0 0
    %1238 = vmatpush1.bf16.msra.mxu0 0
    %1239 = vmatprep.subr.bf16.mxu0 0
    %1240 = vmatpush1.bf16.msra.mxu0 0
    %1241 = vmatprep.subr.bf16.mxu0 0
    %1242 = vmatpush1.bf16.msra.mxu0 0
    %1243 = vmatprep.subr.bf16.mxu0 0
    %1244 = vmatpush1.bf16.msra.mxu0 0
    %1245 = vmatprep.subr.bf16.mxu0 0
    %1246 = vmatpush1.bf16.msra.mxu0 0
    %1247 = vmatprep.subr.bf16.mxu0 0
    %1248 = vmatpush1.bf16.msra.mxu0 0
    %1249 = vmatprep.subr.bf16.mxu0 0
    %1250 = vmatpush1.bf16.msra.mxu0 0
    %1251 = vmatprep.subr.bf16.mxu0 0
    %1252 = vmatpush1.bf16.msra.mxu0 0
    %1253 = vmatprep.subr.bf16.mxu0 0
    %1254 = vmatpush1.bf16.msra.mxu0 0
    %1255 = vmatprep.subr.bf16.mxu0 0
    %1256 = vmatpush1.bf16.msra.mxu0 0
    %1257 = vmatprep.subr.bf16.mxu0 0
    %1258 = vmatpush1.bf16.msra.mxu0 0
    %1259 = vmatprep.mubr.bf16.mxu0 0
    %1260 = vmatmul.mubr.bf16.gmra.mrb[0].mxu0 %v251
    %v1261 = vpop.f32.mrb[0].mxu0
    %v1262 = vadd.f32 0.0, %v1261
    %v1263 = vpop.f32.mrb[0].mxu0
    %v1264 = vpop.f32.mrb[0].mxu0
    %v1265 = vpop.f32.mrb[0].mxu0
    %1266 = vdwg.mxu0
    %v1268 = vsel %vm253, %v1125, 0
    %1270 = vmatprep.subr.bf16.mxu0 0
    %1271 = vmatpush1.bf16.msra.mxu0 %v1268
    %1272 = vmatprep.subr.bf16.mxu0 0
    %1273 = vmatpush1.bf16.msra.mxu0 0
    %1274 = vmatprep.subr.bf16.mxu0 0
    %1275 = vmatpush1.bf16.msra.mxu0 0
    %1276 = vmatprep.subr.bf16.mxu0 0
    %1277 = vmatpush1.bf16.msra.mxu0 0
    %1278 = vmatprep.subr.bf16.mxu0 0
    %1279 = vmatpush1.bf16.msra.mxu0 0
    %1280 = vmatprep.subr.bf16.mxu0 0
    %1281 = vmatpush1.bf16.msra.mxu0 0
    %1282 = vmatprep.subr.bf16.mxu0 0
    %1283 = vmatpush1.bf16.msra.mxu0 0
    %1284 = vmatprep.subr.bf16.mxu0 0
    %1285 = vmatpush1.bf16.msra.mxu0 0
    %1286 = vmatprep.subr.bf16.mxu0 0
    %1287 = vmatpush1.bf16.msra.mxu0 0
    %1288 = vmatprep.subr.bf16.mxu0 0
    %1289 = vmatpush1.bf16.msra.mxu0 0
    %1290 = vmatprep.subr.bf16.mxu0 0
    %1291 = vmatpush1.bf16.msra.mxu0 0
    %1292 = vmatprep.subr.bf16.mxu0 0
    %1293 = vmatpush1.bf16.msra.mxu0 0
    %1294 = vmatprep.subr.bf16.mxu0 0
    %1295 = vmatpush1.bf16.msra.mxu0 0
    %1296 = vmatprep.subr.bf16.mxu0 0
    %1297 = vmatpush1.bf16.msra.mxu0 0
    %1298 = vmatprep.subr.bf16.mxu0 0
    %1299 = vmatpush1.bf16.msra.mxu0 0
    %1300 = vmatprep.subr.bf16.mxu0 0
    %1301 = vmatpush1.bf16.msra.mxu0 0
    %1302 = vmatprep.mubr.bf16.mxu0 0
    %1303 = vmatmul.mubr.bf16.gmra.mrb[0].mxu0 %v251
    %v1304 = vpop.f32.mrb[0].mxu0
    %v1305 = vadd.f32 0.0, %v1304
    %v1306 = vpop.f32.mrb[0].mxu0
    %v1307 = vpop.f32.mrb[0].mxu0
    %v1308 = vpop.f32.mrb[0].mxu0
    %1309 = vdwg.mxu0
    %v1311 = vsel %vm253, %v1126, 0
    %1313 = vmatprep.subr.bf16.mxu0 0
    %1314 = vmatpush1.bf16.msra.mxu0 %v1311
    %1315 = vmatprep.subr.bf16.mxu0 0
    %1316 = vmatpush1.bf16.msra.mxu0 0
    %1317 = vmatprep.subr.bf16.mxu0 0
    %1318 = vmatpush1.bf16.msra.mxu0 0
    %1319 = vmatprep.subr.bf16.mxu0 0
    %1320 = vmatpush1.bf16.msra.mxu0 0
    %1321 = vmatprep.subr.bf16.mxu0 0
    %1322 = vmatpush1.bf16.msra.mxu0 0
    %1323 = vmatprep.subr.bf16.mxu0 0
    %1324 = vmatpush1.bf16.msra.mxu0 0
    %1325 = vmatprep.subr.bf16.mxu0 0
    %1326 = vmatpush1.bf16.msra.mxu0 0
    %1327 = vmatprep.subr.bf16.mxu0 0
    %1328 = vmatpush1.bf16.msra.mxu0 0
    %1329 = vmatprep.subr.bf16.mxu0 0
    %1330 = vmatpush1.bf16.msra.mxu0 0
    %1331 = vmatprep.subr.bf16.mxu0 0
    %1332 = vmatpush1.bf16.msra.mxu0 0
    %1333 = vmatprep.subr.bf16.mxu0 0
    %1334 = vmatpush1.bf16.msra.mxu0 0
    %1335 = vmatprep.subr.bf16.mxu0 0
    %1336 = vmatpush1.bf16.msra.mxu0 0
    %1337 = vmatprep.subr.bf16.mxu0 0
    %1338 = vmatpush1.bf16.msra.mxu0 0
    %1339 = vmatprep.subr.bf16.mxu0 0
    %1340 = vmatpush1.bf16.msra.mxu0 0
    %1341 = vmatprep.subr.bf16.mxu0 0
    %1342 = vmatpush1.bf16.msra.mxu0 0
    %1343 = vmatprep.subr.bf16.mxu0 0
    %1344 = vmatpush1.bf16.msra.mxu0 0
    %1345 = vmatprep.mubr.bf16.mxu0 0
    %1346 = vmatmul.mubr.bf16.gmra.mrb[0].mxu0 %v251
    %v1347 = vpop.f32.mrb[0].mxu0
    %v1348 = vadd.f32 0.0, %v1347
    %v1349 = vpop.f32.mrb[0].mxu0
    %v1350 = vpop.f32.mrb[0].mxu0
    %v1351 = vpop.f32.mrb[0].mxu0
    %1352 = vdwg.mxu0
    %v1354 = vsel %vm253, %v1127, 0
    %1356 = vmatprep.subr.bf16.mxu0 0
    %1357 = vmatpush1.bf16.msra.mxu0 %v1354
    %1358 = vmatprep.subr.bf16.mxu0 0
    %1359 = vmatpush1.bf16.msra.mxu0 0
    %1360 = vmatprep.subr.bf16.mxu0 0
    %1361 = vmatpush1.bf16.msra.mxu0 0
    %1362 = vmatprep.subr.bf16.mxu0 0
    %1363 = vmatpush1.bf16.msra.mxu0 0
    %1364 = vmatprep.subr.bf16.mxu0 0
    %1365 = vmatpush1.bf16.msra.mxu0 0
    %1366 = vmatprep.subr.bf16.mxu0 0
    %1367 = vmatpush1.bf16.msra.mxu0 0
    %1368 = vmatprep.subr.bf16.mxu0 0
    %1369 = vmatpush1.bf16.msra.mxu0 0
    %1370 = vmatprep.subr.bf16.mxu0 0
    %1371 = vmatpush1.bf16.msra.mxu0 0
    %1372 = vmatprep.subr.bf16.mxu0 0
    %1373 = vmatpush1.bf16.msra.mxu0 0
    %1374 = vmatprep.subr.bf16.mxu0 0
    %1375 = vmatpush1.bf16.msra.mxu0 0
    %1376 = vmatprep.subr.bf16.mxu0 0
    %1377 = vmatpush1.bf16.msra.mxu0 0
    %1378 = vmatprep.subr.bf16.mxu0 0
    %1379 = vmatpush1.bf16.msra.mxu0 0
    %1380 = vmatprep.subr.bf16.mxu0 0
    %1381 = vmatpush1.bf16.msra.mxu0 0
    %1382 = vmatprep.subr.bf16.mxu0 0
    %1383 = vmatpush1.bf16.msra.mxu0 0
    %1384 = vmatprep.subr.bf16.mxu0 0
    %1385 = vmatpush1.bf16.msra.mxu0 0
    %1386 = vmatprep.subr.bf16.mxu0 0
    %1387 = vmatpush1.bf16.msra.mxu0 0
    %1388 = vmatprep.mubr.bf16.mxu0 0
    %1389 = vmatmul.mubr.bf16.gmra.mrb[0].mxu0 %v251
    %v1390 = vpop.f32.mrb[0].mxu0
    %v1391 = vadd.f32 0.0, %v1390
    %v1392 = vpop.f32.mrb[0].mxu0
    %v1393 = vpop.f32.mrb[0].mxu0
    %v1394 = vpop.f32.mrb[0].mxu0
    %1395 = vdwg.mxu0
    %v1397 = vsel %vm253, %v1128, 0
    %1399 = vmatprep.subr.bf16.mxu0 0
    %1400 = vmatpush1.bf16.msra.mxu0 %v1397
    %1401 = vmatprep.subr.bf16.mxu0 0
    %1402 = vmatpush1.bf16.msra.mxu0 0
    %1403 = vmatprep.subr.bf16.mxu0 0
    %1404 = vmatpush1.bf16.msra.mxu0 0
    %1405 = vmatprep.subr.bf16.mxu0 0
    %1406 = vmatpush1.bf16.msra.mxu0 0
    %1407 = vmatprep.subr.bf16.mxu0 0
    %1408 = vmatpush1.bf16.msra.mxu0 0
    %1409 = vmatprep.subr.bf16.mxu0 0
    %1410 = vmatpush1.bf16.msra.mxu0 0
    %1411 = vmatprep.subr.bf16.mxu0 0
    %1412 = vmatpush1.bf16.msra.mxu0 0
    %1413 = vmatprep.subr.bf16.mxu0 0
    %1414 = vmatpush1.bf16.msra.mxu0 0
    %1415 = vmatprep.subr.bf16.mxu0 0
    %1416 = vmatpush1.bf16.msra.mxu0 0
    %1417 = vmatprep.subr.bf16.mxu0 0
    %1418 = vmatpush1.bf16.msra.mxu0 0
    %1419 = vmatprep.subr.bf16.mxu0 0
    %1420 = vmatpush1.bf16.msra.mxu0 0
    %1421 = vmatprep.subr.bf16.mxu0 0
    %1422 = vmatpush1.bf16.msra.mxu0 0
    %1423 = vmatprep.subr.bf16.mxu0 0
    %1424 = vmatpush1.bf16.msra.mxu0 0
    %1425 = vmatprep.subr.bf16.mxu0 0
    %1426 = vmatpush1.bf16.msra.mxu0 0
    %1427 = vmatprep.subr.bf16.mxu0 0
    %1428 = vmatpush1.bf16.msra.mxu0 0
    %1429 = vmatprep.subr.bf16.mxu0 0
    %1430 = vmatpush1.bf16.msra.mxu0 0
    %1431 = vmatprep.mubr.bf16.mxu0 0
    %1432 = vmatmul.mubr.bf16.gmra.mrb[0].mxu0 %v251
    %v1433 = vpop.f32.mrb[0].mxu0
    %v1434 = vadd.f32 0.0, %v1433
    %v1435 = vpop.f32.mrb[0].mxu0
    %v1436 = vpop.f32.mrb[0].mxu0
    %v1437 = vpop.f32.mrb[0].mxu0
    %1438 = vdwg.mxu0
    %v1440 = vsel %vm253, %v1129, 0
    %1442 = vmatprep.subr.bf16.mxu0 0
    %1443 = vmatpush1.bf16.msra.mxu0 %v1440
    %1444 = vmatprep.subr.bf16.mxu0 0
    %1445 = vmatpush1.bf16.msra.mxu0 0
    %1446 = vmatprep.subr.bf16.mxu0 0
    %1447 = vmatpush1.bf16.msra.mxu0 0
    %1448 = vmatprep.subr.bf16.mxu0 0
    %1449 = vmatpush1.bf16.msra.mxu0 0
    %1450 = vmatprep.subr.bf16.mxu0 0
    %1451 = vmatpush1.bf16.msra.mxu0 0
    %1452 = vmatprep.subr.bf16.mxu0 0
    %1453 = vmatpush1.bf16.msra.mxu0 0
    %1454 = vmatprep.subr.bf16.mxu0 0
    %1455 = vmatpush1.bf16.msra.mxu0 0
    %1456 = vmatprep.subr.bf16.mxu0 0
    %1457 = vmatpush1.bf16.msra.mxu0 0
    %1458 = vmatprep.subr.bf16.mxu0 0
    %1459 = vmatpush1.bf16.msra.mxu0 0
    %1460 = vmatprep.subr.bf16.mxu0 0
    %1461 = vmatpush1.bf16.msra.mxu0 0
    %1462 = vmatprep.subr.bf16.mxu0 0
    %1463 = vmatpush1.bf16.msra.mxu0 0
    %1464 = vmatprep.subr.bf16.mxu0 0
    %1465 = vmatpush1.bf16.msra.mxu0 0
    %1466 = vmatprep.subr.bf16.mxu0 0
    %1467 = vmatpush1.bf16.msra.mxu0 0
    %1468 = vmatprep.subr.bf16.mxu0 0
    %1469 = vmatpush1.bf16.msra.mxu0 0
    %1470 = vmatprep.subr.bf16.mxu0 0
    %1471 = vmatpush1.bf16.msra.mxu0 0
    %1472 = vmatprep.subr.bf16.mxu0 0
    %1473 = vmatpush1.bf16.msra.mxu0 0
    %1474 = vmatprep.mubr.bf16.mxu0 0
    %1475 = vmatmul.mubr.bf16.gmra.mrb[0].mxu0 %v251
    %v1476 = vpop.f32.mrb[0].mxu0
    %v1477 = vadd.f32 0.0, %v1476
    %v1478 = vpop.f32.mrb[0].mxu0
    %v1479 = vpop.f32.mrb[0].mxu0
    %v1480 = vpop.f32.mrb[0].mxu0
    %1481 = vdwg.mxu0
    %v1483 = vsel %vm253, %v1130, 0
    %1485 = vmatprep.subr.bf16.mxu0 0
    %1486 = vmatpush1.bf16.msra.mxu0 %v1483
    %1487 = vmatprep.subr.bf16.mxu0 0
    %1488 = vmatpush1.bf16.msra.mxu0 0
    %1489 = vmatprep.subr.bf16.mxu0 0
    %1490 = vmatpush1.bf16.msra.mxu0 0
    %1491 = vmatprep.subr.bf16.mxu0 0
    %1492 = vmatpush1.bf16.msra.mxu0 0
    %1493 = vmatprep.subr.bf16.mxu0 0
    %1494 = vmatpush1.bf16.msra.mxu0 0
    %1495 = vmatprep.subr.bf16.mxu0 0
    %1496 = vmatpush1.bf16.msra.mxu0 0
    %1497 = vmatprep.subr.bf16.mxu0 0
    %1498 = vmatpush1.bf16.msra.mxu0 0
    %1499 = vmatprep.subr.bf16.mxu0 0
    %1500 = vmatpush1.bf16.msra.mxu0 0
    %1501 = vmatprep.subr.bf16.mxu0 0
    %1502 = vmatpush1.bf16.msra.mxu0 0
    %1503 = vmatprep.subr.bf16.mxu0 0
    %1504 = vmatpush1.bf16.msra.mxu0 0
    %1505 = vmatprep.subr.bf16.mxu0 0
    %1506 = vmatpush1.bf16.msra.mxu0 0
    %1507 = vmatprep.subr.bf16.mxu0 0
    %1508 = vmatpush1.bf16.msra.mxu0 0
    %1509 = vmatprep.subr.bf16.mxu0 0
    %1510 = vmatpush1.bf16.msra.mxu0 0
    %1511 = vmatprep.subr.bf16.mxu0 0
    %1512 = vmatpush1.bf16.msra.mxu0 0
    %1513 = vmatprep.subr.bf16.mxu0 0
    %1514 = vmatpush1.bf16.msra.mxu0 0
    %1515 = vmatprep.subr.bf16.mxu0 0
    %1516 = vmatpush1.bf16.msra.mxu0 0
    %1517 = vmatprep.mubr.bf16.mxu0 0
    %1518 = vmatmul.mubr.bf16.gmra.mrb[0].mxu0 %v251
    %v1519 = vpop.f32.mrb[0].mxu0
    %v1520 = vadd.f32 0.0, %v1519
    %v1521 = vpop.f32.mrb[0].mxu0
    %v1522 = vpop.f32.mrb[0].mxu0
    %v1523 = vpop.f32.mrb[0].mxu0
    %1524 = vdwg.mxu0
    %v1526 = vsel %vm253, %v1131, 0
    %1528 = vmatprep.subr.bf16.mxu0 0
    %1529 = vmatpush1.bf16.msra.mxu0 %v1526
    %1530 = vmatprep.subr.bf16.mxu0 0
    %1531 = vmatpush1.bf16.msra.mxu0 0
    %1532 = vmatprep.subr.bf16.mxu0 0
    %1533 = vmatpush1.bf16.msra.mxu0 0
    %1534 = vmatprep.subr.bf16.mxu0 0
    %1535 = vmatpush1.bf16.msra.mxu0 0
    %1536 = vmatprep.subr.bf16.mxu0 0
    %1537 = vmatpush1.bf16.msra.mxu0 0
    %1538 = vmatprep.subr.bf16.mxu0 0
    %1539 = vmatpush1.bf16.msra.mxu0 0
    %1540 = vmatprep.subr.bf16.mxu0 0
    %1541 = vmatpush1.bf16.msra.mxu0 0
    %1542 = vmatprep.subr.bf16.mxu0 0
    %1543 = vmatpush1.bf16.msra.mxu0 0
    %1544 = vmatprep.subr.bf16.mxu0 0
    %1545 = vmatpush1.bf16.msra.mxu0 0
    %1546 = vmatprep.subr.bf16.mxu0 0
    %1547 = vmatpush1.bf16.msra.mxu0 0
    %1548 = vmatprep.subr.bf16.mxu0 0
    %1549 = vmatpush1.bf16.msra.mxu0 0
    %1550 = vmatprep.subr.bf16.mxu0 0
    %1551 = vmatpush1.bf16.msra.mxu0 0
    %1552 = vmatprep.subr.bf16.mxu0 0
    %1553 = vmatpush1.bf16.msra.mxu0 0
    %1554 = vmatprep.subr.bf16.mxu0 0
    %1555 = vmatpush1.bf16.msra.mxu0 0
    %1556 = vmatprep.subr.bf16.mxu0 0
    %1557 = vmatpush1.bf16.msra.mxu0 0
    %1558 = vmatprep.subr.bf16.mxu0 0
    %1559 = vmatpush1.bf16.msra.mxu0 0
    %1560 = vmatprep.mubr.bf16.mxu0 0
    %1561 = vmatmul.mubr.bf16.gmra.mrb[0].mxu0 %v251
    %v1562 = vpop.f32.mrb[0].mxu0
    %v1563 = vadd.f32 0.0, %v1562
    %v1564 = vpop.f32.mrb[0].mxu0
    %v1565 = vpop.f32.mrb[0].mxu0
    %v1566 = vpop.f32.mrb[0].mxu0
    %1567 = vdwg.mxu0
    %v1569 = vsel %vm253, %v1132, 0
    %1571 = vmatprep.subr.bf16.mxu0 0
    %1572 = vmatpush1.bf16.msra.mxu0 %v1569
    %1573 = vmatprep.subr.bf16.mxu0 0
    %1574 = vmatpush1.bf16.msra.mxu0 0
    %1575 = vmatprep.subr.bf16.mxu0 0
    %1576 = vmatpush1.bf16.msra.mxu0 0
    %1577 = vmatprep.subr.bf16.mxu0 0
    %1578 = vmatpush1.bf16.msra.mxu0 0
    %1579 = vmatprep.subr.bf16.mxu0 0
    %1580 = vmatpush1.bf16.msra.mxu0 0
    %1581 = vmatprep.subr.bf16.mxu0 0
    %1582 = vmatpush1.bf16.msra.mxu0 0
    %1583 = vmatprep.subr.bf16.mxu0 0
    %1584 = vmatpush1.bf16.msra.mxu0 0
    %1585 = vmatprep.subr.bf16.mxu0 0
    %1586 = vmatpush1.bf16.msra.mxu0 0
    %1587 = vmatprep.subr.bf16.mxu0 0
    %1588 = vmatpush1.bf16.msra.mxu0 0
    %1589 = vmatprep.subr.bf16.mxu0 0
    %1590 = vmatpush1.bf16.msra.mxu0 0
    %1591 = vmatprep.subr.bf16.mxu0 0
    %1592 = vmatpush1.bf16.msra.mxu0 0
    %1593 = vmatprep.subr.bf16.mxu0 0
    %1594 = vmatpush1.bf16.msra.mxu0 0
    %1595 = vmatprep.subr.bf16.mxu0 0
    %1596 = vmatpush1.bf16.msra.mxu0 0
    %1597 = vmatprep.subr.bf16.mxu0 0
    %1598 = vmatpush1.bf16.msra.mxu0 0
    %1599 = vmatprep.subr.bf16.mxu0 0
    %1600 = vmatpush1.bf16.msra.mxu0 0
    %1601 = vmatprep.subr.bf16.mxu0 0
    %1602 = vmatpush1.bf16.msra.mxu0 0
    %1603 = vmatprep.mubr.bf16.mxu0 0
    %1604 = vmatmul.mubr.bf16.gmra.mrb[0].mxu0 %v251
    %v1605 = vpop.f32.mrb[0].mxu0
    %v1606 = vadd.f32 0.0, %v1605
    %v1607 = vpop.f32.mrb[0].mxu0
    %v1608 = vpop.f32.mrb[0].mxu0
    %v1609 = vpop.f32.mrb[0].mxu0
    %1610 = vdwg.mxu0
    %v1612 = vsel %vm253, %v1133, 0
    %1614 = vmatprep.subr.bf16.mxu0 0
    %1615 = vmatpush1.bf16.msra.mxu0 %v1612
    %1616 = vmatprep.subr.bf16.mxu0 0
    %1617 = vmatpush1.bf16.msra.mxu0 0
    %1618 = vmatprep.subr.bf16.mxu0 0
    %1619 = vmatpush1.bf16.msra.mxu0 0
    %1620 = vmatprep.subr.bf16.mxu0 0
    %1621 = vmatpush1.bf16.msra.mxu0 0
    %1622 = vmatprep.subr.bf16.mxu0 0
    %1623 = vmatpush1.bf16.msra.mxu0 0
    %1624 = vmatprep.subr.bf16.mxu0 0
    %1625 = vmatpush1.bf16.msra.mxu0 0
    %1626 = vmatprep.subr.bf16.mxu0 0
    %1627 = vmatpush1.bf16.msra.mxu0 0
    %1628 = vmatprep.subr.bf16.mxu0 0
    %1629 = vmatpush1.bf16.msra.mxu0 0
    %1630 = vmatprep.subr.bf16.mxu0 0
    %1631 = vmatpush1.bf16.msra.mxu0 0
    %1632 = vmatprep.subr.bf16.mxu0 0
    %1633 = vmatpush1.bf16.msra.mxu0 0
    %1634 = vmatprep.subr.bf16.mxu0 0
    %1635 = vmatpush1.bf16.msra.mxu0 0
    %1636 = vmatprep.subr.bf16.mxu0 0
    %1637 = vmatpush1.bf16.msra.mxu0 0
    %1638 = vmatprep.subr.bf16.mxu0 0
    %1639 = vmatpush1.bf16.msra.mxu0 0
    %1640 = vmatprep.subr.bf16.mxu0 0
    %1641 = vmatpush1.bf16.msra.mxu0 0
    %1642 = vmatprep.subr.bf16.mxu0 0
    %1643 = vmatpush1.bf16.msra.mxu0 0
    %1644 = vmatprep.subr.bf16.mxu0 0
    %1645 = vmatpush1.bf16.msra.mxu0 0
    %1646 = vmatprep.mubr.bf16.mxu0 0
    %1647 = vmatmul.mubr.bf16.gmra.mrb[0].mxu0 %v251
    %v1648 = vpop.f32.mrb[0].mxu0
    %v1649 = vadd.f32 0.0, %v1648
    %v1650 = vpop.f32.mrb[0].mxu0
    %v1651 = vpop.f32.mrb[0].mxu0
    %v1652 = vpop.f32.mrb[0].mxu0
    %1653 = vdwg.mxu0
    %v1655 = vsel %vm253, %v1134, 0
    %1657 = vmatprep.subr.bf16.mxu0 0
    %1658 = vmatpush1.bf16.msra.mxu0 %v1655
    %1659 = vmatprep.subr.bf16.mxu0 0
    %1660 = vmatpush1.bf16.msra.mxu0 0
    %1661 = vmatprep.subr.bf16.mxu0 0
    %1662 = vmatpush1.bf16.msra.mxu0 0
    %1663 = vmatprep.subr.bf16.mxu0 0
    %1664 = vmatpush1.bf16.msra.mxu0 0
    %1665 = vmatprep.subr.bf16.mxu0 0
    %1666 = vmatpush1.bf16.msra.mxu0 0
    %1667 = vmatprep.subr.bf16.mxu0 0
    %1668 = vmatpush1.bf16.msra.mxu0 0
    %1669 = vmatprep.subr.bf16.mxu0 0
    %1670 = vmatpush1.bf16.msra.mxu0 0
    %1671 = vmatprep.subr.bf16.mxu0 0
    %1672 = vmatpush1.bf16.msra.mxu0 0
    %1673 = vmatprep.subr.bf16.mxu0 0
    %1674 = vmatpush1.bf16.msra.mxu0 0
    %1675 = vmatprep.subr.bf16.mxu0 0
    %1676 = vmatpush1.bf16.msra.mxu0 0
    %1677 = vmatprep.subr.bf16.mxu0 0
    %1678 = vmatpush1.bf16.msra.mxu0 0
    %1679 = vmatprep.subr.bf16.mxu0 0
    %1680 = vmatpush1.bf16.msra.mxu0 0
    %1681 = vmatprep.subr.bf16.mxu0 0
    %1682 = vmatpush1.bf16.msra.mxu0 0
    %1683 = vmatprep.subr.bf16.mxu0 0
    %1684 = vmatpush1.bf16.msra.mxu0 0
    %1685 = vmatprep.subr.bf16.mxu0 0
    %1686 = vmatpush1.bf16.msra.mxu0 0
    %1687 = vmatprep.subr.bf16.mxu0 0
    %1688 = vmatpush1.bf16.msra.mxu0 0
    %1689 = vmatprep.mubr.bf16.mxu0 0
    %1690 = vmatmul.mubr.bf16.gmra.mrb[0].mxu0 %v251
    %v1691 = vpop.f32.mrb[0].mxu0
    %v1692 = vadd.f32 0.0, %v1691
    %v1693 = vpop.f32.mrb[0].mxu0
    %v1694 = vpop.f32.mrb[0].mxu0
    %v1695 = vpop.f32.mrb[0].mxu0
    %1696 = vdwg.mxu0
    %v1698 = vsel %vm253, %v1135, 0
    %1700 = vmatprep.subr.bf16.mxu0 0
    %1701 = vmatpush1.bf16.msra.mxu0 %v1698
    %1702 = vmatprep.subr.bf16.mxu0 0
    %1703 = vmatpush1.bf16.msra.mxu0 0
    %1704 = vmatprep.subr.bf16.mxu0 0
    %1705 = vmatpush1.bf16.msra.mxu0 0
    %1706 = vmatprep.subr.bf16.mxu0 0
    %1707 = vmatpush1.bf16.msra.mxu0 0
    %1708 = vmatprep.subr.bf16.mxu0 0
    %1709 = vmatpush1.bf16.msra.mxu0 0
    %1710 = vmatprep.subr.bf16.mxu0 0
    %1711 = vmatpush1.bf16.msra.mxu0 0
    %1712 = vmatprep.subr.bf16.mxu0 0
    %1713 = vmatpush1.bf16.msra.mxu0 0
    %1714 = vmatprep.subr.bf16.mxu0 0
    %1715 = vmatpush1.bf16.msra.mxu0 0
    %1716 = vmatprep.subr.bf16.mxu0 0
    %1717 = vmatpush1.bf16.msra.mxu0 0
    %1718 = vmatprep.subr.bf16.mxu0 0
    %1719 = vmatpush1.bf16.msra.mxu0 0
    %1720 = vmatprep.subr.bf16.mxu0 0
    %1721 = vmatpush1.bf16.msra.mxu0 0
    %1722 = vmatprep.subr.bf16.mxu0 0
    %1723 = vmatpush1.bf16.msra.mxu0 0
    %1724 = vmatprep.subr.bf16.mxu0 0
    %1725 = vmatpush1.bf16.msra.mxu0 0
    %1726 = vmatprep.subr.bf16.mxu0 0
    %1727 = vmatpush1.bf16.msra.mxu0 0
    %1728 = vmatprep.subr.bf16.mxu0 0
    %1729 = vmatpush1.bf16.msra.mxu0 0
    %1730 = vmatprep.subr.bf16.mxu0 0
    %1731 = vmatpush1.bf16.msra.mxu0 0
    %1732 = vmatprep.mubr.bf16.mxu0 0
    %1733 = vmatmul.mubr.bf16.gmra.mrb[0].mxu0 %v251
    %v1734 = vpop.f32.mrb[0].mxu0
    %v1735 = vadd.f32 0.0, %v1734
    %v1736 = vpop.f32.mrb[0].mxu0
    %v1737 = vpop.f32.mrb[0].mxu0
    %v1738 = vpop.f32.mrb[0].mxu0
    %1739 = vdwg.mxu0
    %v1741 = vsel %vm253, %v1136, 0
    %1743 = vmatprep.subr.bf16.mxu0 0
    %1744 = vmatpush1.bf16.msra.mxu0 %v1741
    %1745 = vmatprep.subr.bf16.mxu0 0
    %1746 = vmatpush1.bf16.msra.mxu0 0
    %1747 = vmatprep.subr.bf16.mxu0 0
    %1748 = vmatpush1.bf16.msra.mxu0 0
    %1749 = vmatprep.subr.bf16.mxu0 0
    %1750 = vmatpush1.bf16.msra.mxu0 0
    %1751 = vmatprep.subr.bf16.mxu0 0
    %1752 = vmatpush1.bf16.msra.mxu0 0
    %1753 = vmatprep.subr.bf16.mxu0 0
    %1754 = vmatpush1.bf16.msra.mxu0 0
    %1755 = vmatprep.subr.bf16.mxu0 0
    %1756 = vmatpush1.bf16.msra.mxu0 0
    %1757 = vmatprep.subr.bf16.mxu0 0
    %1758 = vmatpush1.bf16.msra.mxu0 0
    %1759 = vmatprep.subr.bf16.mxu0 0
    %1760 = vmatpush1.bf16.msra.mxu0 0
    %1761 = vmatprep.subr.bf16.mxu0 0
    %1762 = vmatpush1.bf16.msra.mxu0 0
    %1763 = vmatprep.subr.bf16.mxu0 0
    %1764 = vmatpush1.bf16.msra.mxu0 0
    %1765 = vmatprep.subr.bf16.mxu0 0
    %1766 = vmatpush1.bf16.msra.mxu0 0
    %1767 = vmatprep.subr.bf16.mxu0 0
    %1768 = vmatpush1.bf16.msra.mxu0 0
    %1769 = vmatprep.subr.bf16.mxu0 0
    %1770 = vmatpush1.bf16.msra.mxu0 0
    %1771 = vmatprep.subr.bf16.mxu0 0
    %1772 = vmatpush1.bf16.msra.mxu0 0
    %1773 = vmatprep.subr.bf16.mxu0 0
    %1774 = vmatpush1.bf16.msra.mxu0 0
    %1775 = vmatprep.mubr.bf16.mxu0 0
    %1776 = vmatmul.mubr.bf16.gmra.mrb[0].mxu0 %v251
    %v1777 = vpop.f32.mrb[0].mxu0
    %v1778 = vadd.f32 0.0, %v1777
    %v1779 = vpop.f32.mrb[0].mxu0
    %v1780 = vpop.f32.mrb[0].mxu0
    %v1781 = vpop.f32.mrb[0].mxu0
    %1782 = vdwg.mxu0
    %v1784 = vsel %vm253, %v1137, 0
    %1786 = vmatprep.subr.bf16.mxu0 0
    %1787 = vmatpush1.bf16.msra.mxu0 %v1784
    %1788 = vmatprep.subr.bf16.mxu0 0
    %1789 = vmatpush1.bf16.msra.mxu0 0
    %1790 = vmatprep.subr.bf16.mxu0 0
    %1791 = vmatpush1.bf16.msra.mxu0 0
    %1792 = vmatprep.subr.bf16.mxu0 0
    %1793 = vmatpush1.bf16.msra.mxu0 0
    %1794 = vmatprep.subr.bf16.mxu0 0
    %1795 = vmatpush1.bf16.msra.mxu0 0
    %1796 = vmatprep.subr.bf16.mxu0 0
    %1797 = vmatpush1.bf16.msra.mxu0 0
    %1798 = vmatprep.subr.bf16.mxu0 0
    %1799 = vmatpush1.bf16.msra.mxu0 0
    %1800 = vmatprep.subr.bf16.mxu0 0
    %1801 = vmatpush1.bf16.msra.mxu0 0
    %1802 = vmatprep.subr.bf16.mxu0 0
    %1803 = vmatpush1.bf16.msra.mxu0 0
    %1804 = vmatprep.subr.bf16.mxu0 0
    %1805 = vmatpush1.bf16.msra.mxu0 0
    %1806 = vmatprep.subr.bf16.mxu0 0
    %1807 = vmatpush1.bf16.msra.mxu0 0
    %1808 = vmatprep.subr.bf16.mxu0 0
    %1809 = vmatpush1.bf16.msra.mxu0 0
    %1810 = vmatprep.subr.bf16.mxu0 0
    %1811 = vmatpush1.bf16.msra.mxu0 0
    %1812 = vmatprep.subr.bf16.mxu0 0
    %1813 = vmatpush1.bf16.msra.mxu0 0
    %1814 = vmatprep.subr.bf16.mxu0 0
    %1815 = vmatpush1.bf16.msra.mxu0 0
    %1816 = vmatprep.subr.bf16.mxu0 0
    %1817 = vmatpush1.bf16.msra.mxu0 0
    %1818 = vmatprep.mubr.bf16.mxu0 0
    %1819 = vmatmul.mubr.bf16.gmra.mrb[0].mxu0 %v251
    %v1820 = vpop.f32.mrb[0].mxu0
    %v1821 = vadd.f32 0.0, %v1820
    %v1822 = vpop.f32.mrb[0].mxu0
    %v1823 = vpop.f32.mrb[0].mxu0
    %v1824 = vpop.f32.mrb[0].mxu0
    %1825 = vdwg.mxu0
    %v1827 = vlaneseq
    %v1828 = vshrl.u32 %v1827, 7
    %v1829 = vsub.s32 0, %v1828
    %v1830 = vrot.slane %v58, %v1829
    %v1832 = vadd.f32 %v1176, %v1830
    %v1833 = vadd.f32 %v1219, %v1830
    %v1834 = vadd.f32 %v1262, %v1830
    %v1835 = vadd.f32 %v1305, %v1830
    %v1836 = vadd.f32 %v1348, %v1830
    %v1837 = vadd.f32 %v1391, %v1830
    %v1838 = vadd.f32 %v1434, %v1830
    %v1839 = vadd.f32 %v1477, %v1830
    %v1840 = vadd.f32 %v1520, %v1830
    %v1841 = vadd.f32 %v1563, %v1830
    %v1842 = vadd.f32 %v1606, %v1830
    %v1843 = vadd.f32 %v1649, %v1830
    %v1844 = vadd.f32 %v1692, %v1830
    %v1845 = vadd.f32 %v1735, %v1830
    %v1846 = vadd.f32 %v1778, %v1830
    %v1847 = vadd.f32 %v1821, %v1830
    %v1848 = vmax.f32 %v1832, 0.0
    %v1849 = vmax.f32 %v1833, 0.0
    %v1850 = vmax.f32 %v1834, 0.0
    %v1851 = vmax.f32 %v1835, 0.0
    %v1852 = vmax.f32 %v1836, 0.0
    %v1853 = vmax.f32 %v1837, 0.0
    %v1854 = vmax.f32 %v1838, 0.0
    %v1855 = vmax.f32 %v1839, 0.0
    %v1856 = vmax.f32 %v1840, 0.0
    %v1857 = vmax.f32 %v1841, 0.0
    %v1858 = vmax.f32 %v1842, 0.0
    %v1859 = vmax.f32 %v1843, 0.0
    %v1860 = vmax.f32 %v1844, 0.0
    %v1861 = vmax.f32 %v1845, 0.0
    %v1862 = vmax.f32 %v1846, 0.0
    %v1863 = vmax.f32 %v1847, 0.0
    %v1864 = vpack.c.bf16 %v1849, %v1848
    %v1865 = vpack.c.bf16 %v1851, %v1850
    %v1866 = vpack.c.bf16 %v1853, %v1852
    %v1867 = vpack.c.bf16 %v1855, %v1854
    %v1868 = vpack.c.bf16 %v1857, %v1856
    %v1869 = vpack.c.bf16 %v1859, %v1858
    %v1870 = vpack.c.bf16 %v1861, %v1860
    %v1871 = vpack.c.bf16 %v1863, %v1862
    %v1876 = vunpack.c.l.b16 %v46
    %v1877 = vunpack.c.l.b16 %v47
    %v1878 = vunpack.c.l.b16 %v48
    %v1879 = vunpack.c.l.b16 %v49
    %v1880 = vpack.c.b16 %v1877, %v1876
    %v1881 = vpack.c.b16 %v1879, %v1878
    %v1885 = vsel %vm1000, %v1864, 0
    %v1888 = vsel %vm1000, %v1865, 0
    %v1891 = vsel %vm1000, %v1866, 0
    %v1894 = vsel %vm1000, %v1867, 0
    %v1897 = vsel %vm1000, %v1868, 0
    %v1900 = vsel %vm1000, %v1869, 0
    %v1903 = vsel %vm1000, %v1870, 0
    %v1906 = vsel %vm1000, %v1871, 0
    %1908 = vmatprep.subr.bf16.mxu0 0
    %1909 = vmatpush1.bf16.msra.mxu0 %v1880
    %1910 = vmatprep.subr.bf16.mxu0 0
    %1911 = vmatpush1.bf16.msra.mxu0 %v1881
    %1912 = vmatprep.subr.bf16.mxu0 0
    %1913 = vmatpush1.bf16.msra.mxu0 0
    %1914 = vmatprep.subr.bf16.mxu0 0
    %1915 = vmatpush1.bf16.msra.mxu0 0
    %1916 = vmatprep.subr.bf16.mxu0 0
    %1917 = vmatpush1.bf16.msra.mxu0 0
    %1918 = vmatprep.subr.bf16.mxu0 0
    %1919 = vmatpush1.bf16.msra.mxu0 0
    %1920 = vmatprep.subr.bf16.mxu0 0
    %1921 = vmatpush1.bf16.msra.mxu0 0
    %1922 = vmatprep.subr.bf16.mxu0 0
    %1923 = vmatpush1.bf16.msra.mxu0 0
    %1924 = vmatprep.subr.bf16.mxu0 0
    %1925 = vmatpush1.bf16.msra.mxu0 0
    %1926 = vmatprep.subr.bf16.mxu0 0
    %1927 = vmatpush1.bf16.msra.mxu0 0
    %1928 = vmatprep.subr.bf16.mxu0 0
    %1929 = vmatpush1.bf16.msra.mxu0 0
    %1930 = vmatprep.subr.bf16.mxu0 0
    %1931 = vmatpush1.bf16.msra.mxu0 0
    %1932 = vmatprep.subr.bf16.mxu0 0
    %1933 = vmatpush1.bf16.msra.mxu0 0
    %1934 = vmatprep.subr.bf16.mxu0 0
    %1935 = vmatpush1.bf16.msra.mxu0 0
    %1936 = vmatprep.subr.bf16.mxu0 0
    %1937 = vmatpush1.bf16.msra.mxu0 0
    %1938 = vmatprep.subr.bf16.mxu0 0
    %1939 = vmatpush1.bf16.msra.mxu0 0
    %1940 = vmatprep.mubr.bf16.mxu0 0
    %1941 = vmatmul.mubr.bf16.gmra.mrb[0].mxu0 %v1885
    %v1942 = vpop.f32.mrb[0].mxu0
    %v1943 = vadd.f32 0.0, %v1942
    %v1944 = vpop.f32.mrb[0].mxu0
    %v1945 = vpop.f32.mrb[0].mxu0
    %v1946 = vadd.f32 0.0, %v1945
    %v1947 = vpop.f32.mrb[0].mxu0
    %1948 = vmatprep.mubr.bf16.mxu0 0
    %1949 = vmatmul.mubr.bf16.gmra.mrb[0].mxu0 %v1888
    %v1950 = vpop.f32.mrb[0].mxu0
    %v1951 = vadd.f32 0.0, %v1950
    %v1952 = vpop.f32.mrb[0].mxu0
    %v1953 = vpop.f32.mrb[0].mxu0
    %v1954 = vadd.f32 0.0, %v1953
    %v1955 = vpop.f32.mrb[0].mxu0
    %1956 = vmatprep.mubr.bf16.mxu0 0
    %1957 = vmatmul.mubr.bf16.gmra.mrb[0].mxu0 %v1891
    %v1958 = vpop.f32.mrb[0].mxu0
    %v1959 = vadd.f32 0.0, %v1958
    %v1960 = vpop.f32.mrb[0].mxu0
    %v1961 = vpop.f32.mrb[0].mxu0
    %v1962 = vadd.f32 0.0, %v1961
    %v1963 = vpop.f32.mrb[0].mxu0
    %1964 = vmatprep.mubr.bf16.mxu0 0
    %1965 = vmatmul.mubr.bf16.gmra.mrb[0].mxu0 %v1894
    %v1966 = vpop.f32.mrb[0].mxu0
    %v1967 = vadd.f32 0.0, %v1966
    %v1968 = vpop.f32.mrb[0].mxu0
    %v1969 = vpop.f32.mrb[0].mxu0
    %v1970 = vadd.f32 0.0, %v1969
    %v1971 = vpop.f32.mrb[0].mxu0
    %1972 = vmatprep.mubr.bf16.mxu0 0
    %1973 = vmatmul.mubr.bf16.gmra.mrb[0].mxu0 %v1897
    %v1974 = vpop.f32.mrb[0].mxu0
    %v1975 = vadd.f32 0.0, %v1974
    %v1976 = vpop.f32.mrb[0].mxu0
    %v1977 = vpop.f32.mrb[0].mxu0
    %v1978 = vadd.f32 0.0, %v1977
    %v1979 = vpop.f32.mrb[0].mxu0
    %1980 = vmatprep.mubr.bf16.mxu0 0
    %1981 = vmatmul.mubr.bf16.gmra.mrb[0].mxu0 %v1900
    %v1982 = vpop.f32.mrb[0].mxu0
    %v1983 = vadd.f32 0.0, %v1982
    %v1984 = vpop.f32.mrb[0].mxu0
    %v1985 = vpop.f32.mrb[0].mxu0
    %v1986 = vadd.f32 0.0, %v1985
    %v1987 = vpop.f32.mrb[0].mxu0
    %1988 = vmatprep.mubr.bf16.mxu0 0
    %1989 = vmatmul.mubr.bf16.gmra.mrb[0].mxu0 %v1903
    %v1990 = vpop.f32.mrb[0].mxu0
    %v1991 = vadd.f32 0.0, %v1990
    %v1992 = vpop.f32.mrb[0].mxu0
    %v1993 = vpop.f32.mrb[0].mxu0
    %v1994 = vadd.f32 0.0, %v1993
    %v1995 = vpop.f32.mrb[0].mxu0
    %1996 = vmatprep.mubr.bf16.mxu0 0
    %1997 = vmatmul.mubr.bf16.gmra.mrb[0].mxu0 %v1906
    %v1998 = vpop.f32.mrb[0].mxu0
    %v1999 = vadd.f32 0.0, %v1998
    %v2000 = vpop.f32.mrb[0].mxu0
    %v2001 = vpop.f32.mrb[0].mxu0
    %v2002 = vadd.f32 0.0, %v2001
    %v2003 = vpop.f32.mrb[0].mxu0
    %2004 = vdwg.mxu0
    %v2005 = vpack.c.bf16 %v1943, %v1943
    %v2006 = vpack.c.bf16 %v1946, %v1946
    %v2007 = vpack.c.bf16 %v1951, %v1951
    %v2008 = vpack.c.bf16 %v1954, %v1954
    %v2009 = vpack.c.bf16 %v1959, %v1959
    %v2010 = vpack.c.bf16 %v1962, %v1962
    %v2011 = vpack.c.bf16 %v1967, %v1967
    %v2012 = vpack.c.bf16 %v1970, %v1970
    %v2013 = vpack.c.bf16 %v1975, %v1975
    %v2014 = vpack.c.bf16 %v1978, %v1978
    %v2015 = vpack.c.bf16 %v1983, %v1983
    %v2016 = vpack.c.bf16 %v1986, %v1986
    %v2017 = vpack.c.bf16 %v1991, %v1991
    %v2018 = vpack.c.bf16 %v1994, %v1994
    %v2019 = vpack.c.bf16 %v1999, %v1999
    %v2020 = vpack.c.bf16 %v2002, %v2002
    %v2022 = vsel %vm253, %v2005, 0
    %2024 = vmatprep.subr.bf16.mxu0 0
    %2025 = vmatpush1.bf16.msra.mxu0 %v2022
    %2026 = vmatprep.subr.bf16.mxu0 0
    %2027 = vmatpush1.bf16.msra.mxu0 0
    %2028 = vmatprep.subr.bf16.mxu0 0
    %2029 = vmatpush1.bf16.msra.mxu0 0
    %2030 = vmatprep.subr.bf16.mxu0 0
    %2031 = vmatpush1.bf16.msra.mxu0 0
    %2032 = vmatprep.subr.bf16.mxu0 0
    %2033 = vmatpush1.bf16.msra.mxu0 0
    %2034 = vmatprep.subr.bf16.mxu0 0
    %2035 = vmatpush1.bf16.msra.mxu0 0
    %2036 = vmatprep.subr.bf16.mxu0 0
    %2037 = vmatpush1.bf16.msra.mxu0 0
    %2038 = vmatprep.subr.bf16.mxu0 0
    %2039 = vmatpush1.bf16.msra.mxu0 0
    %2040 = vmatprep.subr.bf16.mxu0 0
    %2041 = vmatpush1.bf16.msra.mxu0 0
    %2042 = vmatprep.subr.bf16.mxu0 0
    %2043 = vmatpush1.bf16.msra.mxu0 0
    %2044 = vmatprep.subr.bf16.mxu0 0
    %2045 = vmatpush1.bf16.msra.mxu0 0
    %2046 = vmatprep.subr.bf16.mxu0 0
    %2047 = vmatpush1.bf16.msra.mxu0 0
    %2048 = vmatprep.subr.bf16.mxu0 0
    %2049 = vmatpush1.bf16.msra.mxu0 0
    %2050 = vmatprep.subr.bf16.mxu0 0
    %2051 = vmatpush1.bf16.msra.mxu0 0
    %2052 = vmatprep.subr.bf16.mxu0 0
    %2053 = vmatpush1.bf16.msra.mxu0 0
    %2054 = vmatprep.subr.bf16.mxu0 0
    %2055 = vmatpush1.bf16.msra.mxu0 0
    %2056 = vmatprep.mubr.bf16.mxu0 0
    %2057 = vmatmul.mubr.bf16.gmra.mrb[0].mxu0 %v251
    %v2058 = vpop.f32.mrb[0].mxu0
    %v2059 = vadd.f32 0.0, %v2058
    %v2060 = vpop.f32.mrb[0].mxu0
    %v2061 = vpop.f32.mrb[0].mxu0
    %v2062 = vpop.f32.mrb[0].mxu0
    %2063 = vdwg.mxu0
    %v2065 = vsel %vm253, %v2006, 0
    %2067 = vmatprep.subr.bf16.mxu0 0
    %2068 = vmatpush1.bf16.msra.mxu0 %v2065
    %2069 = vmatprep.subr.bf16.mxu0 0
    %2070 = vmatpush1.bf16.msra.mxu0 0
    %2071 = vmatprep.subr.bf16.mxu0 0
    %2072 = vmatpush1.bf16.msra.mxu0 0
    %2073 = vmatprep.subr.bf16.mxu0 0
    %2074 = vmatpush1.bf16.msra.mxu0 0
    %2075 = vmatprep.subr.bf16.mxu0 0
    %2076 = vmatpush1.bf16.msra.mxu0 0
    %2077 = vmatprep.subr.bf16.mxu0 0
    %2078 = vmatpush1.bf16.msra.mxu0 0
    %2079 = vmatprep.subr.bf16.mxu0 0
    %2080 = vmatpush1.bf16.msra.mxu0 0
    %2081 = vmatprep.subr.bf16.mxu0 0
    %2082 = vmatpush1.bf16.msra.mxu0 0
    %2083 = vmatprep.subr.bf16.mxu0 0
    %2084 = vmatpush1.bf16.msra.mxu0 0
    %2085 = vmatprep.subr.bf16.mxu0 0
    %2086 = vmatpush1.bf16.msra.mxu0 0
    %2087 = vmatprep.subr.bf16.mxu0 0
    %2088 = vmatpush1.bf16.msra.mxu0 0
    %2089 = vmatprep.subr.bf16.mxu0 0
    %2090 = vmatpush1.bf16.msra.mxu0 0
    %2091 = vmatprep.subr.bf16.mxu0 0
    %2092 = vmatpush1.bf16.msra.mxu0 0
    %2093 = vmatprep.subr.bf16.mxu0 0
    %2094 = vmatpush1.bf16.msra.mxu0 0
    %2095 = vmatprep.subr.bf16.mxu0 0
    %2096 = vmatpush1.bf16.msra.mxu0 0
    %2097 = vmatprep.subr.bf16.mxu0 0
    %2098 = vmatpush1.bf16.msra.mxu0 0
    %2099 = vmatprep.mubr.bf16.mxu0 0
    %2100 = vmatmul.mubr.bf16.gmra.mrb[0].mxu0 %v251
    %v2101 = vpop.f32.mrb[0].mxu0
    %v2102 = vadd.f32 0.0, %v2101
    %v2103 = vpop.f32.mrb[0].mxu0
    %v2104 = vpop.f32.mrb[0].mxu0
    %v2105 = vpop.f32.mrb[0].mxu0
    %2106 = vdwg.mxu0
    %v2108 = vsel %vm253, %v2007, 0
    %2110 = vmatprep.subr.bf16.mxu0 0
    %2111 = vmatpush1.bf16.msra.mxu0 %v2108
    %2112 = vmatprep.subr.bf16.mxu0 0
    %2113 = vmatpush1.bf16.msra.mxu0 0
    %2114 = vmatprep.subr.bf16.mxu0 0
    %2115 = vmatpush1.bf16.msra.mxu0 0
    %2116 = vmatprep.subr.bf16.mxu0 0
    %2117 = vmatpush1.bf16.msra.mxu0 0
    %2118 = vmatprep.subr.bf16.mxu0 0
    %2119 = vmatpush1.bf16.msra.mxu0 0
    %2120 = vmatprep.subr.bf16.mxu0 0
    %2121 = vmatpush1.bf16.msra.mxu0 0
    %2122 = vmatprep.subr.bf16.mxu0 0
    %2123 = vmatpush1.bf16.msra.mxu0 0
    %2124 = vmatprep.subr.bf16.mxu0 0
    %2125 = vmatpush1.bf16.msra.mxu0 0
    %2126 = vmatprep.subr.bf16.mxu0 0
    %2127 = vmatpush1.bf16.msra.mxu0 0
    %2128 = vmatprep.subr.bf16.mxu0 0
    %2129 = vmatpush1.bf16.msra.mxu0 0
    %2130 = vmatprep.subr.bf16.mxu0 0
    %2131 = vmatpush1.bf16.msra.mxu0 0
    %2132 = vmatprep.subr.bf16.mxu0 0
    %2133 = vmatpush1.bf16.msra.mxu0 0
    %2134 = vmatprep.subr.bf16.mxu0 0
    %2135 = vmatpush1.bf16.msra.mxu0 0
    %2136 = vmatprep.subr.bf16.mxu0 0
    %2137 = vmatpush1.bf16.msra.mxu0 0
    %2138 = vmatprep.subr.bf16.mxu0 0
    %2139 = vmatpush1.bf16.msra.mxu0 0
    %2140 = vmatprep.subr.bf16.mxu0 0
    %2141 = vmatpush1.bf16.msra.mxu0 0
    %2142 = vmatprep.mubr.bf16.mxu0 0
    %2143 = vmatmul.mubr.bf16.gmra.mrb[0].mxu0 %v251
    %v2144 = vpop.f32.mrb[0].mxu0
    %v2145 = vadd.f32 0.0, %v2144
    %v2146 = vpop.f32.mrb[0].mxu0
    %v2147 = vpop.f32.mrb[0].mxu0
    %v2148 = vpop.f32.mrb[0].mxu0
    %2149 = vdwg.mxu0
    %v2151 = vsel %vm253, %v2008, 0
    %2153 = vmatprep.subr.bf16.mxu0 0
    %2154 = vmatpush1.bf16.msra.mxu0 %v2151
    %2155 = vmatprep.subr.bf16.mxu0 0
    %2156 = vmatpush1.bf16.msra.mxu0 0
    %2157 = vmatprep.subr.bf16.mxu0 0
    %2158 = vmatpush1.bf16.msra.mxu0 0
    %2159 = vmatprep.subr.bf16.mxu0 0
    %2160 = vmatpush1.bf16.msra.mxu0 0
    %2161 = vmatprep.subr.bf16.mxu0 0
    %2162 = vmatpush1.bf16.msra.mxu0 0
    %2163 = vmatprep.subr.bf16.mxu0 0
    %2164 = vmatpush1.bf16.msra.mxu0 0
    %2165 = vmatprep.subr.bf16.mxu0 0
    %2166 = vmatpush1.bf16.msra.mxu0 0
    %2167 = vmatprep.subr.bf16.mxu0 0
    %2168 = vmatpush1.bf16.msra.mxu0 0
    %2169 = vmatprep.subr.bf16.mxu0 0
    %2170 = vmatpush1.bf16.msra.mxu0 0
    %2171 = vmatprep.subr.bf16.mxu0 0
    %2172 = vmatpush1.bf16.msra.mxu0 0
    %2173 = vmatprep.subr.bf16.mxu0 0
    %2174 = vmatpush1.bf16.msra.mxu0 0
    %2175 = vmatprep.subr.bf16.mxu0 0
    %2176 = vmatpush1.bf16.msra.mxu0 0
    %2177 = vmatprep.subr.bf16.mxu0 0
    %2178 = vmatpush1.bf16.msra.mxu0 0
    %2179 = vmatprep.subr.bf16.mxu0 0
    %2180 = vmatpush1.bf16.msra.mxu0 0
    %2181 = vmatprep.subr.bf16.mxu0 0
    %2182 = vmatpush1.bf16.msra.mxu0 0
    %2183 = vmatprep.subr.bf16.mxu0 0
    %2184 = vmatpush1.bf16.msra.mxu0 0
    %2185 = vmatprep.mubr.bf16.mxu0 0
    %2186 = vmatmul.mubr.bf16.gmra.mrb[0].mxu0 %v251
    %v2187 = vpop.f32.mrb[0].mxu0
    %v2188 = vadd.f32 0.0, %v2187
    %v2189 = vpop.f32.mrb[0].mxu0
    %v2190 = vpop.f32.mrb[0].mxu0
    %v2191 = vpop.f32.mrb[0].mxu0
    %2192 = vdwg.mxu0
    %v2194 = vsel %vm253, %v2009, 0
    %2196 = vmatprep.subr.bf16.mxu0 0
    %2197 = vmatpush1.bf16.msra.mxu0 %v2194
    %2198 = vmatprep.subr.bf16.mxu0 0
    %2199 = vmatpush1.bf16.msra.mxu0 0
    %2200 = vmatprep.subr.bf16.mxu0 0
    %2201 = vmatpush1.bf16.msra.mxu0 0
    %2202 = vmatprep.subr.bf16.mxu0 0
    %2203 = vmatpush1.bf16.msra.mxu0 0
    %2204 = vmatprep.subr.bf16.mxu0 0
    %2205 = vmatpush1.bf16.msra.mxu0 0
    %2206 = vmatprep.subr.bf16.mxu0 0
    %2207 = vmatpush1.bf16.msra.mxu0 0
    %2208 = vmatprep.subr.bf16.mxu0 0
    %2209 = vmatpush1.bf16.msra.mxu0 0
    %2210 = vmatprep.subr.bf16.mxu0 0
    %2211 = vmatpush1.bf16.msra.mxu0 0
    %2212 = vmatprep.subr.bf16.mxu0 0
    %2213 = vmatpush1.bf16.msra.mxu0 0
    %2214 = vmatprep.subr.bf16.mxu0 0
    %2215 = vmatpush1.bf16.msra.mxu0 0
    %2216 = vmatprep.subr.bf16.mxu0 0
    %2217 = vmatpush1.bf16.msra.mxu0 0
    %2218 = vmatprep.subr.bf16.mxu0 0
    %2219 = vmatpush1.bf16.msra.mxu0 0
    %2220 = vmatprep.subr.bf16.mxu0 0
    %2221 = vmatpush1.bf16.msra.mxu0 0
    %2222 = vmatprep.subr.bf16.mxu0 0
    %2223 = vmatpush1.bf16.msra.mxu0 0
    %2224 = vmatprep.subr.bf16.mxu0 0
    %2225 = vmatpush1.bf16.msra.mxu0 0
    %2226 = vmatprep.subr.bf16.mxu0 0
    %2227 = vmatpush1.bf16.msra.mxu0 0
    %2228 = vmatprep.mubr.bf16.mxu0 0
    %2229 = vmatmul.mubr.bf16.gmra.mrb[0].mxu0 %v251
    %v2230 = vpop.f32.mrb[0].mxu0
    %v2231 = vadd.f32 0.0, %v2230
    %v2232 = vpop.f32.mrb[0].mxu0
    %v2233 = vpop.f32.mrb[0].mxu0
    %v2234 = vpop.f32.mrb[0].mxu0
    %2235 = vdwg.mxu0
    %v2237 = vsel %vm253, %v2010, 0
    %2239 = vmatprep.subr.bf16.mxu0 0
    %2240 = vmatpush1.bf16.msra.mxu0 %v2237
    %2241 = vmatprep.subr.bf16.mxu0 0
    %2242 = vmatpush1.bf16.msra.mxu0 0
    %2243 = vmatprep.subr.bf16.mxu0 0
    %2244 = vmatpush1.bf16.msra.mxu0 0
    %2245 = vmatprep.subr.bf16.mxu0 0
    %2246 = vmatpush1.bf16.msra.mxu0 0
    %2247 = vmatprep.subr.bf16.mxu0 0
    %2248 = vmatpush1.bf16.msra.mxu0 0
    %2249 = vmatprep.subr.bf16.mxu0 0
    %2250 = vmatpush1.bf16.msra.mxu0 0
    %2251 = vmatprep.subr.bf16.mxu0 0
    %2252 = vmatpush1.bf16.msra.mxu0 0
    %2253 = vmatprep.subr.bf16.mxu0 0
    %2254 = vmatpush1.bf16.msra.mxu0 0
    %2255 = vmatprep.subr.bf16.mxu0 0
    %2256 = vmatpush1.bf16.msra.mxu0 0
    %2257 = vmatprep.subr.bf16.mxu0 0
    %2258 = vmatpush1.bf16.msra.mxu0 0
    %2259 = vmatprep.subr.bf16.mxu0 0
    %2260 = vmatpush1.bf16.msra.mxu0 0
    %2261 = vmatprep.subr.bf16.mxu0 0
    %2262 = vmatpush1.bf16.msra.mxu0 0
    %2263 = vmatprep.subr.bf16.mxu0 0
    %2264 = vmatpush1.bf16.msra.mxu0 0
    %2265 = vmatprep.subr.bf16.mxu0 0
    %2266 = vmatpush1.bf16.msra.mxu0 0
    %2267 = vmatprep.subr.bf16.mxu0 0
    %2268 = vmatpush1.bf16.msra.mxu0 0
    %2269 = vmatprep.subr.bf16.mxu0 0
    %2270 = vmatpush1.bf16.msra.mxu0 0
    %2271 = vmatprep.mubr.bf16.mxu0 0
    %2272 = vmatmul.mubr.bf16.gmra.mrb[0].mxu0 %v251
    %v2273 = vpop.f32.mrb[0].mxu0
    %v2274 = vadd.f32 0.0, %v2273
    %v2275 = vpop.f32.mrb[0].mxu0
    %v2276 = vpop.f32.mrb[0].mxu0
    %v2277 = vpop.f32.mrb[0].mxu0
    %2278 = vdwg.mxu0
    %v2280 = vsel %vm253, %v2011, 0
    %2282 = vmatprep.subr.bf16.mxu0 0
    %2283 = vmatpush1.bf16.msra.mxu0 %v2280
    %2284 = vmatprep.subr.bf16.mxu0 0
    %2285 = vmatpush1.bf16.msra.mxu0 0
    %2286 = vmatprep.subr.bf16.mxu0 0
    %2287 = vmatpush1.bf16.msra.mxu0 0
    %2288 = vmatprep.subr.bf16.mxu0 0
    %2289 = vmatpush1.bf16.msra.mxu0 0
    %2290 = vmatprep.subr.bf16.mxu0 0
    %2291 = vmatpush1.bf16.msra.mxu0 0
    %2292 = vmatprep.subr.bf16.mxu0 0
    %2293 = vmatpush1.bf16.msra.mxu0 0
    %2294 = vmatprep.subr.bf16.mxu0 0
    %2295 = vmatpush1.bf16.msra.mxu0 0
    %2296 = vmatprep.subr.bf16.mxu0 0
    %2297 = vmatpush1.bf16.msra.mxu0 0
    %2298 = vmatprep.subr.bf16.mxu0 0
    %2299 = vmatpush1.bf16.msra.mxu0 0
    %2300 = vmatprep.subr.bf16.mxu0 0
    %2301 = vmatpush1.bf16.msra.mxu0 0
    %2302 = vmatprep.subr.bf16.mxu0 0
    %2303 = vmatpush1.bf16.msra.mxu0 0
    %2304 = vmatprep.subr.bf16.mxu0 0
    %2305 = vmatpush1.bf16.msra.mxu0 0
    %2306 = vmatprep.subr.bf16.mxu0 0
    %2307 = vmatpush1.bf16.msra.mxu0 0
    %2308 = vmatprep.subr.bf16.mxu0 0
    %2309 = vmatpush1.bf16.msra.mxu0 0
    %2310 = vmatprep.subr.bf16.mxu0 0
    %2311 = vmatpush1.bf16.msra.mxu0 0
    %2312 = vmatprep.subr.bf16.mxu0 0
    %2313 = vmatpush1.bf16.msra.mxu0 0
    %2314 = vmatprep.mubr.bf16.mxu0 0
    %2315 = vmatmul.mubr.bf16.gmra.mrb[0].mxu0 %v251
    %v2316 = vpop.f32.mrb[0].mxu0
    %v2317 = vadd.f32 0.0, %v2316
    %v2318 = vpop.f32.mrb[0].mxu0
    %v2319 = vpop.f32.mrb[0].mxu0
    %v2320 = vpop.f32.mrb[0].mxu0
    %2321 = vdwg.mxu0
    %v2323 = vsel %vm253, %v2012, 0
    %2325 = vmatprep.subr.bf16.mxu0 0
    %2326 = vmatpush1.bf16.msra.mxu0 %v2323
    %2327 = vmatprep.subr.bf16.mxu0 0
    %2328 = vmatpush1.bf16.msra.mxu0 0
    %2329 = vmatprep.subr.bf16.mxu0 0
    %2330 = vmatpush1.bf16.msra.mxu0 0
    %2331 = vmatprep.subr.bf16.mxu0 0
    %2332 = vmatpush1.bf16.msra.mxu0 0
    %2333 = vmatprep.subr.bf16.mxu0 0
    %2334 = vmatpush1.bf16.msra.mxu0 0
    %2335 = vmatprep.subr.bf16.mxu0 0
    %2336 = vmatpush1.bf16.msra.mxu0 0
    %2337 = vmatprep.subr.bf16.mxu0 0
    %2338 = vmatpush1.bf16.msra.mxu0 0
    %2339 = vmatprep.subr.bf16.mxu0 0
    %2340 = vmatpush1.bf16.msra.mxu0 0
    %2341 = vmatprep.subr.bf16.mxu0 0
    %2342 = vmatpush1.bf16.msra.mxu0 0
    %2343 = vmatprep.subr.bf16.mxu0 0
    %2344 = vmatpush1.bf16.msra.mxu0 0
    %2345 = vmatprep.subr.bf16.mxu0 0
    %2346 = vmatpush1.bf16.msra.mxu0 0
    %2347 = vmatprep.subr.bf16.mxu0 0
    %2348 = vmatpush1.bf16.msra.mxu0 0
    %2349 = vmatprep.subr.bf16.mxu0 0
    %2350 = vmatpush1.bf16.msra.mxu0 0
    %2351 = vmatprep.subr.bf16.mxu0 0
    %2352 = vmatpush1.bf16.msra.mxu0 0
    %2353 = vmatprep.subr.bf16.mxu0 0
    %2354 = vmatpush1.bf16.msra.mxu0 0
    %2355 = vmatprep.subr.bf16.mxu0 0
    %2356 = vmatpush1.bf16.msra.mxu0 0
    %2357 = vmatprep.mubr.bf16.mxu0 0
    %2358 = vmatmul.mubr.bf16.gmra.mrb[0].mxu0 %v251
    %v2359 = vpop.f32.mrb[0].mxu0
    %v2360 = vadd.f32 0.0, %v2359
    %v2361 = vpop.f32.mrb[0].mxu0
    %v2362 = vpop.f32.mrb[0].mxu0
    %v2363 = vpop.f32.mrb[0].mxu0
    %2364 = vdwg.mxu0
    %v2366 = vsel %vm253, %v2013, 0
    %2368 = vmatprep.subr.bf16.mxu0 0
    %2369 = vmatpush1.bf16.msra.mxu0 %v2366
    %2370 = vmatprep.subr.bf16.mxu0 0
    %2371 = vmatpush1.bf16.msra.mxu0 0
    %2372 = vmatprep.subr.bf16.mxu0 0
    %2373 = vmatpush1.bf16.msra.mxu0 0
    %2374 = vmatprep.subr.bf16.mxu0 0
    %2375 = vmatpush1.bf16.msra.mxu0 0
    %2376 = vmatprep.subr.bf16.mxu0 0
    %2377 = vmatpush1.bf16.msra.mxu0 0
    %2378 = vmatprep.subr.bf16.mxu0 0
    %2379 = vmatpush1.bf16.msra.mxu0 0
    %2380 = vmatprep.subr.bf16.mxu0 0
    %2381 = vmatpush1.bf16.msra.mxu0 0
    %2382 = vmatprep.subr.bf16.mxu0 0
    %2383 = vmatpush1.bf16.msra.mxu0 0
    %2384 = vmatprep.subr.bf16.mxu0 0
    %2385 = vmatpush1.bf16.msra.mxu0 0
    %2386 = vmatprep.subr.bf16.mxu0 0
    %2387 = vmatpush1.bf16.msra.mxu0 0
    %2388 = vmatprep.subr.bf16.mxu0 0
    %2389 = vmatpush1.bf16.msra.mxu0 0
    %2390 = vmatprep.subr.bf16.mxu0 0
    %2391 = vmatpush1.bf16.msra.mxu0 0
    %2392 = vmatprep.subr.bf16.mxu0 0
    %2393 = vmatpush1.bf16.msra.mxu0 0
    %2394 = vmatprep.subr.bf16.mxu0 0
    %2395 = vmatpush1.bf16.msra.mxu0 0
    %2396 = vmatprep.subr.bf16.mxu0 0
    %2397 = vmatpush1.bf16.msra.mxu0 0
    %2398 = vmatprep.subr.bf16.mxu0 0
    %2399 = vmatpush1.bf16.msra.mxu0 0
    %2400 = vmatprep.mubr.bf16.mxu0 0
    %2401 = vmatmul.mubr.bf16.gmra.mrb[0].mxu0 %v251
    %v2402 = vpop.f32.mrb[0].mxu0
    %v2403 = vadd.f32 0.0, %v2402
    %v2404 = vpop.f32.mrb[0].mxu0
    %v2405 = vpop.f32.mrb[0].mxu0
    %v2406 = vpop.f32.mrb[0].mxu0
    %2407 = vdwg.mxu0
    %v2409 = vsel %vm253, %v2014, 0
    %2411 = vmatprep.subr.bf16.mxu0 0
    %2412 = vmatpush1.bf16.msra.mxu0 %v2409
    %2413 = vmatprep.subr.bf16.mxu0 0
    %2414 = vmatpush1.bf16.msra.mxu0 0
    %2415 = vmatprep.subr.bf16.mxu0 0
    %2416 = vmatpush1.bf16.msra.mxu0 0
    %2417 = vmatprep.subr.bf16.mxu0 0
    %2418 = vmatpush1.bf16.msra.mxu0 0
    %2419 = vmatprep.subr.bf16.mxu0 0
    %2420 = vmatpush1.bf16.msra.mxu0 0
    %2421 = vmatprep.subr.bf16.mxu0 0
    %2422 = vmatpush1.bf16.msra.mxu0 0
    %2423 = vmatprep.subr.bf16.mxu0 0
    %2424 = vmatpush1.bf16.msra.mxu0 0
    %2425 = vmatprep.subr.bf16.mxu0 0
    %2426 = vmatpush1.bf16.msra.mxu0 0
    %2427 = vmatprep.subr.bf16.mxu0 0
    %2428 = vmatpush1.bf16.msra.mxu0 0
    %2429 = vmatprep.subr.bf16.mxu0 0
    %2430 = vmatpush1.bf16.msra.mxu0 0
    %2431 = vmatprep.subr.bf16.mxu0 0
    %2432 = vmatpush1.bf16.msra.mxu0 0
    %2433 = vmatprep.subr.bf16.mxu0 0
    %2434 = vmatpush1.bf16.msra.mxu0 0
    %2435 = vmatprep.subr.bf16.mxu0 0
    %2436 = vmatpush1.bf16.msra.mxu0 0
    %2437 = vmatprep.subr.bf16.mxu0 0
    %2438 = vmatpush1.bf16.msra.mxu0 0
    %2439 = vmatprep.subr.bf16.mxu0 0
    %2440 = vmatpush1.bf16.msra.mxu0 0
    %2441 = vmatprep.subr.bf16.mxu0 0
    %2442 = vmatpush1.bf16.msra.mxu0 0
    %2443 = vmatprep.mubr.bf16.mxu0 0
    %2444 = vmatmul.mubr.bf16.gmra.mrb[0].mxu0 %v251
    %v2445 = vpop.f32.mrb[0].mxu0
    %v2446 = vadd.f32 0.0, %v2445
    %v2447 = vpop.f32.mrb[0].mxu0
    %v2448 = vpop.f32.mrb[0].mxu0
    %v2449 = vpop.f32.mrb[0].mxu0
    %2450 = vdwg.mxu0
    %v2452 = vsel %vm253, %v2015, 0
    %2454 = vmatprep.subr.bf16.mxu0 0
    %2455 = vmatpush1.bf16.msra.mxu0 %v2452
    %2456 = vmatprep.subr.bf16.mxu0 0
    %2457 = vmatpush1.bf16.msra.mxu0 0
    %2458 = vmatprep.subr.bf16.mxu0 0
    %2459 = vmatpush1.bf16.msra.mxu0 0
    %2460 = vmatprep.subr.bf16.mxu0 0
    %2461 = vmatpush1.bf16.msra.mxu0 0
    %2462 = vmatprep.subr.bf16.mxu0 0
    %2463 = vmatpush1.bf16.msra.mxu0 0
    %2464 = vmatprep.subr.bf16.mxu0 0
    %2465 = vmatpush1.bf16.msra.mxu0 0
    %2466 = vmatprep.subr.bf16.mxu0 0
    %2467 = vmatpush1.bf16.msra.mxu0 0
    %2468 = vmatprep.subr.bf16.mxu0 0
    %2469 = vmatpush1.bf16.msra.mxu0 0
    %2470 = vmatprep.subr.bf16.mxu0 0
    %2471 = vmatpush1.bf16.msra.mxu0 0
    %2472 = vmatprep.subr.bf16.mxu0 0
    %2473 = vmatpush1.bf16.msra.mxu0 0
    %2474 = vmatprep.subr.bf16.mxu0 0
    %2475 = vmatpush1.bf16.msra.mxu0 0
    %2476 = vmatprep.subr.bf16.mxu0 0
    %2477 = vmatpush1.bf16.msra.mxu0 0
    %2478 = vmatprep.subr.bf16.mxu0 0
    %2479 = vmatpush1.bf16.msra.mxu0 0
    %2480 = vmatprep.subr.bf16.mxu0 0
    %2481 = vmatpush1.bf16.msra.mxu0 0
    %2482 = vmatprep.subr.bf16.mxu0 0
    %2483 = vmatpush1.bf16.msra.mxu0 0
    %2484 = vmatprep.subr.bf16.mxu0 0
    %2485 = vmatpush1.bf16.msra.mxu0 0
    %2486 = vmatprep.mubr.bf16.mxu0 0
    %2487 = vmatmul.mubr.bf16.gmra.mrb[0].mxu0 %v251
    %v2488 = vpop.f32.mrb[0].mxu0
    %v2489 = vadd.f32 0.0, %v2488
    %v2490 = vpop.f32.mrb[0].mxu0
    %v2491 = vpop.f32.mrb[0].mxu0
    %v2492 = vpop.f32.mrb[0].mxu0
    %2493 = vdwg.mxu0
    %v2495 = vsel %vm253, %v2016, 0
    %2497 = vmatprep.subr.bf16.mxu0 0
    %2498 = vmatpush1.bf16.msra.mxu0 %v2495
    %2499 = vmatprep.subr.bf16.mxu0 0
    %2500 = vmatpush1.bf16.msra.mxu0 0
    %2501 = vmatprep.subr.bf16.mxu0 0
    %2502 = vmatpush1.bf16.msra.mxu0 0
    %2503 = vmatprep.subr.bf16.mxu0 0
    %2504 = vmatpush1.bf16.msra.mxu0 0
    %2505 = vmatprep.subr.bf16.mxu0 0
    %2506 = vmatpush1.bf16.msra.mxu0 0
    %2507 = vmatprep.subr.bf16.mxu0 0
    %2508 = vmatpush1.bf16.msra.mxu0 0
    %2509 = vmatprep.subr.bf16.mxu0 0
    %2510 = vmatpush1.bf16.msra.mxu0 0
    %2511 = vmatprep.subr.bf16.mxu0 0
    %2512 = vmatpush1.bf16.msra.mxu0 0
    %2513 = vmatprep.subr.bf16.mxu0 0
    %2514 = vmatpush1.bf16.msra.mxu0 0
    %2515 = vmatprep.subr.bf16.mxu0 0
    %2516 = vmatpush1.bf16.msra.mxu0 0
    %2517 = vmatprep.subr.bf16.mxu0 0
    %2518 = vmatpush1.bf16.msra.mxu0 0
    %2519 = vmatprep.subr.bf16.mxu0 0
    %2520 = vmatpush1.bf16.msra.mxu0 0
    %2521 = vmatprep.subr.bf16.mxu0 0
    %2522 = vmatpush1.bf16.msra.mxu0 0
    %2523 = vmatprep.subr.bf16.mxu0 0
    %2524 = vmatpush1.bf16.msra.mxu0 0
    %2525 = vmatprep.subr.bf16.mxu0 0
    %2526 = vmatpush1.bf16.msra.mxu0 0
    %2527 = vmatprep.subr.bf16.mxu0 0
    %2528 = vmatpush1.bf16.msra.mxu0 0
    %2529 = vmatprep.mubr.bf16.mxu0 0
    %2530 = vmatmul.mubr.bf16.gmra.mrb[0].mxu0 %v251
    %v2531 = vpop.f32.mrb[0].mxu0
    %v2532 = vadd.f32 0.0, %v2531
    %v2533 = vpop.f32.mrb[0].mxu0
    %v2534 = vpop.f32.mrb[0].mxu0
    %v2535 = vpop.f32.mrb[0].mxu0
    %2536 = vdwg.mxu0
    %v2538 = vsel %vm253, %v2017, 0
    %2540 = vmatprep.subr.bf16.mxu0 0
    %2541 = vmatpush1.bf16.msra.mxu0 %v2538
    %2542 = vmatprep.subr.bf16.mxu0 0
    %2543 = vmatpush1.bf16.msra.mxu0 0
    %2544 = vmatprep.subr.bf16.mxu0 0
    %2545 = vmatpush1.bf16.msra.mxu0 0
    %2546 = vmatprep.subr.bf16.mxu0 0
    %2547 = vmatpush1.bf16.msra.mxu0 0
    %2548 = vmatprep.subr.bf16.mxu0 0
    %2549 = vmatpush1.bf16.msra.mxu0 0
    %2550 = vmatprep.subr.bf16.mxu0 0
    %2551 = vmatpush1.bf16.msra.mxu0 0
    %2552 = vmatprep.subr.bf16.mxu0 0
    %2553 = vmatpush1.bf16.msra.mxu0 0
    %2554 = vmatprep.subr.bf16.mxu0 0
    %2555 = vmatpush1.bf16.msra.mxu0 0
    %2556 = vmatprep.subr.bf16.mxu0 0
    %2557 = vmatpush1.bf16.msra.mxu0 0
    %2558 = vmatprep.subr.bf16.mxu0 0
    %2559 = vmatpush1.bf16.msra.mxu0 0
    %2560 = vmatprep.subr.bf16.mxu0 0
    %2561 = vmatpush1.bf16.msra.mxu0 0
    %2562 = vmatprep.subr.bf16.mxu0 0
    %2563 = vmatpush1.bf16.msra.mxu0 0
    %2564 = vmatprep.subr.bf16.mxu0 0
    %2565 = vmatpush1.bf16.msra.mxu0 0
    %2566 = vmatprep.subr.bf16.mxu0 0
    %2567 = vmatpush1.bf16.msra.mxu0 0
    %2568 = vmatprep.subr.bf16.mxu0 0
    %2569 = vmatpush1.bf16.msra.mxu0 0
    %2570 = vmatprep.subr.bf16.mxu0 0
    %2571 = vmatpush1.bf16.msra.mxu0 0
    %2572 = vmatprep.mubr.bf16.mxu0 0
    %2573 = vmatmul.mubr.bf16.gmra.mrb[0].mxu0 %v251
    %v2574 = vpop.f32.mrb[0].mxu0
    %v2575 = vadd.f32 0.0, %v2574
    %v2576 = vpop.f32.mrb[0].mxu0
    %v2577 = vpop.f32.mrb[0].mxu0
    %v2578 = vpop.f32.mrb[0].mxu0
    %2579 = vdwg.mxu0
    %v2581 = vsel %vm253, %v2018, 0
    %2583 = vmatprep.subr.bf16.mxu0 0
    %2584 = vmatpush1.bf16.msra.mxu0 %v2581
    %2585 = vmatprep.subr.bf16.mxu0 0
    %2586 = vmatpush1.bf16.msra.mxu0 0
    %2587 = vmatprep.subr.bf16.mxu0 0
    %2588 = vmatpush1.bf16.msra.mxu0 0
    %2589 = vmatprep.subr.bf16.mxu0 0
    %2590 = vmatpush1.bf16.msra.mxu0 0
    %2591 = vmatprep.subr.bf16.mxu0 0
    %2592 = vmatpush1.bf16.msra.mxu0 0
    %2593 = vmatprep.subr.bf16.mxu0 0
    %2594 = vmatpush1.bf16.msra.mxu0 0
    %2595 = vmatprep.subr.bf16.mxu0 0
    %2596 = vmatpush1.bf16.msra.mxu0 0
    %2597 = vmatprep.subr.bf16.mxu0 0
    %2598 = vmatpush1.bf16.msra.mxu0 0
    %2599 = vmatprep.subr.bf16.mxu0 0
    %2600 = vmatpush1.bf16.msra.mxu0 0
    %2601 = vmatprep.subr.bf16.mxu0 0
    %2602 = vmatpush1.bf16.msra.mxu0 0
    %2603 = vmatprep.subr.bf16.mxu0 0
    %2604 = vmatpush1.bf16.msra.mxu0 0
    %2605 = vmatprep.subr.bf16.mxu0 0
    %2606 = vmatpush1.bf16.msra.mxu0 0
    %2607 = vmatprep.subr.bf16.mxu0 0
    %2608 = vmatpush1.bf16.msra.mxu0 0
    %2609 = vmatprep.subr.bf16.mxu0 0
    %2610 = vmatpush1.bf16.msra.mxu0 0
    %2611 = vmatprep.subr.bf16.mxu0 0
    %2612 = vmatpush1.bf16.msra.mxu0 0
    %2613 = vmatprep.subr.bf16.mxu0 0
    %2614 = vmatpush1.bf16.msra.mxu0 0
    %2615 = vmatprep.mubr.bf16.mxu0 0
    %2616 = vmatmul.mubr.bf16.gmra.mrb[0].mxu0 %v251
    %v2617 = vpop.f32.mrb[0].mxu0
    %v2618 = vadd.f32 0.0, %v2617
    %v2619 = vpop.f32.mrb[0].mxu0
    %v2620 = vpop.f32.mrb[0].mxu0
    %v2621 = vpop.f32.mrb[0].mxu0
    %2622 = vdwg.mxu0
    %v2624 = vsel %vm253, %v2019, 0
    %2626 = vmatprep.subr.bf16.mxu0 0
    %2627 = vmatpush1.bf16.msra.mxu0 %v2624
    %2628 = vmatprep.subr.bf16.mxu0 0
    %2629 = vmatpush1.bf16.msra.mxu0 0
    %2630 = vmatprep.subr.bf16.mxu0 0
    %2631 = vmatpush1.bf16.msra.mxu0 0
    %2632 = vmatprep.subr.bf16.mxu0 0
    %2633 = vmatpush1.bf16.msra.mxu0 0
    %2634 = vmatprep.subr.bf16.mxu0 0
    %2635 = vmatpush1.bf16.msra.mxu0 0
    %2636 = vmatprep.subr.bf16.mxu0 0
    %2637 = vmatpush1.bf16.msra.mxu0 0
    %2638 = vmatprep.subr.bf16.mxu0 0
    %2639 = vmatpush1.bf16.msra.mxu0 0
    %2640 = vmatprep.subr.bf16.mxu0 0
    %2641 = vmatpush1.bf16.msra.mxu0 0
    %2642 = vmatprep.subr.bf16.mxu0 0
    %2643 = vmatpush1.bf16.msra.mxu0 0
    %2644 = vmatprep.subr.bf16.mxu0 0
    %2645 = vmatpush1.bf16.msra.mxu0 0
    %2646 = vmatprep.subr.bf16.mxu0 0
    %2647 = vmatpush1.bf16.msra.mxu0 0
    %2648 = vmatprep.subr.bf16.mxu0 0
    %2649 = vmatpush1.bf16.msra.mxu0 0
    %2650 = vmatprep.subr.bf16.mxu0 0
    %2651 = vmatpush1.bf16.msra.mxu0 0
    %2652 = vmatprep.subr.bf16.mxu0 0
    %2653 = vmatpush1.bf16.msra.mxu0 0
    %2654 = vmatprep.subr.bf16.mxu0 0
    %2655 = vmatpush1.bf16.msra.mxu0 0
    %2656 = vmatprep.subr.bf16.mxu0 0
    %2657 = vmatpush1.bf16.msra.mxu0 0
    %2658 = vmatprep.mubr.bf16.mxu0 0
    %2659 = vmatmul.mubr.bf16.gmra.mrb[0].mxu0 %v251
    %v2660 = vpop.f32.mrb[0].mxu0
    %v2661 = vadd.f32 0.0, %v2660
    %v2662 = vpop.f32.mrb[0].mxu0
    %v2663 = vpop.f32.mrb[0].mxu0
    %v2664 = vpop.f32.mrb[0].mxu0
    %2665 = vdwg.mxu0
    %v2667 = vsel %vm253, %v2020, 0
    %2669 = vmatprep.subr.bf16.mxu0 0
    %2670 = vmatpush1.bf16.msra.mxu0 %v2667
    %2671 = vmatprep.subr.bf16.mxu0 0
    %2672 = vmatpush1.bf16.msra.mxu0 0
    %2673 = vmatprep.subr.bf16.mxu0 0
    %2674 = vmatpush1.bf16.msra.mxu0 0
    %2675 = vmatprep.subr.bf16.mxu0 0
    %2676 = vmatpush1.bf16.msra.mxu0 0
    %2677 = vmatprep.subr.bf16.mxu0 0
    %2678 = vmatpush1.bf16.msra.mxu0 0
    %2679 = vmatprep.subr.bf16.mxu0 0
    %2680 = vmatpush1.bf16.msra.mxu0 0
    %2681 = vmatprep.subr.bf16.mxu0 0
    %2682 = vmatpush1.bf16.msra.mxu0 0
    %2683 = vmatprep.subr.bf16.mxu0 0
    %2684 = vmatpush1.bf16.msra.mxu0 0
    %2685 = vmatprep.subr.bf16.mxu0 0
    %2686 = vmatpush1.bf16.msra.mxu0 0
    %2687 = vmatprep.subr.bf16.mxu0 0
    %2688 = vmatpush1.bf16.msra.mxu0 0
    %2689 = vmatprep.subr.bf16.mxu0 0
    %2690 = vmatpush1.bf16.msra.mxu0 0
    %2691 = vmatprep.subr.bf16.mxu0 0
    %2692 = vmatpush1.bf16.msra.mxu0 0
    %2693 = vmatprep.subr.bf16.mxu0 0
    %2694 = vmatpush1.bf16.msra.mxu0 0
    %2695 = vmatprep.subr.bf16.mxu0 0
    %2696 = vmatpush1.bf16.msra.mxu0 0
    %2697 = vmatprep.subr.bf16.mxu0 0
    %2698 = vmatpush1.bf16.msra.mxu0 0
    %2699 = vmatprep.subr.bf16.mxu0 0
    %2700 = vmatpush1.bf16.msra.mxu0 0
    %2701 = vmatprep.mubr.bf16.mxu0 0
    %2702 = vmatmul.mubr.bf16.gmra.mrb[0].mxu0 %v251
    %v2703 = vpop.f32.mrb[0].mxu0
    %v2704 = vadd.f32 0.0, %v2703
    %v2705 = vpop.f32.mrb[0].mxu0
    %v2706 = vpop.f32.mrb[0].mxu0
    %v2707 = vpop.f32.mrb[0].mxu0
    %2708 = vdwg.mxu0
    %v2710 = vlaneseq
    %v2711 = vshrl.u32 %v2710, 7
    %v2712 = vsub.s32 0, %v2711
    %v2713 = vrot.slane %v59, %v2712
    %v2715 = vadd.f32 %v2059, %v2713
    %v2716 = vadd.f32 %v2102, %v2713
    %v2717 = vadd.f32 %v2145, %v2713
    %v2718 = vadd.f32 %v2188, %v2713
    %v2719 = vadd.f32 %v2231, %v2713
    %v2720 = vadd.f32 %v2274, %v2713
    %v2721 = vadd.f32 %v2317, %v2713
    %v2722 = vadd.f32 %v2360, %v2713
    %v2723 = vadd.f32 %v2403, %v2713
    %v2724 = vadd.f32 %v2446, %v2713
    %v2725 = vadd.f32 %v2489, %v2713
    %v2726 = vadd.f32 %v2532, %v2713
    %v2727 = vadd.f32 %v2575, %v2713
    %v2728 = vadd.f32 %v2618, %v2713
    %v2729 = vadd.f32 %v2661, %v2713
    %v2730 = vadd.f32 %v2704, %v2713
    %v2731 = vmax.f32 %v2715, 0.0
    %v2732 = vmax.f32 %v2716, 0.0
    %v2733 = vmax.f32 %v2717, 0.0
    %v2734 = vmax.f32 %v2718, 0.0
    %v2735 = vmax.f32 %v2719, 0.0
    %v2736 = vmax.f32 %v2720, 0.0
    %v2737 = vmax.f32 %v2721, 0.0
    %v2738 = vmax.f32 %v2722, 0.0
    %v2739 = vmax.f32 %v2723, 0.0
    %v2740 = vmax.f32 %v2724, 0.0
    %v2741 = vmax.f32 %v2725, 0.0
    %v2742 = vmax.f32 %v2726, 0.0
    %v2743 = vmax.f32 %v2727, 0.0
    %v2744 = vmax.f32 %v2728, 0.0
    %v2745 = vmax.f32 %v2729, 0.0
    %v2746 = vmax.f32 %v2730, 0.0
    %v2747 = vadd.f32 %v964, %v2731
    %v2748 = vadd.f32 %v965, %v2732
    %v2749 = vadd.f32 %v966, %v2733
    %v2750 = vadd.f32 %v967, %v2734
    %v2751 = vadd.f32 %v968, %v2735
    %v2752 = vadd.f32 %v969, %v2736
    %v2753 = vadd.f32 %v970, %v2737
    %v2754 = vadd.f32 %v971, %v2738
    %v2755 = vadd.f32 %v972, %v2739
    %v2756 = vadd.f32 %v973, %v2740
    %v2757 = vadd.f32 %v974, %v2741
    %v2758 = vadd.f32 %v975, %v2742
    %v2759 = vadd.f32 %v976, %v2743
    %v2760 = vadd.f32 %v977, %v2744
    %v2761 = vadd.f32 %v978, %v2745
    %v2762 = vadd.f32 %v979, %v2746
    %v2763 = vpack.c.bf16 %v2748, %v2747
    %v2764 = vpack.c.bf16 %v2750, %v2749
    %v2765 = vpack.c.bf16 %v2752, %v2751
    %v2766 = vpack.c.bf16 %v2754, %v2753
    %v2767 = vpack.c.bf16 %v2756, %v2755
    %v2768 = vpack.c.bf16 %v2758, %v2757
    %v2769 = vpack.c.bf16 %v2760, %v2759
    %v2770 = vpack.c.bf16 %v2762, %v2761
    %v2775 = vunpack.c.l.b16 %v50
    %v2776 = vunpack.c.l.b16 %v51
    %v2777 = vunpack.c.l.b16 %v52
    %v2778 = vunpack.c.l.b16 %v53
    %v2779 = vpack.c.b16 %v2776, %v2775
    %v2780 = vpack.c.b16 %v2778, %v2777
    %v2784 = vsel %vm1000, %v2763, 0
    %v2787 = vsel %vm1000, %v2764, 0
    %v2790 = vsel %vm1000, %v2765, 0
    %v2793 = vsel %vm1000, %v2766, 0
    %v2796 = vsel %vm1000, %v2767, 0
    %v2799 = vsel %vm1000, %v2768, 0
    %v2802 = vsel %vm1000, %v2769, 0
    %v2805 = vsel %vm1000, %v2770, 0
    %2807 = vmatprep.subr.bf16.mxu0 0
    %2808 = vmatpush1.bf16.msra.mxu0 %v2779
    %2809 = vmatprep.subr.bf16.mxu0 0
    %2810 = vmatpush1.bf16.msra.mxu0 %v2780
    %2811 = vmatprep.subr.bf16.mxu0 0
    %2812 = vmatpush1.bf16.msra.mxu0 0
    %2813 = vmatprep.subr.bf16.mxu0 0
    %2814 = vmatpush1.bf16.msra.mxu0 0
    %2815 = vmatprep.subr.bf16.mxu0 0
    %2816 = vmatpush1.bf16.msra.mxu0 0
    %2817 = vmatprep.subr.bf16.mxu0 0
    %2818 = vmatpush1.bf16.msra.mxu0 0
    %2819 = vmatprep.subr.bf16.mxu0 0
    %2820 = vmatpush1.bf16.msra.mxu0 0
    %2821 = vmatprep.subr.bf16.mxu0 0
    %2822 = vmatpush1.bf16.msra.mxu0 0
    %2823 = vmatprep.subr.bf16.mxu0 0
    %2824 = vmatpush1.bf16.msra.mxu0 0
    %2825 = vmatprep.subr.bf16.mxu0 0
    %2826 = vmatpush1.bf16.msra.mxu0 0
    %2827 = vmatprep.subr.bf16.mxu0 0
    %2828 = vmatpush1.bf16.msra.mxu0 0
    %2829 = vmatprep.subr.bf16.mxu0 0
    %2830 = vmatpush1.bf16.msra.mxu0 0
    %2831 = vmatprep.subr.bf16.mxu0 0
    %2832 = vmatpush1.bf16.msra.mxu0 0
    %2833 = vmatprep.subr.bf16.mxu0 0
    %2834 = vmatpush1.bf16.msra.mxu0 0
    %2835 = vmatprep.subr.bf16.mxu0 0
    %2836 = vmatpush1.bf16.msra.mxu0 0
    %2837 = vmatprep.subr.bf16.mxu0 0
    %2838 = vmatpush1.bf16.msra.mxu0 0
    %2839 = vmatprep.mubr.bf16.mxu0 0
    %2840 = vmatmul.mubr.bf16.gmra.mrb[0].mxu0 %v2784
    %v2841 = vpop.f32.mrb[0].mxu0
    %v2842 = vadd.f32 0.0, %v2841
    %v2843 = vpop.f32.mrb[0].mxu0
    %v2844 = vpop.f32.mrb[0].mxu0
    %v2845 = vadd.f32 0.0, %v2844
    %v2846 = vpop.f32.mrb[0].mxu0
    %2847 = vmatprep.mubr.bf16.mxu0 0
    %2848 = vmatmul.mubr.bf16.gmra.mrb[0].mxu0 %v2787
    %v2849 = vpop.f32.mrb[0].mxu0
    %v2850 = vadd.f32 0.0, %v2849
    %v2851 = vpop.f32.mrb[0].mxu0
    %v2852 = vpop.f32.mrb[0].mxu0
    %v2853 = vadd.f32 0.0, %v2852
    %v2854 = vpop.f32.mrb[0].mxu0
    %2855 = vmatprep.mubr.bf16.mxu0 0
    %2856 = vmatmul.mubr.bf16.gmra.mrb[0].mxu0 %v2790
    %v2857 = vpop.f32.mrb[0].mxu0
    %v2858 = vadd.f32 0.0, %v2857
    %v2859 = vpop.f32.mrb[0].mxu0
    %v2860 = vpop.f32.mrb[0].mxu0
    %v2861 = vadd.f32 0.0, %v2860
    %v2862 = vpop.f32.mrb[0].mxu0
    %2863 = vmatprep.mubr.bf16.mxu0 0
    %2864 = vmatmul.mubr.bf16.gmra.mrb[0].mxu0 %v2793
    %v2865 = vpop.f32.mrb[0].mxu0
    %v2866 = vadd.f32 0.0, %v2865
    %v2867 = vpop.f32.mrb[0].mxu0
    %v2868 = vpop.f32.mrb[0].mxu0
    %v2869 = vadd.f32 0.0, %v2868
    %v2870 = vpop.f32.mrb[0].mxu0
    %2871 = vmatprep.mubr.bf16.mxu0 0
    %2872 = vmatmul.mubr.bf16.gmra.mrb[0].mxu0 %v2796
    %v2873 = vpop.f32.mrb[0].mxu0
    %v2874 = vadd.f32 0.0, %v2873
    %v2875 = vpop.f32.mrb[0].mxu0
    %v2876 = vpop.f32.mrb[0].mxu0
    %v2877 = vadd.f32 0.0, %v2876
    %v2878 = vpop.f32.mrb[0].mxu0
    %2879 = vmatprep.mubr.bf16.mxu0 0
    %2880 = vmatmul.mubr.bf16.gmra.mrb[0].mxu0 %v2799
    %v2881 = vpop.f32.mrb[0].mxu0
    %v2882 = vadd.f32 0.0, %v2881
    %v2883 = vpop.f32.mrb[0].mxu0
    %v2884 = vpop.f32.mrb[0].mxu0
    %v2885 = vadd.f32 0.0, %v2884
    %v2886 = vpop.f32.mrb[0].mxu0
    %2887 = vmatprep.mubr.bf16.mxu0 0
    %2888 = vmatmul.mubr.bf16.gmra.mrb[0].mxu0 %v2802
    %v2889 = vpop.f32.mrb[0].mxu0
    %v2890 = vadd.f32 0.0, %v2889
    %v2891 = vpop.f32.mrb[0].mxu0
    %v2892 = vpop.f32.mrb[0].mxu0
    %v2893 = vadd.f32 0.0, %v2892
    %v2894 = vpop.f32.mrb[0].mxu0
    %2895 = vmatprep.mubr.bf16.mxu0 0
    %2896 = vmatmul.mubr.bf16.gmra.mrb[0].mxu0 %v2805
    %v2897 = vpop.f32.mrb[0].mxu0
    %v2898 = vadd.f32 0.0, %v2897
    %v2899 = vpop.f32.mrb[0].mxu0
    %v2900 = vpop.f32.mrb[0].mxu0
    %v2901 = vadd.f32 0.0, %v2900
    %v2902 = vpop.f32.mrb[0].mxu0
    %2903 = vdwg.mxu0
    %v2904 = vpack.c.bf16 %v2842, %v2842
    %v2905 = vpack.c.bf16 %v2845, %v2845
    %v2906 = vpack.c.bf16 %v2850, %v2850
    %v2907 = vpack.c.bf16 %v2853, %v2853
    %v2908 = vpack.c.bf16 %v2858, %v2858
    %v2909 = vpack.c.bf16 %v2861, %v2861
    %v2910 = vpack.c.bf16 %v2866, %v2866
    %v2911 = vpack.c.bf16 %v2869, %v2869
    %v2912 = vpack.c.bf16 %v2874, %v2874
    %v2913 = vpack.c.bf16 %v2877, %v2877
    %v2914 = vpack.c.bf16 %v2882, %v2882
    %v2915 = vpack.c.bf16 %v2885, %v2885
    %v2916 = vpack.c.bf16 %v2890, %v2890
    %v2917 = vpack.c.bf16 %v2893, %v2893
    %v2918 = vpack.c.bf16 %v2898, %v2898
    %v2919 = vpack.c.bf16 %v2901, %v2901
    %v2921 = vsel %vm253, %v2904, 0
    %2923 = vmatprep.subr.bf16.mxu0 0
    %2924 = vmatpush1.bf16.msra.mxu0 %v2921
    %2925 = vmatprep.subr.bf16.mxu0 0
    %2926 = vmatpush1.bf16.msra.mxu0 0
    %2927 = vmatprep.subr.bf16.mxu0 0
    %2928 = vmatpush1.bf16.msra.mxu0 0
    %2929 = vmatprep.subr.bf16.mxu0 0
    %2930 = vmatpush1.bf16.msra.mxu0 0
    %2931 = vmatprep.subr.bf16.mxu0 0
    %2932 = vmatpush1.bf16.msra.mxu0 0
    %2933 = vmatprep.subr.bf16.mxu0 0
    %2934 = vmatpush1.bf16.msra.mxu0 0
    %2935 = vmatprep.subr.bf16.mxu0 0
    %2936 = vmatpush1.bf16.msra.mxu0 0
    %2937 = vmatprep.subr.bf16.mxu0 0
    %2938 = vmatpush1.bf16.msra.mxu0 0
    %2939 = vmatprep.subr.bf16.mxu0 0
    %2940 = vmatpush1.bf16.msra.mxu0 0
    %2941 = vmatprep.subr.bf16.mxu0 0
    %2942 = vmatpush1.bf16.msra.mxu0 0
    %2943 = vmatprep.subr.bf16.mxu0 0
    %2944 = vmatpush1.bf16.msra.mxu0 0
    %2945 = vmatprep.subr.bf16.mxu0 0
    %2946 = vmatpush1.bf16.msra.mxu0 0
    %2947 = vmatprep.subr.bf16.mxu0 0
    %2948 = vmatpush1.bf16.msra.mxu0 0
    %2949 = vmatprep.subr.bf16.mxu0 0
    %2950 = vmatpush1.bf16.msra.mxu0 0
    %2951 = vmatprep.subr.bf16.mxu0 0
    %2952 = vmatpush1.bf16.msra.mxu0 0
    %2953 = vmatprep.subr.bf16.mxu0 0
    %2954 = vmatpush1.bf16.msra.mxu0 0
    %2955 = vmatprep.mubr.bf16.mxu0 0
    %2956 = vmatmul.mubr.bf16.gmra.mrb[0].mxu0 %v251
    %v2957 = vpop.f32.mrb[0].mxu0
    %v2958 = vadd.f32 0.0, %v2957
    %v2959 = vpop.f32.mrb[0].mxu0
    %v2960 = vpop.f32.mrb[0].mxu0
    %v2961 = vpop.f32.mrb[0].mxu0
    %2962 = vdwg.mxu0
    %v2964 = vsel %vm253, %v2905, 0
    %2966 = vmatprep.subr.bf16.mxu0 0
    %2967 = vmatpush1.bf16.msra.mxu0 %v2964
    %2968 = vmatprep.subr.bf16.mxu0 0
    %2969 = vmatpush1.bf16.msra.mxu0 0
    %2970 = vmatprep.subr.bf16.mxu0 0
    %2971 = vmatpush1.bf16.msra.mxu0 0
    %2972 = vmatprep.subr.bf16.mxu0 0
    %2973 = vmatpush1.bf16.msra.mxu0 0
    %2974 = vmatprep.subr.bf16.mxu0 0
    %2975 = vmatpush1.bf16.msra.mxu0 0
    %2976 = vmatprep.subr.bf16.mxu0 0
    %2977 = vmatpush1.bf16.msra.mxu0 0
    %2978 = vmatprep.subr.bf16.mxu0 0
    %2979 = vmatpush1.bf16.msra.mxu0 0
    %2980 = vmatprep.subr.bf16.mxu0 0
    %2981 = vmatpush1.bf16.msra.mxu0 0
    %2982 = vmatprep.subr.bf16.mxu0 0
    %2983 = vmatpush1.bf16.msra.mxu0 0
    %2984 = vmatprep.subr.bf16.mxu0 0
    %2985 = vmatpush1.bf16.msra.mxu0 0
    %2986 = vmatprep.subr.bf16.mxu0 0
    %2987 = vmatpush1.bf16.msra.mxu0 0
    %2988 = vmatprep.subr.bf16.mxu0 0
    %2989 = vmatpush1.bf16.msra.mxu0 0
    %2990 = vmatprep.subr.bf16.mxu0 0
    %2991 = vmatpush1.bf16.msra.mxu0 0
    %2992 = vmatprep.subr.bf16.mxu0 0
    %2993 = vmatpush1.bf16.msra.mxu0 0
    %2994 = vmatprep.subr.bf16.mxu0 0
    %2995 = vmatpush1.bf16.msra.mxu0 0
    %2996 = vmatprep.subr.bf16.mxu0 0
    %2997 = vmatpush1.bf16.msra.mxu0 0
    %2998 = vmatprep.mubr.bf16.mxu0 0
    %2999 = vmatmul.mubr.bf16.gmra.mrb[0].mxu0 %v251
    %v3000 = vpop.f32.mrb[0].mxu0
    %v3001 = vadd.f32 0.0, %v3000
    %v3002 = vpop.f32.mrb[0].mxu0
    %v3003 = vpop.f32.mrb[0].mxu0
    %v3004 = vpop.f32.mrb[0].mxu0
    %3005 = vdwg.mxu0
    %v3007 = vsel %vm253, %v2906, 0
    %3009 = vmatprep.subr.bf16.mxu0 0
    %3010 = vmatpush1.bf16.msra.mxu0 %v3007
    %3011 = vmatprep.subr.bf16.mxu0 0
    %3012 = vmatpush1.bf16.msra.mxu0 0
    %3013 = vmatprep.subr.bf16.mxu0 0
    %3014 = vmatpush1.bf16.msra.mxu0 0
    %3015 = vmatprep.subr.bf16.mxu0 0
    %3016 = vmatpush1.bf16.msra.mxu0 0
    %3017 = vmatprep.subr.bf16.mxu0 0
    %3018 = vmatpush1.bf16.msra.mxu0 0
    %3019 = vmatprep.subr.bf16.mxu0 0
    %3020 = vmatpush1.bf16.msra.mxu0 0
    %3021 = vmatprep.subr.bf16.mxu0 0
    %3022 = vmatpush1.bf16.msra.mxu0 0
    %3023 = vmatprep.subr.bf16.mxu0 0
    %3024 = vmatpush1.bf16.msra.mxu0 0
    %3025 = vmatprep.subr.bf16.mxu0 0
    %3026 = vmatpush1.bf16.msra.mxu0 0
    %3027 = vmatprep.subr.bf16.mxu0 0
    %3028 = vmatpush1.bf16.msra.mxu0 0
    %3029 = vmatprep.subr.bf16.mxu0 0
    %3030 = vmatpush1.bf16.msra.mxu0 0
    %3031 = vmatprep.subr.bf16.mxu0 0
    %3032 = vmatpush1.bf16.msra.mxu0 0
    %3033 = vmatprep.subr.bf16.mxu0 0
    %3034 = vmatpush1.bf16.msra.mxu0 0
    %3035 = vmatprep.subr.bf16.mxu0 0
    %3036 = vmatpush1.bf16.msra.mxu0 0
    %3037 = vmatprep.subr.bf16.mxu0 0
    %3038 = vmatpush1.bf16.msra.mxu0 0
    %3039 = vmatprep.subr.bf16.mxu0 0
    %3040 = vmatpush1.bf16.msra.mxu0 0
    %3041 = vmatprep.mubr.bf16.mxu0 0
    %3042 = vmatmul.mubr.bf16.gmra.mrb[0].mxu0 %v251
    %v3043 = vpop.f32.mrb[0].mxu0
    %v3044 = vadd.f32 0.0, %v3043
    %v3045 = vpop.f32.mrb[0].mxu0
    %v3046 = vpop.f32.mrb[0].mxu0
    %v3047 = vpop.f32.mrb[0].mxu0
    %3048 = vdwg.mxu0
    %v3050 = vsel %vm253, %v2907, 0
    %3052 = vmatprep.subr.bf16.mxu0 0
    %3053 = vmatpush1.bf16.msra.mxu0 %v3050
    %3054 = vmatprep.subr.bf16.mxu0 0
    %3055 = vmatpush1.bf16.msra.mxu0 0
    %3056 = vmatprep.subr.bf16.mxu0 0
    %3057 = vmatpush1.bf16.msra.mxu0 0
    %3058 = vmatprep.subr.bf16.mxu0 0
    %3059 = vmatpush1.bf16.msra.mxu0 0
    %3060 = vmatprep.subr.bf16.mxu0 0
    %3061 = vmatpush1.bf16.msra.mxu0 0
    %3062 = vmatprep.subr.bf16.mxu0 0
    %3063 = vmatpush1.bf16.msra.mxu0 0
    %3064 = vmatprep.subr.bf16.mxu0 0
    %3065 = vmatpush1.bf16.msra.mxu0 0
    %3066 = vmatprep.subr.bf16.mxu0 0
    %3067 = vmatpush1.bf16.msra.mxu0 0
    %3068 = vmatprep.subr.bf16.mxu0 0
    %3069 = vmatpush1.bf16.msra.mxu0 0
    %3070 = vmatprep.subr.bf16.mxu0 0
    %3071 = vmatpush1.bf16.msra.mxu0 0
    %3072 = vmatprep.subr.bf16.mxu0 0
    %3073 = vmatpush1.bf16.msra.mxu0 0
    %3074 = vmatprep.subr.bf16.mxu0 0
    %3075 = vmatpush1.bf16.msra.mxu0 0
    %3076 = vmatprep.subr.bf16.mxu0 0
    %3077 = vmatpush1.bf16.msra.mxu0 0
    %3078 = vmatprep.subr.bf16.mxu0 0
    %3079 = vmatpush1.bf16.msra.mxu0 0
    %3080 = vmatprep.subr.bf16.mxu0 0
    %3081 = vmatpush1.bf16.msra.mxu0 0
    %3082 = vmatprep.subr.bf16.mxu0 0
    %3083 = vmatpush1.bf16.msra.mxu0 0
    %3084 = vmatprep.mubr.bf16.mxu0 0
    %3085 = vmatmul.mubr.bf16.gmra.mrb[0].mxu0 %v251
    %v3086 = vpop.f32.mrb[0].mxu0
    %v3087 = vadd.f32 0.0, %v3086
    %v3088 = vpop.f32.mrb[0].mxu0
    %v3089 = vpop.f32.mrb[0].mxu0
    %v3090 = vpop.f32.mrb[0].mxu0
    %3091 = vdwg.mxu0
    %v3093 = vsel %vm253, %v2908, 0
    %3095 = vmatprep.subr.bf16.mxu0 0
    %3096 = vmatpush1.bf16.msra.mxu0 %v3093
    %3097 = vmatprep.subr.bf16.mxu0 0
    %3098 = vmatpush1.bf16.msra.mxu0 0
    %3099 = vmatprep.subr.bf16.mxu0 0
    %3100 = vmatpush1.bf16.msra.mxu0 0
    %3101 = vmatprep.subr.bf16.mxu0 0
    %3102 = vmatpush1.bf16.msra.mxu0 0
    %3103 = vmatprep.subr.bf16.mxu0 0
    %3104 = vmatpush1.bf16.msra.mxu0 0
    %3105 = vmatprep.subr.bf16.mxu0 0
    %3106 = vmatpush1.bf16.msra.mxu0 0
    %3107 = vmatprep.subr.bf16.mxu0 0
    %3108 = vmatpush1.bf16.msra.mxu0 0
    %3109 = vmatprep.subr.bf16.mxu0 0
    %3110 = vmatpush1.bf16.msra.mxu0 0
    %3111 = vmatprep.subr.bf16.mxu0 0
    %3112 = vmatpush1.bf16.msra.mxu0 0
    %3113 = vmatprep.subr.bf16.mxu0 0
    %3114 = vmatpush1.bf16.msra.mxu0 0
    %3115 = vmatprep.subr.bf16.mxu0 0
    %3116 = vmatpush1.bf16.msra.mxu0 0
    %3117 = vmatprep.subr.bf16.mxu0 0
    %3118 = vmatpush1.bf16.msra.mxu0 0
    %3119 = vmatprep.subr.bf16.mxu0 0
    %3120 = vmatpush1.bf16.msra.mxu0 0
    %3121 = vmatprep.subr.bf16.mxu0 0
    %3122 = vmatpush1.bf16.msra.mxu0 0
    %3123 = vmatprep.subr.bf16.mxu0 0
    %3124 = vmatpush1.bf16.msra.mxu0 0
    %3125 = vmatprep.subr.bf16.mxu0 0
    %3126 = vmatpush1.bf16.msra.mxu0 0
    %3127 = vmatprep.mubr.bf16.mxu0 0
    %3128 = vmatmul.mubr.bf16.gmra.mrb[0].mxu0 %v251
    %v3129 = vpop.f32.mrb[0].mxu0
    %v3130 = vadd.f32 0.0, %v3129
    %v3131 = vpop.f32.mrb[0].mxu0
    %v3132 = vpop.f32.mrb[0].mxu0
    %v3133 = vpop.f32.mrb[0].mxu0
    %3134 = vdwg.mxu0
    %v3136 = vsel %vm253, %v2909, 0
    %3138 = vmatprep.subr.bf16.mxu0 0
    %3139 = vmatpush1.bf16.msra.mxu0 %v3136
    %3140 = vmatprep.subr.bf16.mxu0 0
    %3141 = vmatpush1.bf16.msra.mxu0 0
    %3142 = vmatprep.subr.bf16.mxu0 0
    %3143 = vmatpush1.bf16.msra.mxu0 0
    %3144 = vmatprep.subr.bf16.mxu0 0
    %3145 = vmatpush1.bf16.msra.mxu0 0
    %3146 = vmatprep.subr.bf16.mxu0 0
    %3147 = vmatpush1.bf16.msra.mxu0 0
    %3148 = vmatprep.subr.bf16.mxu0 0
    %3149 = vmatpush1.bf16.msra.mxu0 0
    %3150 = vmatprep.subr.bf16.mxu0 0
    %3151 = vmatpush1.bf16.msra.mxu0 0
    %3152 = vmatprep.subr.bf16.mxu0 0
    %3153 = vmatpush1.bf16.msra.mxu0 0
    %3154 = vmatprep.subr.bf16.mxu0 0
    %3155 = vmatpush1.bf16.msra.mxu0 0
    %3156 = vmatprep.subr.bf16.mxu0 0
    %3157 = vmatpush1.bf16.msra.mxu0 0
    %3158 = vmatprep.subr.bf16.mxu0 0
    %3159 = vmatpush1.bf16.msra.mxu0 0
    %3160 = vmatprep.subr.bf16.mxu0 0
    %3161 = vmatpush1.bf16.msra.mxu0 0
    %3162 = vmatprep.subr.bf16.mxu0 0
    %3163 = vmatpush1.bf16.msra.mxu0 0
    %3164 = vmatprep.subr.bf16.mxu0 0
    %3165 = vmatpush1.bf16.msra.mxu0 0
    %3166 = vmatprep.subr.bf16.mxu0 0
    %3167 = vmatpush1.bf16.msra.mxu0 0
    %3168 = vmatprep.subr.bf16.mxu0 0
    %3169 = vmatpush1.bf16.msra.mxu0 0
    %3170 = vmatprep.mubr.bf16.mxu0 0
    %3171 = vmatmul.mubr.bf16.gmra.mrb[0].mxu0 %v251
    %v3172 = vpop.f32.mrb[0].mxu0
    %v3173 = vadd.f32 0.0, %v3172
    %v3174 = vpop.f32.mrb[0].mxu0
    %v3175 = vpop.f32.mrb[0].mxu0
    %v3176 = vpop.f32.mrb[0].mxu0
    %3177 = vdwg.mxu0
    %v3179 = vsel %vm253, %v2910, 0
    %3181 = vmatprep.subr.bf16.mxu0 0
    %3182 = vmatpush1.bf16.msra.mxu0 %v3179
    %3183 = vmatprep.subr.bf16.mxu0 0
    %3184 = vmatpush1.bf16.msra.mxu0 0
    %3185 = vmatprep.subr.bf16.mxu0 0
    %3186 = vmatpush1.bf16.msra.mxu0 0
    %3187 = vmatprep.subr.bf16.mxu0 0
    %3188 = vmatpush1.bf16.msra.mxu0 0
    %3189 = vmatprep.subr.bf16.mxu0 0
    %3190 = vmatpush1.bf16.msra.mxu0 0
    %3191 = vmatprep.subr.bf16.mxu0 0
    %3192 = vmatpush1.bf16.msra.mxu0 0
    %3193 = vmatprep.subr.bf16.mxu0 0
    %3194 = vmatpush1.bf16.msra.mxu0 0
    %3195 = vmatprep.subr.bf16.mxu0 0
    %3196 = vmatpush1.bf16.msra.mxu0 0
    %3197 = vmatprep.subr.bf16.mxu0 0
    %3198 = vmatpush1.bf16.msra.mxu0 0
    %3199 = vmatprep.subr.bf16.mxu0 0
    %3200 = vmatpush1.bf16.msra.mxu0 0
    %3201 = vmatprep.subr.bf16.mxu0 0
    %3202 = vmatpush1.bf16.msra.mxu0 0
    %3203 = vmatprep.subr.bf16.mxu0 0
    %3204 = vmatpush1.bf16.msra.mxu0 0
    %3205 = vmatprep.subr.bf16.mxu0 0
    %3206 = vmatpush1.bf16.msra.mxu0 0
    %3207 = vmatprep.subr.bf16.mxu0 0
    %3208 = vmatpush1.bf16.msra.mxu0 0
    %3209 = vmatprep.subr.bf16.mxu0 0
    %3210 = vmatpush1.bf16.msra.mxu0 0
    %3211 = vmatprep.subr.bf16.mxu0 0
    %3212 = vmatpush1.bf16.msra.mxu0 0
    %3213 = vmatprep.mubr.bf16.mxu0 0
    %3214 = vmatmul.mubr.bf16.gmra.mrb[0].mxu0 %v251
    %v3215 = vpop.f32.mrb[0].mxu0
    %v3216 = vadd.f32 0.0, %v3215
    %v3217 = vpop.f32.mrb[0].mxu0
    %v3218 = vpop.f32.mrb[0].mxu0
    %v3219 = vpop.f32.mrb[0].mxu0
    %3220 = vdwg.mxu0
    %v3222 = vsel %vm253, %v2911, 0
    %3224 = vmatprep.subr.bf16.mxu0 0
    %3225 = vmatpush1.bf16.msra.mxu0 %v3222
    %3226 = vmatprep.subr.bf16.mxu0 0
    %3227 = vmatpush1.bf16.msra.mxu0 0
    %3228 = vmatprep.subr.bf16.mxu0 0
    %3229 = vmatpush1.bf16.msra.mxu0 0
    %3230 = vmatprep.subr.bf16.mxu0 0
    %3231 = vmatpush1.bf16.msra.mxu0 0
    %3232 = vmatprep.subr.bf16.mxu0 0
    %3233 = vmatpush1.bf16.msra.mxu0 0
    %3234 = vmatprep.subr.bf16.mxu0 0
    %3235 = vmatpush1.bf16.msra.mxu0 0
    %3236 = vmatprep.subr.bf16.mxu0 0
    %3237 = vmatpush1.bf16.msra.mxu0 0
    %3238 = vmatprep.subr.bf16.mxu0 0
    %3239 = vmatpush1.bf16.msra.mxu0 0
    %3240 = vmatprep.subr.bf16.mxu0 0
    %3241 = vmatpush1.bf16.msra.mxu0 0
    %3242 = vmatprep.subr.bf16.mxu0 0
    %3243 = vmatpush1.bf16.msra.mxu0 0
    %3244 = vmatprep.subr.bf16.mxu0 0
    %3245 = vmatpush1.bf16.msra.mxu0 0
    %3246 = vmatprep.subr.bf16.mxu0 0
    %3247 = vmatpush1.bf16.msra.mxu0 0
    %3248 = vmatprep.subr.bf16.mxu0 0
    %3249 = vmatpush1.bf16.msra.mxu0 0
    %3250 = vmatprep.subr.bf16.mxu0 0
    %3251 = vmatpush1.bf16.msra.mxu0 0
    %3252 = vmatprep.subr.bf16.mxu0 0
    %3253 = vmatpush1.bf16.msra.mxu0 0
    %3254 = vmatprep.subr.bf16.mxu0 0
    %3255 = vmatpush1.bf16.msra.mxu0 0
    %3256 = vmatprep.mubr.bf16.mxu0 0
    %3257 = vmatmul.mubr.bf16.gmra.mrb[0].mxu0 %v251
    %v3258 = vpop.f32.mrb[0].mxu0
    %v3259 = vadd.f32 0.0, %v3258
    %v3260 = vpop.f32.mrb[0].mxu0
    %v3261 = vpop.f32.mrb[0].mxu0
    %v3262 = vpop.f32.mrb[0].mxu0
    %3263 = vdwg.mxu0
    %v3265 = vsel %vm253, %v2912, 0
    %3267 = vmatprep.subr.bf16.mxu0 0
    %3268 = vmatpush1.bf16.msra.mxu0 %v3265
    %3269 = vmatprep.subr.bf16.mxu0 0
    %3270 = vmatpush1.bf16.msra.mxu0 0
    %3271 = vmatprep.subr.bf16.mxu0 0
    %3272 = vmatpush1.bf16.msra.mxu0 0
    %3273 = vmatprep.subr.bf16.mxu0 0
    %3274 = vmatpush1.bf16.msra.mxu0 0
    %3275 = vmatprep.subr.bf16.mxu0 0
    %3276 = vmatpush1.bf16.msra.mxu0 0
    %3277 = vmatprep.subr.bf16.mxu0 0
    %3278 = vmatpush1.bf16.msra.mxu0 0
    %3279 = vmatprep.subr.bf16.mxu0 0
    %3280 = vmatpush1.bf16.msra.mxu0 0
    %3281 = vmatprep.subr.bf16.mxu0 0
    %3282 = vmatpush1.bf16.msra.mxu0 0
    %3283 = vmatprep.subr.bf16.mxu0 0
    %3284 = vmatpush1.bf16.msra.mxu0 0
    %3285 = vmatprep.subr.bf16.mxu0 0
    %3286 = vmatpush1.bf16.msra.mxu0 0
    %3287 = vmatprep.subr.bf16.mxu0 0
    %3288 = vmatpush1.bf16.msra.mxu0 0
    %3289 = vmatprep.subr.bf16.mxu0 0
    %3290 = vmatpush1.bf16.msra.mxu0 0
    %3291 = vmatprep.subr.bf16.mxu0 0
    %3292 = vmatpush1.bf16.msra.mxu0 0
    %3293 = vmatprep.subr.bf16.mxu0 0
    %3294 = vmatpush1.bf16.msra.mxu0 0
    %3295 = vmatprep.subr.bf16.mxu0 0
    %3296 = vmatpush1.bf16.msra.mxu0 0
    %3297 = vmatprep.subr.bf16.mxu0 0
    %3298 = vmatpush1.bf16.msra.mxu0 0
    %3299 = vmatprep.mubr.bf16.mxu0 0
    %3300 = vmatmul.mubr.bf16.gmra.mrb[0].mxu0 %v251
    %v3301 = vpop.f32.mrb[0].mxu0
    %v3302 = vadd.f32 0.0, %v3301
    %v3303 = vpop.f32.mrb[0].mxu0
    %v3304 = vpop.f32.mrb[0].mxu0
    %v3305 = vpop.f32.mrb[0].mxu0
    %3306 = vdwg.mxu0
    %v3308 = vsel %vm253, %v2913, 0
    %3310 = vmatprep.subr.bf16.mxu0 0
    %3311 = vmatpush1.bf16.msra.mxu0 %v3308
    %3312 = vmatprep.subr.bf16.mxu0 0
    %3313 = vmatpush1.bf16.msra.mxu0 0
    %3314 = vmatprep.subr.bf16.mxu0 0
    %3315 = vmatpush1.bf16.msra.mxu0 0
    %3316 = vmatprep.subr.bf16.mxu0 0
    %3317 = vmatpush1.bf16.msra.mxu0 0
    %3318 = vmatprep.subr.bf16.mxu0 0
    %3319 = vmatpush1.bf16.msra.mxu0 0
    %3320 = vmatprep.subr.bf16.mxu0 0
    %3321 = vmatpush1.bf16.msra.mxu0 0
    %3322 = vmatprep.subr.bf16.mxu0 0
    %3323 = vmatpush1.bf16.msra.mxu0 0
    %3324 = vmatprep.subr.bf16.mxu0 0
    %3325 = vmatpush1.bf16.msra.mxu0 0
    %3326 = vmatprep.subr.bf16.mxu0 0
    %3327 = vmatpush1.bf16.msra.mxu0 0
    %3328 = vmatprep.subr.bf16.mxu0 0
    %3329 = vmatpush1.bf16.msra.mxu0 0
    %3330 = vmatprep.subr.bf16.mxu0 0
    %3331 = vmatpush1.bf16.msra.mxu0 0
    %3332 = vmatprep.subr.bf16.mxu0 0
    %3333 = vmatpush1.bf16.msra.mxu0 0
    %3334 = vmatprep.subr.bf16.mxu0 0
    %3335 = vmatpush1.bf16.msra.mxu0 0
    %3336 = vmatprep.subr.bf16.mxu0 0
    %3337 = vmatpush1.bf16.msra.mxu0 0
    %3338 = vmatprep.subr.bf16.mxu0 0
    %3339 = vmatpush1.bf16.msra.mxu0 0
    %3340 = vmatprep.subr.bf16.mxu0 0
    %3341 = vmatpush1.bf16.msra.mxu0 0
    %3342 = vmatprep.mubr.bf16.mxu0 0
    %3343 = vmatmul.mubr.bf16.gmra.mrb[0].mxu0 %v251
    %v3344 = vpop.f32.mrb[0].mxu0
    %v3345 = vadd.f32 0.0, %v3344
    %v3346 = vpop.f32.mrb[0].mxu0
    %v3347 = vpop.f32.mrb[0].mxu0
    %v3348 = vpop.f32.mrb[0].mxu0
    %3349 = vdwg.mxu0
    %v3351 = vsel %vm253, %v2914, 0
    %3353 = vmatprep.subr.bf16.mxu0 0
    %3354 = vmatpush1.bf16.msra.mxu0 %v3351
    %3355 = vmatprep.subr.bf16.mxu0 0
    %3356 = vmatpush1.bf16.msra.mxu0 0
    %3357 = vmatprep.subr.bf16.mxu0 0
    %3358 = vmatpush1.bf16.msra.mxu0 0
    %3359 = vmatprep.subr.bf16.mxu0 0
    %3360 = vmatpush1.bf16.msra.mxu0 0
    %3361 = vmatprep.subr.bf16.mxu0 0
    %3362 = vmatpush1.bf16.msra.mxu0 0
    %3363 = vmatprep.subr.bf16.mxu0 0
    %3364 = vmatpush1.bf16.msra.mxu0 0
    %3365 = vmatprep.subr.bf16.mxu0 0
    %3366 = vmatpush1.bf16.msra.mxu0 0
    %3367 = vmatprep.subr.bf16.mxu0 0
    %3368 = vmatpush1.bf16.msra.mxu0 0
    %3369 = vmatprep.subr.bf16.mxu0 0
    %3370 = vmatpush1.bf16.msra.mxu0 0
    %3371 = vmatprep.subr.bf16.mxu0 0
    %3372 = vmatpush1.bf16.msra.mxu0 0
    %3373 = vmatprep.subr.bf16.mxu0 0
    %3374 = vmatpush1.bf16.msra.mxu0 0
    %3375 = vmatprep.subr.bf16.mxu0 0
    %3376 = vmatpush1.bf16.msra.mxu0 0
    %3377 = vmatprep.subr.bf16.mxu0 0
    %3378 = vmatpush1.bf16.msra.mxu0 0
    %3379 = vmatprep.subr.bf16.mxu0 0
    %3380 = vmatpush1.bf16.msra.mxu0 0
    %3381 = vmatprep.subr.bf16.mxu0 0
    %3382 = vmatpush1.bf16.msra.mxu0 0
    %3383 = vmatprep.subr.bf16.mxu0 0
    %3384 = vmatpush1.bf16.msra.mxu0 0
    %3385 = vmatprep.mubr.bf16.mxu0 0
    %3386 = vmatmul.mubr.bf16.gmra.mrb[0].mxu0 %v251
    %v3387 = vpop.f32.mrb[0].mxu0
    %v3388 = vadd.f32 0.0, %v3387
    %v3389 = vpop.f32.mrb[0].mxu0
    %v3390 = vpop.f32.mrb[0].mxu0
    %v3391 = vpop.f32.mrb[0].mxu0
    %3392 = vdwg.mxu0
    %v3394 = vsel %vm253, %v2915, 0
    %3396 = vmatprep.subr.bf16.mxu0 0
    %3397 = vmatpush1.bf16.msra.mxu0 %v3394
    %3398 = vmatprep.subr.bf16.mxu0 0
    %3399 = vmatpush1.bf16.msra.mxu0 0
    %3400 = vmatprep.subr.bf16.mxu0 0
    %3401 = vmatpush1.bf16.msra.mxu0 0
    %3402 = vmatprep.subr.bf16.mxu0 0
    %3403 = vmatpush1.bf16.msra.mxu0 0
    %3404 = vmatprep.subr.bf16.mxu0 0
    %3405 = vmatpush1.bf16.msra.mxu0 0
    %3406 = vmatprep.subr.bf16.mxu0 0
    %3407 = vmatpush1.bf16.msra.mxu0 0
    %3408 = vmatprep.subr.bf16.mxu0 0
    %3409 = vmatpush1.bf16.msra.mxu0 0
    %3410 = vmatprep.subr.bf16.mxu0 0
    %3411 = vmatpush1.bf16.msra.mxu0 0
    %3412 = vmatprep.subr.bf16.mxu0 0
    %3413 = vmatpush1.bf16.msra.mxu0 0
    %3414 = vmatprep.subr.bf16.mxu0 0
    %3415 = vmatpush1.bf16.msra.mxu0 0
    %3416 = vmatprep.subr.bf16.mxu0 0
    %3417 = vmatpush1.bf16.msra.mxu0 0
    %3418 = vmatprep.subr.bf16.mxu0 0
    %3419 = vmatpush1.bf16.msra.mxu0 0
    %3420 = vmatprep.subr.bf16.mxu0 0
    %3421 = vmatpush1.bf16.msra.mxu0 0
    %3422 = vmatprep.subr.bf16.mxu0 0
    %3423 = vmatpush1.bf16.msra.mxu0 0
    %3424 = vmatprep.subr.bf16.mxu0 0
    %3425 = vmatpush1.bf16.msra.mxu0 0
    %3426 = vmatprep.subr.bf16.mxu0 0
    %3427 = vmatpush1.bf16.msra.mxu0 0
    %3428 = vmatprep.mubr.bf16.mxu0 0
    %3429 = vmatmul.mubr.bf16.gmra.mrb[0].mxu0 %v251
    %v3430 = vpop.f32.mrb[0].mxu0
    %v3431 = vadd.f32 0.0, %v3430
    %v3432 = vpop.f32.mrb[0].mxu0
    %v3433 = vpop.f32.mrb[0].mxu0
    %v3434 = vpop.f32.mrb[0].mxu0
    %3435 = vdwg.mxu0
    %v3437 = vsel %vm253, %v2916, 0
    %3439 = vmatprep.subr.bf16.mxu0 0
    %3440 = vmatpush1.bf16.msra.mxu0 %v3437
    %3441 = vmatprep.subr.bf16.mxu0 0
    %3442 = vmatpush1.bf16.msra.mxu0 0
    %3443 = vmatprep.subr.bf16.mxu0 0
    %3444 = vmatpush1.bf16.msra.mxu0 0
    %3445 = vmatprep.subr.bf16.mxu0 0
    %3446 = vmatpush1.bf16.msra.mxu0 0
    %3447 = vmatprep.subr.bf16.mxu0 0
    %3448 = vmatpush1.bf16.msra.mxu0 0
    %3449 = vmatprep.subr.bf16.mxu0 0
    %3450 = vmatpush1.bf16.msra.mxu0 0
    %3451 = vmatprep.subr.bf16.mxu0 0
    %3452 = vmatpush1.bf16.msra.mxu0 0
    %3453 = vmatprep.subr.bf16.mxu0 0
    %3454 = vmatpush1.bf16.msra.mxu0 0
    %3455 = vmatprep.subr.bf16.mxu0 0
    %3456 = vmatpush1.bf16.msra.mxu0 0
    %3457 = vmatprep.subr.bf16.mxu0 0
    %3458 = vmatpush1.bf16.msra.mxu0 0
    %3459 = vmatprep.subr.bf16.mxu0 0
    %3460 = vmatpush1.bf16.msra.mxu0 0
    %3461 = vmatprep.subr.bf16.mxu0 0
    %3462 = vmatpush1.bf16.msra.mxu0 0
    %3463 = vmatprep.subr.bf16.mxu0 0
    %3464 = vmatpush1.bf16.msra.mxu0 0
    %3465 = vmatprep.subr.bf16.mxu0 0
    %3466 = vmatpush1.bf16.msra.mxu0 0
    %3467 = vmatprep.subr.bf16.mxu0 0
    %3468 = vmatpush1.bf16.msra.mxu0 0
    %3469 = vmatprep.subr.bf16.mxu0 0
    %3470 = vmatpush1.bf16.msra.mxu0 0
    %3471 = vmatprep.mubr.bf16.mxu0 0
    %3472 = vmatmul.mubr.bf16.gmra.mrb[0].mxu0 %v251
    %v3473 = vpop.f32.mrb[0].mxu0
    %v3474 = vadd.f32 0.0, %v3473
    %v3475 = vpop.f32.mrb[0].mxu0
    %v3476 = vpop.f32.mrb[0].mxu0
    %v3477 = vpop.f32.mrb[0].mxu0
    %3478 = vdwg.mxu0
    %v3480 = vsel %vm253, %v2917, 0
    %3482 = vmatprep.subr.bf16.mxu0 0
    %3483 = vmatpush1.bf16.msra.mxu0 %v3480
    %3484 = vmatprep.subr.bf16.mxu0 0
    %3485 = vmatpush1.bf16.msra.mxu0 0
    %3486 = vmatprep.subr.bf16.mxu0 0
    %3487 = vmatpush1.bf16.msra.mxu0 0
    %3488 = vmatprep.subr.bf16.mxu0 0
    %3489 = vmatpush1.bf16.msra.mxu0 0
    %3490 = vmatprep.subr.bf16.mxu0 0
    %3491 = vmatpush1.bf16.msra.mxu0 0
    %3492 = vmatprep.subr.bf16.mxu0 0
    %3493 = vmatpush1.bf16.msra.mxu0 0
    %3494 = vmatprep.subr.bf16.mxu0 0
    %3495 = vmatpush1.bf16.msra.mxu0 0
    %3496 = vmatprep.subr.bf16.mxu0 0
    %3497 = vmatpush1.bf16.msra.mxu0 0
    %3498 = vmatprep.subr.bf16.mxu0 0
    %3499 = vmatpush1.bf16.msra.mxu0 0
    %3500 = vmatprep.subr.bf16.mxu0 0
    %3501 = vmatpush1.bf16.msra.mxu0 0
    %3502 = vmatprep.subr.bf16.mxu0 0
    %3503 = vmatpush1.bf16.msra.mxu0 0
    %3504 = vmatprep.subr.bf16.mxu0 0
    %3505 = vmatpush1.bf16.msra.mxu0 0
    %3506 = vmatprep.subr.bf16.mxu0 0
    %3507 = vmatpush1.bf16.msra.mxu0 0
    %3508 = vmatprep.subr.bf16.mxu0 0
    %3509 = vmatpush1.bf16.msra.mxu0 0
    %3510 = vmatprep.subr.bf16.mxu0 0
    %3511 = vmatpush1.bf16.msra.mxu0 0
    %3512 = vmatprep.subr.bf16.mxu0 0
    %3513 = vmatpush1.bf16.msra.mxu0 0
    %3514 = vmatprep.mubr.bf16.mxu0 0
    %3515 = vmatmul.mubr.bf16.gmra.mrb[0].mxu0 %v251
    %v3516 = vpop.f32.mrb[0].mxu0
    %v3517 = vadd.f32 0.0, %v3516
    %v3518 = vpop.f32.mrb[0].mxu0
    %v3519 = vpop.f32.mrb[0].mxu0
    %v3520 = vpop.f32.mrb[0].mxu0
    %3521 = vdwg.mxu0
    %v3523 = vsel %vm253, %v2918, 0
    %3525 = vmatprep.subr.bf16.mxu0 0
    %3526 = vmatpush1.bf16.msra.mxu0 %v3523
    %3527 = vmatprep.subr.bf16.mxu0 0
    %3528 = vmatpush1.bf16.msra.mxu0 0
    %3529 = vmatprep.subr.bf16.mxu0 0
    %3530 = vmatpush1.bf16.msra.mxu0 0
    %3531 = vmatprep.subr.bf16.mxu0 0
    %3532 = vmatpush1.bf16.msra.mxu0 0
    %3533 = vmatprep.subr.bf16.mxu0 0
    %3534 = vmatpush1.bf16.msra.mxu0 0
    %3535 = vmatprep.subr.bf16.mxu0 0
    %3536 = vmatpush1.bf16.msra.mxu0 0
    %3537 = vmatprep.subr.bf16.mxu0 0
    %3538 = vmatpush1.bf16.msra.mxu0 0
    %3539 = vmatprep.subr.bf16.mxu0 0
    %3540 = vmatpush1.bf16.msra.mxu0 0
    %3541 = vmatprep.subr.bf16.mxu0 0
    %3542 = vmatpush1.bf16.msra.mxu0 0
    %3543 = vmatprep.subr.bf16.mxu0 0
    %3544 = vmatpush1.bf16.msra.mxu0 0
    %3545 = vmatprep.subr.bf16.mxu0 0
    %3546 = vmatpush1.bf16.msra.mxu0 0
    %3547 = vmatprep.subr.bf16.mxu0 0
    %3548 = vmatpush1.bf16.msra.mxu0 0
    %3549 = vmatprep.subr.bf16.mxu0 0
    %3550 = vmatpush1.bf16.msra.mxu0 0
    %3551 = vmatprep.subr.bf16.mxu0 0
    %3552 = vmatpush1.bf16.msra.mxu0 0
    %3553 = vmatprep.subr.bf16.mxu0 0
    %3554 = vmatpush1.bf16.msra.mxu0 0
    %3555 = vmatprep.subr.bf16.mxu0 0
    %3556 = vmatpush1.bf16.msra.mxu0 0
    %3557 = vmatprep.mubr.bf16.mxu0 0
    %3558 = vmatmul.mubr.bf16.gmra.mrb[0].mxu0 %v251
    %v3559 = vpop.f32.mrb[0].mxu0
    %v3560 = vadd.f32 0.0, %v3559
    %v3561 = vpop.f32.mrb[0].mxu0
    %v3562 = vpop.f32.mrb[0].mxu0
    %v3563 = vpop.f32.mrb[0].mxu0
    %3564 = vdwg.mxu0
    %v3566 = vsel %vm253, %v2919, 0
    %3568 = vmatprep.subr.bf16.mxu0 0
    %3569 = vmatpush1.bf16.msra.mxu0 %v3566
    %3570 = vmatprep.subr.bf16.mxu0 0
    %3571 = vmatpush1.bf16.msra.mxu0 0
    %3572 = vmatprep.subr.bf16.mxu0 0
    %3573 = vmatpush1.bf16.msra.mxu0 0
    %3574 = vmatprep.subr.bf16.mxu0 0
    %3575 = vmatpush1.bf16.msra.mxu0 0
    %3576 = vmatprep.subr.bf16.mxu0 0
    %3577 = vmatpush1.bf16.msra.mxu0 0
    %3578 = vmatprep.subr.bf16.mxu0 0
    %3579 = vmatpush1.bf16.msra.mxu0 0
    %3580 = vmatprep.subr.bf16.mxu0 0
    %3581 = vmatpush1.bf16.msra.mxu0 0
    %3582 = vmatprep.subr.bf16.mxu0 0
    %3583 = vmatpush1.bf16.msra.mxu0 0
    %3584 = vmatprep.subr.bf16.mxu0 0
    %3585 = vmatpush1.bf16.msra.mxu0 0
    %3586 = vmatprep.subr.bf16.mxu0 0
    %3587 = vmatpush1.bf16.msra.mxu0 0
    %3588 = vmatprep.subr.bf16.mxu0 0
    %3589 = vmatpush1.bf16.msra.mxu0 0
    %3590 = vmatprep.subr.bf16.mxu0 0
    %3591 = vmatpush1.bf16.msra.mxu0 0
    %3592 = vmatprep.subr.bf16.mxu0 0
    %3593 = vmatpush1.bf16.msra.mxu0 0
    %3594 = vmatprep.subr.bf16.mxu0 0
    %3595 = vmatpush1.bf16.msra.mxu0 0
    %3596 = vmatprep.subr.bf16.mxu0 0
    %3597 = vmatpush1.bf16.msra.mxu0 0
    %3598 = vmatprep.subr.bf16.mxu0 0
    %3599 = vmatpush1.bf16.msra.mxu0 0
    %3600 = vmatprep.mubr.bf16.mxu0 0
    %3601 = vmatmul.mubr.bf16.gmra.mrb[0].mxu0 %v251
    %v3602 = vpop.f32.mrb[0].mxu0
    %v3603 = vadd.f32 0.0, %v3602
    %v3604 = vpop.f32.mrb[0].mxu0
    %v3605 = vpop.f32.mrb[0].mxu0
    %v3606 = vpop.f32.mrb[0].mxu0
    %3607 = vdwg.mxu0
    %v3609 = vlaneseq
    %v3610 = vshrl.u32 %v3609, 7
    %v3611 = vsub.s32 0, %v3610
    %v3612 = vrot.slane %v60, %v3611
    %v3614 = vadd.f32 %v2958, %v3612
    %v3615 = vadd.f32 %v3001, %v3612
    %v3616 = vadd.f32 %v3044, %v3612
    %v3617 = vadd.f32 %v3087, %v3612
    %v3618 = vadd.f32 %v3130, %v3612
    %v3619 = vadd.f32 %v3173, %v3612
    %v3620 = vadd.f32 %v3216, %v3612
    %v3621 = vadd.f32 %v3259, %v3612
    %v3622 = vadd.f32 %v3302, %v3612
    %v3623 = vadd.f32 %v3345, %v3612
    %v3624 = vadd.f32 %v3388, %v3612
    %v3625 = vadd.f32 %v3431, %v3612
    %v3626 = vadd.f32 %v3474, %v3612
    %v3627 = vadd.f32 %v3517, %v3612
    %v3628 = vadd.f32 %v3560, %v3612
    %v3629 = vadd.f32 %v3603, %v3612
    %v3630 = vmax.f32 %v3614, 0.0
    %v3631 = vmax.f32 %v3615, 0.0
    %v3632 = vmax.f32 %v3616, 0.0
    %v3633 = vmax.f32 %v3617, 0.0
    %v3634 = vmax.f32 %v3618, 0.0
    %v3635 = vmax.f32 %v3619, 0.0
    %v3636 = vmax.f32 %v3620, 0.0
    %v3637 = vmax.f32 %v3621, 0.0
    %v3638 = vmax.f32 %v3622, 0.0
    %v3639 = vmax.f32 %v3623, 0.0
    %v3640 = vmax.f32 %v3624, 0.0
    %v3641 = vmax.f32 %v3625, 0.0
    %v3642 = vmax.f32 %v3626, 0.0
    %v3643 = vmax.f32 %v3627, 0.0
    %v3644 = vmax.f32 %v3628, 0.0
    %v3645 = vmax.f32 %v3629, 0.0
    %v3646 = vpack.c.bf16 %v3631, %v3630
    %v3647 = vpack.c.bf16 %v3633, %v3632
    %v3648 = vpack.c.bf16 %v3635, %v3634
    %v3649 = vpack.c.bf16 %v3637, %v3636
    %v3650 = vpack.c.bf16 %v3639, %v3638
    %v3651 = vpack.c.bf16 %v3641, %v3640
    %v3652 = vpack.c.bf16 %v3643, %v3642
    %v3653 = vpack.c.bf16 %v3645, %v3644
    %v3658 = vunpack.c.l.b16 %v54
    %v3659 = vunpack.c.l.b16 %v55
    %v3660 = vunpack.c.l.b16 %v56
    %v3661 = vunpack.c.l.b16 %v57
    %v3662 = vpack.c.b16 %v3659, %v3658
    %v3663 = vpack.c.b16 %v3661, %v3660
    %v3667 = vsel %vm1000, %v3646, 0
    %v3670 = vsel %vm1000, %v3647, 0
    %v3673 = vsel %vm1000, %v3648, 0
    %v3676 = vsel %vm1000, %v3649, 0
    %v3679 = vsel %vm1000, %v3650, 0
    %v3682 = vsel %vm1000, %v3651, 0
    %v3685 = vsel %vm1000, %v3652, 0
    %v3688 = vsel %vm1000, %v3653, 0
    %3690 = vmatprep.subr.bf16.mxu0 0
    %3691 = vmatpush1.bf16.msra.mxu0 %v3662
    %3692 = vmatprep.subr.bf16.mxu0 0
    %3693 = vmatpush1.bf16.msra.mxu0 %v3663
    %3694 = vmatprep.subr.bf16.mxu0 0
    %3695 = vmatpush1.bf16.msra.mxu0 0
    %3696 = vmatprep.subr.bf16.mxu0 0
    %3697 = vmatpush1.bf16.msra.mxu0 0
    %3698 = vmatprep.subr.bf16.mxu0 0
    %3699 = vmatpush1.bf16.msra.mxu0 0
    %3700 = vmatprep.subr.bf16.mxu0 0
    %3701 = vmatpush1.bf16.msra.mxu0 0
    %3702 = vmatprep.subr.bf16.mxu0 0
    %3703 = vmatpush1.bf16.msra.mxu0 0
    %3704 = vmatprep.subr.bf16.mxu0 0
    %3705 = vmatpush1.bf16.msra.mxu0 0
    %3706 = vmatprep.subr.bf16.mxu0 0
    %3707 = vmatpush1.bf16.msra.mxu0 0
    %3708 = vmatprep.subr.bf16.mxu0 0
    %3709 = vmatpush1.bf16.msra.mxu0 0
    %3710 = vmatprep.subr.bf16.mxu0 0
    %3711 = vmatpush1.bf16.msra.mxu0 0
    %3712 = vmatprep.subr.bf16.mxu0 0
    %3713 = vmatpush1.bf16.msra.mxu0 0
    %3714 = vmatprep.subr.bf16.mxu0 0
    %3715 = vmatpush1.bf16.msra.mxu0 0
    %3716 = vmatprep.subr.bf16.mxu0 0
    %3717 = vmatpush1.bf16.msra.mxu0 0
    %3718 = vmatprep.subr.bf16.mxu0 0
    %3719 = vmatpush1.bf16.msra.mxu0 0
    %3720 = vmatprep.subr.bf16.mxu0 0
    %3721 = vmatpush1.bf16.msra.mxu0 0
    %3722 = vmatprep.mubr.bf16.mxu0 0
    %3723 = vmatmul.mubr.bf16.gmra.mrb[0].mxu0 %v3667
    %v3724 = vpop.f32.mrb[0].mxu0
    %v3725 = vadd.f32 0.0, %v3724
    %v3726 = vpop.f32.mrb[0].mxu0
    %v3727 = vpop.f32.mrb[0].mxu0
    %v3728 = vadd.f32 0.0, %v3727
    %v3729 = vpop.f32.mrb[0].mxu0
    %3730 = vmatprep.mubr.bf16.mxu0 0
    %3731 = vmatmul.mubr.bf16.gmra.mrb[0].mxu0 %v3670
    %v3732 = vpop.f32.mrb[0].mxu0
    %v3733 = vadd.f32 0.0, %v3732
    %v3734 = vpop.f32.mrb[0].mxu0
    %v3735 = vpop.f32.mrb[0].mxu0
    %v3736 = vadd.f32 0.0, %v3735
    %v3737 = vpop.f32.mrb[0].mxu0
    %3738 = vmatprep.mubr.bf16.mxu0 0
    %3739 = vmatmul.mubr.bf16.gmra.mrb[0].mxu0 %v3673
    %v3740 = vpop.f32.mrb[0].mxu0
    %v3741 = vadd.f32 0.0, %v3740
    %v3742 = vpop.f32.mrb[0].mxu0
    %v3743 = vpop.f32.mrb[0].mxu0
    %v3744 = vadd.f32 0.0, %v3743
    %v3745 = vpop.f32.mrb[0].mxu0
    %3746 = vmatprep.mubr.bf16.mxu0 0
    %3747 = vmatmul.mubr.bf16.gmra.mrb[0].mxu0 %v3676
    %v3748 = vpop.f32.mrb[0].mxu0
    %v3749 = vadd.f32 0.0, %v3748
    %v3750 = vpop.f32.mrb[0].mxu0
    %v3751 = vpop.f32.mrb[0].mxu0
    %v3752 = vadd.f32 0.0, %v3751
    %v3753 = vpop.f32.mrb[0].mxu0
    %3754 = vmatprep.mubr.bf16.mxu0 0
    %3755 = vmatmul.mubr.bf16.gmra.mrb[0].mxu0 %v3679
    %v3756 = vpop.f32.mrb[0].mxu0
    %v3757 = vadd.f32 0.0, %v3756
    %v3758 = vpop.f32.mrb[0].mxu0
    %v3759 = vpop.f32.mrb[0].mxu0
    %v3760 = vadd.f32 0.0, %v3759
    %v3761 = vpop.f32.mrb[0].mxu0
    %3762 = vmatprep.mubr.bf16.mxu0 0
    %3763 = vmatmul.mubr.bf16.gmra.mrb[0].mxu0 %v3682
    %v3764 = vpop.f32.mrb[0].mxu0
    %v3765 = vadd.f32 0.0, %v3764
    %v3766 = vpop.f32.mrb[0].mxu0
    %v3767 = vpop.f32.mrb[0].mxu0
    %v3768 = vadd.f32 0.0, %v3767
    %v3769 = vpop.f32.mrb[0].mxu0
    %3770 = vmatprep.mubr.bf16.mxu0 0
    %3771 = vmatmul.mubr.bf16.gmra.mrb[0].mxu0 %v3685
    %v3772 = vpop.f32.mrb[0].mxu0
    %v3773 = vadd.f32 0.0, %v3772
    %v3774 = vpop.f32.mrb[0].mxu0
    %v3775 = vpop.f32.mrb[0].mxu0
    %v3776 = vadd.f32 0.0, %v3775
    %v3777 = vpop.f32.mrb[0].mxu0
    %3778 = vmatprep.mubr.bf16.mxu0 0
    %3779 = vmatmul.mubr.bf16.gmra.mrb[0].mxu0 %v3688
    %v3780 = vpop.f32.mrb[0].mxu0
    %v3781 = vadd.f32 0.0, %v3780
    %v3782 = vpop.f32.mrb[0].mxu0
    %v3783 = vpop.f32.mrb[0].mxu0
    %v3784 = vadd.f32 0.0, %v3783
    %v3785 = vpop.f32.mrb[0].mxu0
    %3786 = vdwg.mxu0
    %v3787 = vpack.c.bf16 %v3725, %v3725
    %v3788 = vpack.c.bf16 %v3728, %v3728
    %v3789 = vpack.c.bf16 %v3733, %v3733
    %v3790 = vpack.c.bf16 %v3736, %v3736
    %v3791 = vpack.c.bf16 %v3741, %v3741
    %v3792 = vpack.c.bf16 %v3744, %v3744
    %v3793 = vpack.c.bf16 %v3749, %v3749
    %v3794 = vpack.c.bf16 %v3752, %v3752
    %v3795 = vpack.c.bf16 %v3757, %v3757
    %v3796 = vpack.c.bf16 %v3760, %v3760
    %v3797 = vpack.c.bf16 %v3765, %v3765
    %v3798 = vpack.c.bf16 %v3768, %v3768
    %v3799 = vpack.c.bf16 %v3773, %v3773
    %v3800 = vpack.c.bf16 %v3776, %v3776
    %v3801 = vpack.c.bf16 %v3781, %v3781
    %v3802 = vpack.c.bf16 %v3784, %v3784
    %v3804 = vsel %vm253, %v3787, 0
    %3806 = vmatprep.subr.bf16.mxu0 0
    %3807 = vmatpush1.bf16.msra.mxu0 %v3804
    %3808 = vmatprep.subr.bf16.mxu0 0
    %3809 = vmatpush1.bf16.msra.mxu0 0
    %3810 = vmatprep.subr.bf16.mxu0 0
    %3811 = vmatpush1.bf16.msra.mxu0 0
    %3812 = vmatprep.subr.bf16.mxu0 0
    %3813 = vmatpush1.bf16.msra.mxu0 0
    %3814 = vmatprep.subr.bf16.mxu0 0
    %3815 = vmatpush1.bf16.msra.mxu0 0
    %3816 = vmatprep.subr.bf16.mxu0 0
    %3817 = vmatpush1.bf16.msra.mxu0 0
    %3818 = vmatprep.subr.bf16.mxu0 0
    %3819 = vmatpush1.bf16.msra.mxu0 0
    %3820 = vmatprep.subr.bf16.mxu0 0
    %3821 = vmatpush1.bf16.msra.mxu0 0
    %3822 = vmatprep.subr.bf16.mxu0 0
    %3823 = vmatpush1.bf16.msra.mxu0 0
    %3824 = vmatprep.subr.bf16.mxu0 0
    %3825 = vmatpush1.bf16.msra.mxu0 0
    %3826 = vmatprep.subr.bf16.mxu0 0
    %3827 = vmatpush1.bf16.msra.mxu0 0
    %3828 = vmatprep.subr.bf16.mxu0 0
    %3829 = vmatpush1.bf16.msra.mxu0 0
    %3830 = vmatprep.subr.bf16.mxu0 0
    %3831 = vmatpush1.bf16.msra.mxu0 0
    %3832 = vmatprep.subr.bf16.mxu0 0
    %3833 = vmatpush1.bf16.msra.mxu0 0
    %3834 = vmatprep.subr.bf16.mxu0 0
    %3835 = vmatpush1.bf16.msra.mxu0 0
    %3836 = vmatprep.subr.bf16.mxu0 0
    %3837 = vmatpush1.bf16.msra.mxu0 0
    %3838 = vmatprep.mubr.bf16.mxu0 0
    %3839 = vmatmul.mubr.bf16.gmra.mrb[0].mxu0 %v251
    %v3840 = vpop.f32.mrb[0].mxu0
    %v3841 = vadd.f32 0.0, %v3840
    %v3842 = vpop.f32.mrb[0].mxu0
    %v3843 = vpop.f32.mrb[0].mxu0
    %v3844 = vpop.f32.mrb[0].mxu0
    %3845 = vdwg.mxu0
    %v3847 = vsel %vm253, %v3788, 0
    %3849 = vmatprep.subr.bf16.mxu0 0
    %3850 = vmatpush1.bf16.msra.mxu0 %v3847
    %3851 = vmatprep.subr.bf16.mxu0 0
    %3852 = vmatpush1.bf16.msra.mxu0 0
    %3853 = vmatprep.subr.bf16.mxu0 0
    %3854 = vmatpush1.bf16.msra.mxu0 0
    %3855 = vmatprep.subr.bf16.mxu0 0
    %3856 = vmatpush1.bf16.msra.mxu0 0
    %3857 = vmatprep.subr.bf16.mxu0 0
    %3858 = vmatpush1.bf16.msra.mxu0 0
    %3859 = vmatprep.subr.bf16.mxu0 0
    %3860 = vmatpush1.bf16.msra.mxu0 0
    %3861 = vmatprep.subr.bf16.mxu0 0
    %3862 = vmatpush1.bf16.msra.mxu0 0
    %3863 = vmatprep.subr.bf16.mxu0 0
    %3864 = vmatpush1.bf16.msra.mxu0 0
    %3865 = vmatprep.subr.bf16.mxu0 0
    %3866 = vmatpush1.bf16.msra.mxu0 0
    %3867 = vmatprep.subr.bf16.mxu0 0
    %3868 = vmatpush1.bf16.msra.mxu0 0
    %3869 = vmatprep.subr.bf16.mxu0 0
    %3870 = vmatpush1.bf16.msra.mxu0 0
    %3871 = vmatprep.subr.bf16.mxu0 0
    %3872 = vmatpush1.bf16.msra.mxu0 0
    %3873 = vmatprep.subr.bf16.mxu0 0
    %3874 = vmatpush1.bf16.msra.mxu0 0
    %3875 = vmatprep.subr.bf16.mxu0 0
    %3876 = vmatpush1.bf16.msra.mxu0 0
    %3877 = vmatprep.subr.bf16.mxu0 0
    %3878 = vmatpush1.bf16.msra.mxu0 0
    %3879 = vmatprep.subr.bf16.mxu0 0
    %3880 = vmatpush1.bf16.msra.mxu0 0
    %3881 = vmatprep.mubr.bf16.mxu0 0
    %3882 = vmatmul.mubr.bf16.gmra.mrb[0].mxu0 %v251
    %v3883 = vpop.f32.mrb[0].mxu0
    %v3884 = vadd.f32 0.0, %v3883
    %v3885 = vpop.f32.mrb[0].mxu0
    %v3886 = vpop.f32.mrb[0].mxu0
    %v3887 = vpop.f32.mrb[0].mxu0
    %3888 = vdwg.mxu0
    %v3890 = vsel %vm253, %v3789, 0
    %3892 = vmatprep.subr.bf16.mxu0 0
    %3893 = vmatpush1.bf16.msra.mxu0 %v3890
    %3894 = vmatprep.subr.bf16.mxu0 0
    %3895 = vmatpush1.bf16.msra.mxu0 0
    %3896 = vmatprep.subr.bf16.mxu0 0
    %3897 = vmatpush1.bf16.msra.mxu0 0
    %3898 = vmatprep.subr.bf16.mxu0 0
    %3899 = vmatpush1.bf16.msra.mxu0 0
    %3900 = vmatprep.subr.bf16.mxu0 0
    %3901 = vmatpush1.bf16.msra.mxu0 0
    %3902 = vmatprep.subr.bf16.mxu0 0
    %3903 = vmatpush1.bf16.msra.mxu0 0
    %3904 = vmatprep.subr.bf16.mxu0 0
    %3905 = vmatpush1.bf16.msra.mxu0 0
    %3906 = vmatprep.subr.bf16.mxu0 0
    %3907 = vmatpush1.bf16.msra.mxu0 0
    %3908 = vmatprep.subr.bf16.mxu0 0
    %3909 = vmatpush1.bf16.msra.mxu0 0
    %3910 = vmatprep.subr.bf16.mxu0 0
    %3911 = vmatpush1.bf16.msra.mxu0 0
    %3912 = vmatprep.subr.bf16.mxu0 0
    %3913 = vmatpush1.bf16.msra.mxu0 0
    %3914 = vmatprep.subr.bf16.mxu0 0
    %3915 = vmatpush1.bf16.msra.mxu0 0
    %3916 = vmatprep.subr.bf16.mxu0 0
    %3917 = vmatpush1.bf16.msra.mxu0 0
    %3918 = vmatprep.subr.bf16.mxu0 0
    %3919 = vmatpush1.bf16.msra.mxu0 0
    %3920 = vmatprep.subr.bf16.mxu0 0
    %3921 = vmatpush1.bf16.msra.mxu0 0
    %3922 = vmatprep.subr.bf16.mxu0 0
    %3923 = vmatpush1.bf16.msra.mxu0 0
    %3924 = vmatprep.mubr.bf16.mxu0 0
    %3925 = vmatmul.mubr.bf16.gmra.mrb[0].mxu0 %v251
    %v3926 = vpop.f32.mrb[0].mxu0
    %v3927 = vadd.f32 0.0, %v3926
    %v3928 = vpop.f32.mrb[0].mxu0
    %v3929 = vpop.f32.mrb[0].mxu0
    %v3930 = vpop.f32.mrb[0].mxu0
    %3931 = vdwg.mxu0
    %v3933 = vsel %vm253, %v3790, 0
    %3935 = vmatprep.subr.bf16.mxu0 0
    %3936 = vmatpush1.bf16.msra.mxu0 %v3933
    %3937 = vmatprep.subr.bf16.mxu0 0
    %3938 = vmatpush1.bf16.msra.mxu0 0
    %3939 = vmatprep.subr.bf16.mxu0 0
    %3940 = vmatpush1.bf16.msra.mxu0 0
    %3941 = vmatprep.subr.bf16.mxu0 0
    %3942 = vmatpush1.bf16.msra.mxu0 0
    %3943 = vmatprep.subr.bf16.mxu0 0
    %3944 = vmatpush1.bf16.msra.mxu0 0
    %3945 = vmatprep.subr.bf16.mxu0 0
    %3946 = vmatpush1.bf16.msra.mxu0 0
    %3947 = vmatprep.subr.bf16.mxu0 0
    %3948 = vmatpush1.bf16.msra.mxu0 0
    %3949 = vmatprep.subr.bf16.mxu0 0
    %3950 = vmatpush1.bf16.msra.mxu0 0
    %3951 = vmatprep.subr.bf16.mxu0 0
    %3952 = vmatpush1.bf16.msra.mxu0 0
    %3953 = vmatprep.subr.bf16.mxu0 0
    %3954 = vmatpush1.bf16.msra.mxu0 0
    %3955 = vmatprep.subr.bf16.mxu0 0
    %3956 = vmatpush1.bf16.msra.mxu0 0
    %3957 = vmatprep.subr.bf16.mxu0 0
    %3958 = vmatpush1.bf16.msra.mxu0 0
    %3959 = vmatprep.subr.bf16.mxu0 0
    %3960 = vmatpush1.bf16.msra.mxu0 0
    %3961 = vmatprep.subr.bf16.mxu0 0
    %3962 = vmatpush1.bf16.msra.mxu0 0
    %3963 = vmatprep.subr.bf16.mxu0 0
    %3964 = vmatpush1.bf16.msra.mxu0 0
    %3965 = vmatprep.subr.bf16.mxu0 0
    %3966 = vmatpush1.bf16.msra.mxu0 0
    %3967 = vmatprep.mubr.bf16.mxu0 0
    %3968 = vmatmul.mubr.bf16.gmra.mrb[0].mxu0 %v251
    %v3969 = vpop.f32.mrb[0].mxu0
    %v3970 = vadd.f32 0.0, %v3969
    %v3971 = vpop.f32.mrb[0].mxu0
    %v3972 = vpop.f32.mrb[0].mxu0
    %v3973 = vpop.f32.mrb[0].mxu0
    %3974 = vdwg.mxu0
    %v3976 = vsel %vm253, %v3791, 0
    %3978 = vmatprep.subr.bf16.mxu0 0
    %3979 = vmatpush1.bf16.msra.mxu0 %v3976
    %3980 = vmatprep.subr.bf16.mxu0 0
    %3981 = vmatpush1.bf16.msra.mxu0 0
    %3982 = vmatprep.subr.bf16.mxu0 0
    %3983 = vmatpush1.bf16.msra.mxu0 0
    %3984 = vmatprep.subr.bf16.mxu0 0
    %3985 = vmatpush1.bf16.msra.mxu0 0
    %3986 = vmatprep.subr.bf16.mxu0 0
    %3987 = vmatpush1.bf16.msra.mxu0 0
    %3988 = vmatprep.subr.bf16.mxu0 0
    %3989 = vmatpush1.bf16.msra.mxu0 0
    %3990 = vmatprep.subr.bf16.mxu0 0
    %3991 = vmatpush1.bf16.msra.mxu0 0
    %3992 = vmatprep.subr.bf16.mxu0 0
    %3993 = vmatpush1.bf16.msra.mxu0 0
    %3994 = vmatprep.subr.bf16.mxu0 0
    %3995 = vmatpush1.bf16.msra.mxu0 0
    %3996 = vmatprep.subr.bf16.mxu0 0
    %3997 = vmatpush1.bf16.msra.mxu0 0
    %3998 = vmatprep.subr.bf16.mxu0 0
    %3999 = vmatpush1.bf16.msra.mxu0 0
    %4000 = vmatprep.subr.bf16.mxu0 0
    %4001 = vmatpush1.bf16.msra.mxu0 0
    %4002 = vmatprep.subr.bf16.mxu0 0
    %4003 = vmatpush1.bf16.msra.mxu0 0
    %4004 = vmatprep.subr.bf16.mxu0 0
    %4005 = vmatpush1.bf16.msra.mxu0 0
    %4006 = vmatprep.subr.bf16.mxu0 0
    %4007 = vmatpush1.bf16.msra.mxu0 0
    %4008 = vmatprep.subr.bf16.mxu0 0
    %4009 = vmatpush1.bf16.msra.mxu0 0
    %4010 = vmatprep.mubr.bf16.mxu0 0
    %4011 = vmatmul.mubr.bf16.gmra.mrb[0].mxu0 %v251
    %v4012 = vpop.f32.mrb[0].mxu0
    %v4013 = vadd.f32 0.0, %v4012
    %v4014 = vpop.f32.mrb[0].mxu0
    %v4015 = vpop.f32.mrb[0].mxu0
    %v4016 = vpop.f32.mrb[0].mxu0
    %4017 = vdwg.mxu0
    %v4019 = vsel %vm253, %v3792, 0
    %4021 = vmatprep.subr.bf16.mxu0 0
    %4022 = vmatpush1.bf16.msra.mxu0 %v4019
    %4023 = vmatprep.subr.bf16.mxu0 0
    %4024 = vmatpush1.bf16.msra.mxu0 0
    %4025 = vmatprep.subr.bf16.mxu0 0
    %4026 = vmatpush1.bf16.msra.mxu0 0
    %4027 = vmatprep.subr.bf16.mxu0 0
    %4028 = vmatpush1.bf16.msra.mxu0 0
    %4029 = vmatprep.subr.bf16.mxu0 0
    %4030 = vmatpush1.bf16.msra.mxu0 0
    %4031 = vmatprep.subr.bf16.mxu0 0
    %4032 = vmatpush1.bf16.msra.mxu0 0
    %4033 = vmatprep.subr.bf16.mxu0 0
    %4034 = vmatpush1.bf16.msra.mxu0 0
    %4035 = vmatprep.subr.bf16.mxu0 0
    %4036 = vmatpush1.bf16.msra.mxu0 0
    %4037 = vmatprep.subr.bf16.mxu0 0
    %4038 = vmatpush1.bf16.msra.mxu0 0
    %4039 = vmatprep.subr.bf16.mxu0 0
    %4040 = vmatpush1.bf16.msra.mxu0 0
    %4041 = vmatprep.subr.bf16.mxu0 0
    %4042 = vmatpush1.bf16.msra.mxu0 0
    %4043 = vmatprep.subr.bf16.mxu0 0
    %4044 = vmatpush1.bf16.msra.mxu0 0
    %4045 = vmatprep.subr.bf16.mxu0 0
    %4046 = vmatpush1.bf16.msra.mxu0 0
    %4047 = vmatprep.subr.bf16.mxu0 0
    %4048 = vmatpush1.bf16.msra.mxu0 0
    %4049 = vmatprep.subr.bf16.mxu0 0
    %4050 = vmatpush1.bf16.msra.mxu0 0
    %4051 = vmatprep.subr.bf16.mxu0 0
    %4052 = vmatpush1.bf16.msra.mxu0 0
    %4053 = vmatprep.mubr.bf16.mxu0 0
    %4054 = vmatmul.mubr.bf16.gmra.mrb[0].mxu0 %v251
    %v4055 = vpop.f32.mrb[0].mxu0
    %v4056 = vadd.f32 0.0, %v4055
    %v4057 = vpop.f32.mrb[0].mxu0
    %v4058 = vpop.f32.mrb[0].mxu0
    %v4059 = vpop.f32.mrb[0].mxu0
    %4060 = vdwg.mxu0
    %v4062 = vsel %vm253, %v3793, 0
    %4064 = vmatprep.subr.bf16.mxu0 0
    %4065 = vmatpush1.bf16.msra.mxu0 %v4062
    %4066 = vmatprep.subr.bf16.mxu0 0
    %4067 = vmatpush1.bf16.msra.mxu0 0
    %4068 = vmatprep.subr.bf16.mxu0 0
    %4069 = vmatpush1.bf16.msra.mxu0 0
    %4070 = vmatprep.subr.bf16.mxu0 0
    %4071 = vmatpush1.bf16.msra.mxu0 0
    %4072 = vmatprep.subr.bf16.mxu0 0
    %4073 = vmatpush1.bf16.msra.mxu0 0
    %4074 = vmatprep.subr.bf16.mxu0 0
    %4075 = vmatpush1.bf16.msra.mxu0 0
    %4076 = vmatprep.subr.bf16.mxu0 0
    %4077 = vmatpush1.bf16.msra.mxu0 0
    %4078 = vmatprep.subr.bf16.mxu0 0
    %4079 = vmatpush1.bf16.msra.mxu0 0
    %4080 = vmatprep.subr.bf16.mxu0 0
    %4081 = vmatpush1.bf16.msra.mxu0 0
    %4082 = vmatprep.subr.bf16.mxu0 0
    %4083 = vmatpush1.bf16.msra.mxu0 0
    %4084 = vmatprep.subr.bf16.mxu0 0
    %4085 = vmatpush1.bf16.msra.mxu0 0
    %4086 = vmatprep.subr.bf16.mxu0 0
    %4087 = vmatpush1.bf16.msra.mxu0 0
    %4088 = vmatprep.subr.bf16.mxu0 0
    %4089 = vmatpush1.bf16.msra.mxu0 0
    %4090 = vmatprep.subr.bf16.mxu0 0
    %4091 = vmatpush1.bf16.msra.mxu0 0
    %4092 = vmatprep.subr.bf16.mxu0 0
    %4093 = vmatpush1.bf16.msra.mxu0 0
    %4094 = vmatprep.subr.bf16.mxu0 0
    %4095 = vmatpush1.bf16.msra.mxu0 0
    %4096 = vmatprep.mubr.bf16.mxu0 0
    %4097 = vmatmul.mubr.bf16.gmra.mrb[0].mxu0 %v251
    %v4098 = vpop.f32.mrb[0].mxu0
    %v4099 = vadd.f32 0.0, %v4098
    %v4100 = vpop.f32.mrb[0].mxu0
    %v4101 = vpop.f32.mrb[0].mxu0
    %v4102 = vpop.f32.mrb[0].mxu0
    %4103 = vdwg.mxu0
    %v4105 = vsel %vm253, %v3794, 0
    %4107 = vmatprep.subr.bf16.mxu0 0
    %4108 = vmatpush1.bf16.msra.mxu0 %v4105
    %4109 = vmatprep.subr.bf16.mxu0 0
    %4110 = vmatpush1.bf16.msra.mxu0 0
    %4111 = vmatprep.subr.bf16.mxu0 0
    %4112 = vmatpush1.bf16.msra.mxu0 0
    %4113 = vmatprep.subr.bf16.mxu0 0
    %4114 = vmatpush1.bf16.msra.mxu0 0
    %4115 = vmatprep.subr.bf16.mxu0 0
    %4116 = vmatpush1.bf16.msra.mxu0 0
    %4117 = vmatprep.subr.bf16.mxu0 0
    %4118 = vmatpush1.bf16.msra.mxu0 0
    %4119 = vmatprep.subr.bf16.mxu0 0
    %4120 = vmatpush1.bf16.msra.mxu0 0
    %4121 = vmatprep.subr.bf16.mxu0 0
    %4122 = vmatpush1.bf16.msra.mxu0 0
    %4123 = vmatprep.subr.bf16.mxu0 0
    %4124 = vmatpush1.bf16.msra.mxu0 0
    %4125 = vmatprep.subr.bf16.mxu0 0
    %4126 = vmatpush1.bf16.msra.mxu0 0
    %4127 = vmatprep.subr.bf16.mxu0 0
    %4128 = vmatpush1.bf16.msra.mxu0 0
    %4129 = vmatprep.subr.bf16.mxu0 0
    %4130 = vmatpush1.bf16.msra.mxu0 0
    %4131 = vmatprep.subr.bf16.mxu0 0
    %4132 = vmatpush1.bf16.msra.mxu0 0
    %4133 = vmatprep.subr.bf16.mxu0 0
    %4134 = vmatpush1.bf16.msra.mxu0 0
    %4135 = vmatprep.subr.bf16.mxu0 0
    %4136 = vmatpush1.bf16.msra.mxu0 0
    %4137 = vmatprep.subr.bf16.mxu0 0
    %4138 = vmatpush1.bf16.msra.mxu0 0
    %4139 = vmatprep.mubr.bf16.mxu0 0
    %4140 = vmatmul.mubr.bf16.gmra.mrb[0].mxu0 %v251
    %v4141 = vpop.f32.mrb[0].mxu0
    %v4142 = vadd.f32 0.0, %v4141
    %v4143 = vpop.f32.mrb[0].mxu0
    %v4144 = vpop.f32.mrb[0].mxu0
    %v4145 = vpop.f32.mrb[0].mxu0
    %4146 = vdwg.mxu0
    %v4148 = vsel %vm253, %v3795, 0
    %4150 = vmatprep.subr.bf16.mxu0 0
    %4151 = vmatpush1.bf16.msra.mxu0 %v4148
    %4152 = vmatprep.subr.bf16.mxu0 0
    %4153 = vmatpush1.bf16.msra.mxu0 0
    %4154 = vmatprep.subr.bf16.mxu0 0
    %4155 = vmatpush1.bf16.msra.mxu0 0
    %4156 = vmatprep.subr.bf16.mxu0 0
    %4157 = vmatpush1.bf16.msra.mxu0 0
    %4158 = vmatprep.subr.bf16.mxu0 0
    %4159 = vmatpush1.bf16.msra.mxu0 0
    %4160 = vmatprep.subr.bf16.mxu0 0
    %4161 = vmatpush1.bf16.msra.mxu0 0
    %4162 = vmatprep.subr.bf16.mxu0 0
    %4163 = vmatpush1.bf16.msra.mxu0 0
    %4164 = vmatprep.subr.bf16.mxu0 0
    %4165 = vmatpush1.bf16.msra.mxu0 0
    %4166 = vmatprep.subr.bf16.mxu0 0
    %4167 = vmatpush1.bf16.msra.mxu0 0
    %4168 = vmatprep.subr.bf16.mxu0 0
    %4169 = vmatpush1.bf16.msra.mxu0 0
    %4170 = vmatprep.subr.bf16.mxu0 0
    %4171 = vmatpush1.bf16.msra.mxu0 0
    %4172 = vmatprep.subr.bf16.mxu0 0
    %4173 = vmatpush1.bf16.msra.mxu0 0
    %4174 = vmatprep.subr.bf16.mxu0 0
    %4175 = vmatpush1.bf16.msra.mxu0 0
    %4176 = vmatprep.subr.bf16.mxu0 0
    %4177 = vmatpush1.bf16.msra.mxu0 0
    %4178 = vmatprep.subr.bf16.mxu0 0
    %4179 = vmatpush1.bf16.msra.mxu0 0
    %4180 = vmatprep.subr.bf16.mxu0 0
    %4181 = vmatpush1.bf16.msra.mxu0 0
    %4182 = vmatprep.mubr.bf16.mxu0 0
    %4183 = vmatmul.mubr.bf16.gmra.mrb[0].mxu0 %v251
    %v4184 = vpop.f32.mrb[0].mxu0
    %v4185 = vadd.f32 0.0, %v4184
    %v4186 = vpop.f32.mrb[0].mxu0
    %v4187 = vpop.f32.mrb[0].mxu0
    %v4188 = vpop.f32.mrb[0].mxu0
    %4189 = vdwg.mxu0
    %v4191 = vsel %vm253, %v3796, 0
    %4193 = vmatprep.subr.bf16.mxu0 0
    %4194 = vmatpush1.bf16.msra.mxu0 %v4191
    %4195 = vmatprep.subr.bf16.mxu0 0
    %4196 = vmatpush1.bf16.msra.mxu0 0
    %4197 = vmatprep.subr.bf16.mxu0 0
    %4198 = vmatpush1.bf16.msra.mxu0 0
    %4199 = vmatprep.subr.bf16.mxu0 0
    %4200 = vmatpush1.bf16.msra.mxu0 0
    %4201 = vmatprep.subr.bf16.mxu0 0
    %4202 = vmatpush1.bf16.msra.mxu0 0
    %4203 = vmatprep.subr.bf16.mxu0 0
    %4204 = vmatpush1.bf16.msra.mxu0 0
    %4205 = vmatprep.subr.bf16.mxu0 0
    %4206 = vmatpush1.bf16.msra.mxu0 0
    %4207 = vmatprep.subr.bf16.mxu0 0
    %4208 = vmatpush1.bf16.msra.mxu0 0
    %4209 = vmatprep.subr.bf16.mxu0 0
    %4210 = vmatpush1.bf16.msra.mxu0 0
    %4211 = vmatprep.subr.bf16.mxu0 0
    %4212 = vmatpush1.bf16.msra.mxu0 0
    %4213 = vmatprep.subr.bf16.mxu0 0
    %4214 = vmatpush1.bf16.msra.mxu0 0
    %4215 = vmatprep.subr.bf16.mxu0 0
    %4216 = vmatpush1.bf16.msra.mxu0 0
    %4217 = vmatprep.subr.bf16.mxu0 0
    %4218 = vmatpush1.bf16.msra.mxu0 0
    %4219 = vmatprep.subr.bf16.mxu0 0
    %4220 = vmatpush1.bf16.msra.mxu0 0
    %4221 = vmatprep.subr.bf16.mxu0 0
    %4222 = vmatpush1.bf16.msra.mxu0 0
    %4223 = vmatprep.subr.bf16.mxu0 0
    %4224 = vmatpush1.bf16.msra.mxu0 0
    %4225 = vmatprep.mubr.bf16.mxu0 0
    %4226 = vmatmul.mubr.bf16.gmra.mrb[0].mxu0 %v251
    %v4227 = vpop.f32.mrb[0].mxu0
    %v4228 = vadd.f32 0.0, %v4227
    %v4229 = vpop.f32.mrb[0].mxu0
    %v4230 = vpop.f32.mrb[0].mxu0
    %v4231 = vpop.f32.mrb[0].mxu0
    %4232 = vdwg.mxu0
    %v4234 = vsel %vm253, %v3797, 0
    %4236 = vmatprep.subr.bf16.mxu0 0
    %4237 = vmatpush1.bf16.msra.mxu0 %v4234
    %4238 = vmatprep.subr.bf16.mxu0 0
    %4239 = vmatpush1.bf16.msra.mxu0 0
    %4240 = vmatprep.subr.bf16.mxu0 0
    %4241 = vmatpush1.bf16.msra.mxu0 0
    %4242 = vmatprep.subr.bf16.mxu0 0
    %4243 = vmatpush1.bf16.msra.mxu0 0
    %4244 = vmatprep.subr.bf16.mxu0 0
    %4245 = vmatpush1.bf16.msra.mxu0 0
    %4246 = vmatprep.subr.bf16.mxu0 0
    %4247 = vmatpush1.bf16.msra.mxu0 0
    %4248 = vmatprep.subr.bf16.mxu0 0
    %4249 = vmatpush1.bf16.msra.mxu0 0
    %4250 = vmatprep.subr.bf16.mxu0 0
    %4251 = vmatpush1.bf16.msra.mxu0 0
    %4252 = vmatprep.subr.bf16.mxu0 0
    %4253 = vmatpush1.bf16.msra.mxu0 0
    %4254 = vmatprep.subr.bf16.mxu0 0
    %4255 = vmatpush1.bf16.msra.mxu0 0
    %4256 = vmatprep.subr.bf16.mxu0 0
    %4257 = vmatpush1.bf16.msra.mxu0 0
    %4258 = vmatprep.subr.bf16.mxu0 0
    %4259 = vmatpush1.bf16.msra.mxu0 0
    %4260 = vmatprep.subr.bf16.mxu0 0
    %4261 = vmatpush1.bf16.msra.mxu0 0
    %4262 = vmatprep.subr.bf16.mxu0 0
    %4263 = vmatpush1.bf16.msra.mxu0 0
    %4264 = vmatprep.subr.bf16.mxu0 0
    %4265 = vmatpush1.bf16.msra.mxu0 0
    %4266 = vmatprep.subr.bf16.mxu0 0
    %4267 = vmatpush1.bf16.msra.mxu0 0
    %4268 = vmatprep.mubr.bf16.mxu0 0
    %4269 = vmatmul.mubr.bf16.gmra.mrb[0].mxu0 %v251
    %v4270 = vpop.f32.mrb[0].mxu0
    %v4271 = vadd.f32 0.0, %v4270
    %v4272 = vpop.f32.mrb[0].mxu0
    %v4273 = vpop.f32.mrb[0].mxu0
    %v4274 = vpop.f32.mrb[0].mxu0
    %4275 = vdwg.mxu0
    %v4277 = vsel %vm253, %v3798, 0
    %4279 = vmatprep.subr.bf16.mxu0 0
    %4280 = vmatpush1.bf16.msra.mxu0 %v4277
    %4281 = vmatprep.subr.bf16.mxu0 0
    %4282 = vmatpush1.bf16.msra.mxu0 0
    %4283 = vmatprep.subr.bf16.mxu0 0
    %4284 = vmatpush1.bf16.msra.mxu0 0
    %4285 = vmatprep.subr.bf16.mxu0 0
    %4286 = vmatpush1.bf16.msra.mxu0 0
    %4287 = vmatprep.subr.bf16.mxu0 0
    %4288 = vmatpush1.bf16.msra.mxu0 0
    %4289 = vmatprep.subr.bf16.mxu0 0
    %4290 = vmatpush1.bf16.msra.mxu0 0
    %4291 = vmatprep.subr.bf16.mxu0 0
    %4292 = vmatpush1.bf16.msra.mxu0 0
    %4293 = vmatprep.subr.bf16.mxu0 0
    %4294 = vmatpush1.bf16.msra.mxu0 0
    %4295 = vmatprep.subr.bf16.mxu0 0
    %4296 = vmatpush1.bf16.msra.mxu0 0
    %4297 = vmatprep.subr.bf16.mxu0 0
    %4298 = vmatpush1.bf16.msra.mxu0 0
    %4299 = vmatprep.subr.bf16.mxu0 0
    %4300 = vmatpush1.bf16.msra.mxu0 0
    %4301 = vmatprep.subr.bf16.mxu0 0
    %4302 = vmatpush1.bf16.msra.mxu0 0
    %4303 = vmatprep.subr.bf16.mxu0 0
    %4304 = vmatpush1.bf16.msra.mxu0 0
    %4305 = vmatprep.subr.bf16.mxu0 0
    %4306 = vmatpush1.bf16.msra.mxu0 0
    %4307 = vmatprep.subr.bf16.mxu0 0
    %4308 = vmatpush1.bf16.msra.mxu0 0
    %4309 = vmatprep.subr.bf16.mxu0 0
    %4310 = vmatpush1.bf16.msra.mxu0 0
    %4311 = vmatprep.mubr.bf16.mxu0 0
    %4312 = vmatmul.mubr.bf16.gmra.mrb[0].mxu0 %v251
    %v4313 = vpop.f32.mrb[0].mxu0
    %v4314 = vadd.f32 0.0, %v4313
    %v4315 = vpop.f32.mrb[0].mxu0
    %v4316 = vpop.f32.mrb[0].mxu0
    %v4317 = vpop.f32.mrb[0].mxu0
    %4318 = vdwg.mxu0
    %v4320 = vsel %vm253, %v3799, 0
    %4322 = vmatprep.subr.bf16.mxu0 0
    %4323 = vmatpush1.bf16.msra.mxu0 %v4320
    %4324 = vmatprep.subr.bf16.mxu0 0
    %4325 = vmatpush1.bf16.msra.mxu0 0
    %4326 = vmatprep.subr.bf16.mxu0 0
    %4327 = vmatpush1.bf16.msra.mxu0 0
    %4328 = vmatprep.subr.bf16.mxu0 0
    %4329 = vmatpush1.bf16.msra.mxu0 0
    %4330 = vmatprep.subr.bf16.mxu0 0
    %4331 = vmatpush1.bf16.msra.mxu0 0
    %4332 = vmatprep.subr.bf16.mxu0 0
    %4333 = vmatpush1.bf16.msra.mxu0 0
    %4334 = vmatprep.subr.bf16.mxu0 0
    %4335 = vmatpush1.bf16.msra.mxu0 0
    %4336 = vmatprep.subr.bf16.mxu0 0
    %4337 = vmatpush1.bf16.msra.mxu0 0
    %4338 = vmatprep.subr.bf16.mxu0 0
    %4339 = vmatpush1.bf16.msra.mxu0 0
    %4340 = vmatprep.subr.bf16.mxu0 0
    %4341 = vmatpush1.bf16.msra.mxu0 0
    %4342 = vmatprep.subr.bf16.mxu0 0
    %4343 = vmatpush1.bf16.msra.mxu0 0
    %4344 = vmatprep.subr.bf16.mxu0 0
    %4345 = vmatpush1.bf16.msra.mxu0 0
    %4346 = vmatprep.subr.bf16.mxu0 0
    %4347 = vmatpush1.bf16.msra.mxu0 0
    %4348 = vmatprep.subr.bf16.mxu0 0
    %4349 = vmatpush1.bf16.msra.mxu0 0
    %4350 = vmatprep.subr.bf16.mxu0 0
    %4351 = vmatpush1.bf16.msra.mxu0 0
    %4352 = vmatprep.subr.bf16.mxu0 0
    %4353 = vmatpush1.bf16.msra.mxu0 0
    %4354 = vmatprep.mubr.bf16.mxu0 0
    %4355 = vmatmul.mubr.bf16.gmra.mrb[0].mxu0 %v251
    %v4356 = vpop.f32.mrb[0].mxu0
    %v4357 = vadd.f32 0.0, %v4356
    %v4358 = vpop.f32.mrb[0].mxu0
    %v4359 = vpop.f32.mrb[0].mxu0
    %v4360 = vpop.f32.mrb[0].mxu0
    %4361 = vdwg.mxu0
    %v4363 = vsel %vm253, %v3800, 0
    %4365 = vmatprep.subr.bf16.mxu0 0
    %4366 = vmatpush1.bf16.msra.mxu0 %v4363
    %4367 = vmatprep.subr.bf16.mxu0 0
    %4368 = vmatpush1.bf16.msra.mxu0 0
    %4369 = vmatprep.subr.bf16.mxu0 0
    %4370 = vmatpush1.bf16.msra.mxu0 0
    %4371 = vmatprep.subr.bf16.mxu0 0
    %4372 = vmatpush1.bf16.msra.mxu0 0
    %4373 = vmatprep.subr.bf16.mxu0 0
    %4374 = vmatpush1.bf16.msra.mxu0 0
    %4375 = vmatprep.subr.bf16.mxu0 0
    %4376 = vmatpush1.bf16.msra.mxu0 0
    %4377 = vmatprep.subr.bf16.mxu0 0
    %4378 = vmatpush1.bf16.msra.mxu0 0
    %4379 = vmatprep.subr.bf16.mxu0 0
    %4380 = vmatpush1.bf16.msra.mxu0 0
    %4381 = vmatprep.subr.bf16.mxu0 0
    %4382 = vmatpush1.bf16.msra.mxu0 0
    %4383 = vmatprep.subr.bf16.mxu0 0
    %4384 = vmatpush1.bf16.msra.mxu0 0
    %4385 = vmatprep.subr.bf16.mxu0 0
    %4386 = vmatpush1.bf16.msra.mxu0 0
    %4387 = vmatprep.subr.bf16.mxu0 0
    %4388 = vmatpush1.bf16.msra.mxu0 0
    %4389 = vmatprep.subr.bf16.mxu0 0
    %4390 = vmatpush1.bf16.msra.mxu0 0
    %4391 = vmatprep.subr.bf16.mxu0 0
    %4392 = vmatpush1.bf16.msra.mxu0 0
    %4393 = vmatprep.subr.bf16.mxu0 0
    %4394 = vmatpush1.bf16.msra.mxu0 0
    %4395 = vmatprep.subr.bf16.mxu0 0
    %4396 = vmatpush1.bf16.msra.mxu0 0
    %4397 = vmatprep.mubr.bf16.mxu0 0
    %4398 = vmatmul.mubr.bf16.gmra.mrb[0].mxu0 %v251
    %v4399 = vpop.f32.mrb[0].mxu0
    %v4400 = vadd.f32 0.0, %v4399
    %v4401 = vpop.f32.mrb[0].mxu0
    %v4402 = vpop.f32.mrb[0].mxu0
    %v4403 = vpop.f32.mrb[0].mxu0
    %4404 = vdwg.mxu0
    %v4406 = vsel %vm253, %v3801, 0
    %4408 = vmatprep.subr.bf16.mxu0 0
    %4409 = vmatpush1.bf16.msra.mxu0 %v4406
    %4410 = vmatprep.subr.bf16.mxu0 0
    %4411 = vmatpush1.bf16.msra.mxu0 0
    %4412 = vmatprep.subr.bf16.mxu0 0
    %4413 = vmatpush1.bf16.msra.mxu0 0
    %4414 = vmatprep.subr.bf16.mxu0 0
    %4415 = vmatpush1.bf16.msra.mxu0 0
    %4416 = vmatprep.subr.bf16.mxu0 0
    %4417 = vmatpush1.bf16.msra.mxu0 0
    %4418 = vmatprep.subr.bf16.mxu0 0
    %4419 = vmatpush1.bf16.msra.mxu0 0
    %4420 = vmatprep.subr.bf16.mxu0 0
    %4421 = vmatpush1.bf16.msra.mxu0 0
    %4422 = vmatprep.subr.bf16.mxu0 0
    %4423 = vmatpush1.bf16.msra.mxu0 0
    %4424 = vmatprep.subr.bf16.mxu0 0
    %4425 = vmatpush1.bf16.msra.mxu0 0
    %4426 = vmatprep.subr.bf16.mxu0 0
    %4427 = vmatpush1.bf16.msra.mxu0 0
    %4428 = vmatprep.subr.bf16.mxu0 0
    %4429 = vmatpush1.bf16.msra.mxu0 0
    %4430 = vmatprep.subr.bf16.mxu0 0
    %4431 = vmatpush1.bf16.msra.mxu0 0
    %4432 = vmatprep.subr.bf16.mxu0 0
    %4433 = vmatpush1.bf16.msra.mxu0 0
    %4434 = vmatprep.subr.bf16.mxu0 0
    %4435 = vmatpush1.bf16.msra.mxu0 0
    %4436 = vmatprep.subr.bf16.mxu0 0
    %4437 = vmatpush1.bf16.msra.mxu0 0
    %4438 = vmatprep.subr.bf16.mxu0 0
    %4439 = vmatpush1.bf16.msra.mxu0 0
    %4440 = vmatprep.mubr.bf16.mxu0 0
    %4441 = vmatmul.mubr.bf16.gmra.mrb[0].mxu0 %v251
    %v4442 = vpop.f32.mrb[0].mxu0
    %v4443 = vadd.f32 0.0, %v4442
    %v4444 = vpop.f32.mrb[0].mxu0
    %v4445 = vpop.f32.mrb[0].mxu0
    %v4446 = vpop.f32.mrb[0].mxu0
    %4447 = vdwg.mxu0
    %v4449 = vsel %vm253, %v3802, 0
    %4451 = vmatprep.subr.bf16.mxu0 0
    %4452 = vmatpush1.bf16.msra.mxu0 %v4449
    %4453 = vmatprep.subr.bf16.mxu0 0
    %4454 = vmatpush1.bf16.msra.mxu0 0
    %4455 = vmatprep.subr.bf16.mxu0 0
    %4456 = vmatpush1.bf16.msra.mxu0 0
    %4457 = vmatprep.subr.bf16.mxu0 0
    %4458 = vmatpush1.bf16.msra.mxu0 0
    %4459 = vmatprep.subr.bf16.mxu0 0
    %4460 = vmatpush1.bf16.msra.mxu0 0
    %4461 = vmatprep.subr.bf16.mxu0 0
    %4462 = vmatpush1.bf16.msra.mxu0 0
    %4463 = vmatprep.subr.bf16.mxu0 0
    %4464 = vmatpush1.bf16.msra.mxu0 0
    %4465 = vmatprep.subr.bf16.mxu0 0
    %4466 = vmatpush1.bf16.msra.mxu0 0
    %4467 = vmatprep.subr.bf16.mxu0 0
    %4468 = vmatpush1.bf16.msra.mxu0 0
    %4469 = vmatprep.subr.bf16.mxu0 0
    %4470 = vmatpush1.bf16.msra.mxu0 0
    %4471 = vmatprep.subr.bf16.mxu0 0
    %4472 = vmatpush1.bf16.msra.mxu0 0
    %4473 = vmatprep.subr.bf16.mxu0 0
    %4474 = vmatpush1.bf16.msra.mxu0 0
    %4475 = vmatprep.subr.bf16.mxu0 0
    %4476 = vmatpush1.bf16.msra.mxu0 0
    %4477 = vmatprep.subr.bf16.mxu0 0
    %4478 = vmatpush1.bf16.msra.mxu0 0
    %4479 = vmatprep.subr.bf16.mxu0 0
    %4480 = vmatpush1.bf16.msra.mxu0 0
    %4481 = vmatprep.subr.bf16.mxu0 0
    %4482 = vmatpush1.bf16.msra.mxu0 0
    %4483 = vmatprep.mubr.bf16.mxu0 0
    %4484 = vmatmul.mubr.bf16.gmra.mrb[0].mxu0 %v251
    %v4485 = vpop.f32.mrb[0].mxu0
    %v4486 = vadd.f32 0.0, %v4485
    %v4487 = vpop.f32.mrb[0].mxu0
    %v4488 = vpop.f32.mrb[0].mxu0
    %v4489 = vpop.f32.mrb[0].mxu0
    %4490 = vdwg.mxu0
    %v4492 = vlaneseq
    %v4493 = vshrl.u32 %v4492, 7
    %v4494 = vsub.s32 0, %v4493
    %v4495 = vrot.slane %v61, %v4494
    %v4497 = vadd.f32 %v3841, %v4495
    %v4498 = vadd.f32 %v3884, %v4495
    %v4499 = vadd.f32 %v3927, %v4495
    %v4500 = vadd.f32 %v3970, %v4495
    %v4501 = vadd.f32 %v4013, %v4495
    %v4502 = vadd.f32 %v4056, %v4495
    %v4503 = vadd.f32 %v4099, %v4495
    %v4504 = vadd.f32 %v4142, %v4495
    %v4505 = vadd.f32 %v4185, %v4495
    %v4506 = vadd.f32 %v4228, %v4495
    %v4507 = vadd.f32 %v4271, %v4495
    %v4508 = vadd.f32 %v4314, %v4495
    %v4509 = vadd.f32 %v4357, %v4495
    %v4510 = vadd.f32 %v4400, %v4495
    %v4511 = vadd.f32 %v4443, %v4495
    %v4512 = vadd.f32 %v4486, %v4495
    %v4513 = vmax.f32 %v4497, 0.0
    %v4514 = vmax.f32 %v4498, 0.0
    %v4515 = vmax.f32 %v4499, 0.0
    %v4516 = vmax.f32 %v4500, 0.0
    %v4517 = vmax.f32 %v4501, 0.0
    %v4518 = vmax.f32 %v4502, 0.0
    %v4519 = vmax.f32 %v4503, 0.0
    %v4520 = vmax.f32 %v4504, 0.0
    %v4521 = vmax.f32 %v4505, 0.0
    %v4522 = vmax.f32 %v4506, 0.0
    %v4523 = vmax.f32 %v4507, 0.0
    %v4524 = vmax.f32 %v4508, 0.0
    %v4525 = vmax.f32 %v4509, 0.0
    %v4526 = vmax.f32 %v4510, 0.0
    %v4527 = vmax.f32 %v4511, 0.0
    %v4528 = vmax.f32 %v4512, 0.0
    %v4529 = vadd.f32 %v2747, %v4513
    %v4530 = vadd.f32 %v2748, %v4514
    %v4531 = vadd.f32 %v2749, %v4515
    %v4532 = vadd.f32 %v2750, %v4516
    %v4533 = vadd.f32 %v2751, %v4517
    %v4534 = vadd.f32 %v2752, %v4518
    %v4535 = vadd.f32 %v2753, %v4519
    %v4536 = vadd.f32 %v2754, %v4520
    %v4537 = vadd.f32 %v2755, %v4521
    %v4538 = vadd.f32 %v2756, %v4522
    %v4539 = vadd.f32 %v2757, %v4523
    %v4540 = vadd.f32 %v2758, %v4524
    %v4541 = vadd.f32 %v2759, %v4525
    %v4542 = vadd.f32 %v2760, %v4526
    %v4543 = vadd.f32 %v2761, %v4527
    %v4544 = vadd.f32 %v2762, %v4528
    %v4545 = vsel %vm1000, %v4529, 0.0
    %v4546 = vrot.slane %v4545, 4
    %v4547 = vadd.f32 %v4545, %v4546
    %v4548 = vrot.slane %v4547, 2
    %v4549 = vadd.f32 %v4547, %v4548
    %v4550 = vrot.slane %v4549, 1
    %v4551 = vadd.f32 %v4549, %v4550
    %v4552 = vsel %vm1000, %v4530, 0.0
    %v4553 = vrot.slane %v4552, 4
    %v4554 = vadd.f32 %v4552, %v4553
    %v4555 = vrot.slane %v4554, 2
    %v4556 = vadd.f32 %v4554, %v4555
    %v4557 = vrot.slane %v4556, 1
    %v4558 = vadd.f32 %v4556, %v4557
    %v4559 = vsel %vm1000, %v4531, 0.0
    %v4560 = vrot.slane %v4559, 4
    %v4561 = vadd.f32 %v4559, %v4560
    %v4562 = vrot.slane %v4561, 2
    %v4563 = vadd.f32 %v4561, %v4562
    %v4564 = vrot.slane %v4563, 1
    %v4565 = vadd.f32 %v4563, %v4564
    %v4566 = vsel %vm1000, %v4532, 0.0
    %v4567 = vrot.slane %v4566, 4
    %v4568 = vadd.f32 %v4566, %v4567
    %v4569 = vrot.slane %v4568, 2
    %v4570 = vadd.f32 %v4568, %v4569
    %v4571 = vrot.slane %v4570, 1
    %v4572 = vadd.f32 %v4570, %v4571
    %v4573 = vsel %vm1000, %v4533, 0.0
    %v4574 = vrot.slane %v4573, 4
    %v4575 = vadd.f32 %v4573, %v4574
    %v4576 = vrot.slane %v4575, 2
    %v4577 = vadd.f32 %v4575, %v4576
    %v4578 = vrot.slane %v4577, 1
    %v4579 = vadd.f32 %v4577, %v4578
    %v4580 = vsel %vm1000, %v4534, 0.0
    %v4581 = vrot.slane %v4580, 4
    %v4582 = vadd.f32 %v4580, %v4581
    %v4583 = vrot.slane %v4582, 2
    %v4584 = vadd.f32 %v4582, %v4583
    %v4585 = vrot.slane %v4584, 1
    %v4586 = vadd.f32 %v4584, %v4585
    %v4587 = vsel %vm1000, %v4535, 0.0
    %v4588 = vrot.slane %v4587, 4
    %v4589 = vadd.f32 %v4587, %v4588
    %v4590 = vrot.slane %v4589, 2
    %v4591 = vadd.f32 %v4589, %v4590
    %v4592 = vrot.slane %v4591, 1
    %v4593 = vadd.f32 %v4591, %v4592
    %v4594 = vsel %vm1000, %v4536, 0.0
    %v4595 = vrot.slane %v4594, 4
    %v4596 = vadd.f32 %v4594, %v4595
    %v4597 = vrot.slane %v4596, 2
    %v4598 = vadd.f32 %v4596, %v4597
    %v4599 = vrot.slane %v4598, 1
    %v4600 = vadd.f32 %v4598, %v4599
    %v4601 = vsel %vm1000, %v4537, 0.0
    %v4602 = vrot.slane %v4601, 4
    %v4603 = vadd.f32 %v4601, %v4602
    %v4604 = vrot.slane %v4603, 2
    %v4605 = vadd.f32 %v4603, %v4604
    %v4606 = vrot.slane %v4605, 1
    %v4607 = vadd.f32 %v4605, %v4606
    %v4608 = vsel %vm1000, %v4538, 0.0
    %v4609 = vrot.slane %v4608, 4
    %v4610 = vadd.f32 %v4608, %v4609
    %v4611 = vrot.slane %v4610, 2
    %v4612 = vadd.f32 %v4610, %v4611
    %v4613 = vrot.slane %v4612, 1
    %v4614 = vadd.f32 %v4612, %v4613
    %v4615 = vsel %vm1000, %v4539, 0.0
    %v4616 = vrot.slane %v4615, 4
    %v4617 = vadd.f32 %v4615, %v4616
    %v4618 = vrot.slane %v4617, 2
    %v4619 = vadd.f32 %v4617, %v4618
    %v4620 = vrot.slane %v4619, 1
    %v4621 = vadd.f32 %v4619, %v4620
    %v4622 = vsel %vm1000, %v4540, 0.0
    %v4623 = vrot.slane %v4622, 4
    %v4624 = vadd.f32 %v4622, %v4623
    %v4625 = vrot.slane %v4624, 2
    %v4626 = vadd.f32 %v4624, %v4625
    %v4627 = vrot.slane %v4626, 1
    %v4628 = vadd.f32 %v4626, %v4627
    %v4629 = vsel %vm1000, %v4541, 0.0
    %v4630 = vrot.slane %v4629, 4
    %v4631 = vadd.f32 %v4629, %v4630
    %v4632 = vrot.slane %v4631, 2
    %v4633 = vadd.f32 %v4631, %v4632
    %v4634 = vrot.slane %v4633, 1
    %v4635 = vadd.f32 %v4633, %v4634
    %v4636 = vsel %vm1000, %v4542, 0.0
    %v4637 = vrot.slane %v4636, 4
    %v4638 = vadd.f32 %v4636, %v4637
    %v4639 = vrot.slane %v4638, 2
    %v4640 = vadd.f32 %v4638, %v4639
    %v4641 = vrot.slane %v4640, 1
    %v4642 = vadd.f32 %v4640, %v4641
    %v4643 = vsel %vm1000, %v4543, 0.0
    %v4644 = vrot.slane %v4643, 4
    %v4645 = vadd.f32 %v4643, %v4644
    %v4646 = vrot.slane %v4645, 2
    %v4647 = vadd.f32 %v4645, %v4646
    %v4648 = vrot.slane %v4647, 1
    %v4649 = vadd.f32 %v4647, %v4648
    %v4650 = vsel %vm1000, %v4544, 0.0
    %v4651 = vrot.slane %v4650, 4
    %v4652 = vadd.f32 %v4650, %v4651
    %v4653 = vrot.slane %v4652, 2
    %v4654 = vadd.f32 %v4652, %v4653
    %v4655 = vrot.slane %v4654, 1
    %v4656 = vadd.f32 %v4654, %v4655
    %v4657 = vrcp.pop 8.0
    %v4658 = vmul.f32 %v4551, %v4657
    %v4659 = vmul.f32 %v4558, %v4657
    %v4660 = vmul.f32 %v4565, %v4657
    %v4661 = vmul.f32 %v4572, %v4657
    %v4662 = vmul.f32 %v4579, %v4657
    %v4663 = vmul.f32 %v4586, %v4657
    %v4664 = vmul.f32 %v4593, %v4657
    %v4665 = vmul.f32 %v4600, %v4657
    %v4666 = vmul.f32 %v4607, %v4657
    %v4667 = vmul.f32 %v4614, %v4657
    %v4668 = vmul.f32 %v4621, %v4657
    %v4669 = vmul.f32 %v4628, %v4657
    %v4670 = vmul.f32 %v4635, %v4657
    %v4671 = vmul.f32 %v4642, %v4657
    %v4672 = vmul.f32 %v4649, %v4657
    %v4673 = vmul.f32 %v4656, %v4657
    %vm4690 = vcmask 1041409
    %v4691 = vsel %vm4690, %v4659, %v4658
    %vm4692 = vcmask 1042434
    %v4693 = vsel %vm4692, %v4660, %v4691
    %vm4694 = vcmask 1043459
    %v4695 = vsel %vm4694, %v4661, %v4693
    %vm4696 = vcmask 1044484
    %v4697 = vsel %vm4696, %v4662, %v4695
    %vm4698 = vcmask 1045509
    %v4699 = vsel %vm4698, %v4663, %v4697
    %vm4700 = vcmask 1046534
    %v4701 = vsel %vm4700, %v4664, %v4699
    %vm4702 = vcmask 1047559
    %v4703 = vsel %vm4702, %v4665, %v4701
    %v4704 = vsel %vm4690, %v4667, %v4666
    %v4705 = vsel %vm4692, %v4668, %v4704
    %v4706 = vsel %vm4694, %v4669, %v4705
    %v4707 = vsel %vm4696, %v4670, %v4706
    %v4708 = vsel %vm4698, %v4671, %v4707
    %v4709 = vsel %vm4700, %v4672, %v4708
    %v4710 = vsel %vm4702, %v4673, %v4709
    %4713 = vst.msk [vmem:[#allocation2] sm:$0xff] %vm1000, %v4703
    %4714 = vst.msk [vmem:[#allocation2 + $0x8] sm:$0xff] %vm1000, %v4710
    // Predicated region
    $region26: #{tpu_custom_call.1} parent=1 // pred_check
      _
    $region27: #{tpu_custom_call.1} parent=1 // pred_check_branch
      %4716 = sbr.rel (0) target = $region29
    $region28: #{tpu_custom_call.1} parent=1 // pred_region
      %s4718 = ssub.s32 256, 256
      %4719 = vsyncadd [#allocation3], %s4718
      %s4720 = sshll.u32 [#allocation2], 4
      %s4721 = int_to_ptr.vmem [resolvable:$true] %s4720
      %4726 = dma.vmem_to_hbm [thread:$0]  %s4721, 256, %s6, [#allocation3], 128, 128, 8
    $region29: #{tpu_custom_call.1} parent=1 // pred_fallthru
      _
    // Predicated region
    $region30: #{tpu_custom_call.1} parent=1 // pred_check
      _
    $region31: #{tpu_custom_call.1} parent=1 // pred_check_branch
      %4728 = sbr.rel (0) target = $region33
    $region32: #{tpu_custom_call.1} parent=1 // pred_region
      %4729 = dma.done [#allocation3], 256
    $region33: #{tpu_custom_call.1} parent=1 // pred_fallthru
      _
    %4730 = vsyncpa [#allocation3], 1

</llo_original>
